<compile_context>
chip_gen: v5e
topology: v5e:2x2
jax: 0.10.0
libtpu: 0.0.40
codegen_flags: <defaults>
</compile_context>

<pallas_src>
import jax
import jax.numpy as jnp
from jax.experimental import pallas as pl
from jax.experimental.pallas import tpu as pltpu

K = 7          # conv kernel size
PAD = 3        # padding (k == 7 -> pad 3), matches the PyTorch module


def spatial_attention_kernel(w_ref, x_ref, o_ref, pad_ref, lanes_ref):
    # w_ref     : SMEM (2*K*K,) f32                 -- flattened conv weight (OIHW, O=1)
    # x_ref     : VMEM (bblk, C, H, W)              -- bblk input images
    # o_ref     : VMEM (bblk, 1, H, W)              -- attention-map output tile
    # pad_ref   : VMEM (2, bblk, H+2P, W+2P) scratch -- zero-padded [mean, max] planes
    # lanes_ref : VMEM (2, K, bblk, H+2P, W) scratch -- kw-lane-shifted copies of pad_ref
    bblk, C, H, W = x_ref.shape
    Hp = H + 2 * PAD
    Wp = W + 2 * PAD

    # ---- 1) fused channel mean + max: single pass over C, f32 accumulation ----
    x0 = x_ref[:, 0, :, :].astype(jnp.float32)
    s = x0
    m = x0
    for ci in range(1, C):
        xc = x_ref[:, ci, :, :].astype(jnp.float32)
        s = s + xc
        m = jnp.maximum(m, xc)
    a = s * (1.0 / C)                                   # channel mean, (bblk, H, W)

    # ---- 2) zero only the halo of the padded scratch (interior is overwritten) ----
    zrow = jnp.zeros((2, bblk, PAD, Wp), jnp.float32)
    pad_ref[:, :, 0:PAD, :] = zrow
    pad_ref[:, :, PAD + H:Hp, :] = zrow
    zcol = jnp.zeros((2, bblk, Hp, PAD), jnp.float32)
    pad_ref[:, :, :, 0:PAD] = zcol
    pad_ref[:, :, :, PAD + W:Wp] = zcol

    pad_ref[0, :, PAD:PAD + H, PAD:PAD + W] = a
    pad_ref[1, :, PAD:PAD + H, PAD:PAD + W] = m

    # ---- 3) hoist the kw lane shift: 2*K lane rotates total (was 2*K*K) ----
    for ci in range(2):
        for kw in range(K):
            lanes_ref[ci, kw] = pad_ref[ci, :, :, kw:kw + W]

    # ---- 4) 7x7 conv (2 -> 1 channels, no bias): row-offset vlds + VPU MACs ----
    acc = jnp.zeros((bblk, H, W), jnp.float32)
    for ci in range(2):
        for kw in range(K):
            for kh in range(K):
                wv = w_ref[ci * K * K + kh * K + kw]        # scalar from SMEM
                acc = acc + wv * lanes_ref[ci, kw, :, kh:kh + H, :]

    # ---- 5) sigmoid (EUP) + store ----
    o_ref[...] = jax.nn.sigmoid(acc)[:, None, :, :].astype(o_ref.dtype)


def spatial_attention(x, w, bblk=None):
    """x: (B, C, H, W), w: (1, 2, K, K) conv weight. Returns (B, 1, H, W)."""
    B, C, H, W = x.shape
    if bblk is None:
        # largest divisor of B up to 8 images per grid step
        bblk = max(d for d in range(1, min(B, 8) + 1) if B % d == 0)
    assert B % bblk == 0, (B, bblk)

    w_flat = w.reshape(-1).astype(jnp.float32)          # (2*K*K,) scalar-prefetched to SMEM

    itemsize = jnp.dtype(x.dtype).itemsize
    cost = pl.CostEstimate(
        flops=int(B * H * W * (2 * C + 2 * 2 * K * K)),
        transcendentals=int(B * H * W),                  # sigmoid
        bytes_accessed=int((B * C * H * W + B * H * W) * itemsize + w_flat.size * 4),
    )

    return pl.pallas_call(
        spatial_attention_kernel,
        out_shape=jax.ShapeDtypeStruct((B, 1, H, W), x.dtype),
        grid_spec=pltpu.PrefetchScalarGridSpec(
            num_scalar_prefetch=1,
            grid=(B // bblk,),
            in_specs=[
                pl.BlockSpec((bblk, C, H, W), lambda b, wref: (b, 0, 0, 0)),
            ],
            out_specs=pl.BlockSpec((bblk, 1, H, W), lambda b, wref: (b, 0, 0, 0)),
            scratch_shapes=[
                pltpu.VMEM((2, bblk, H + 2 * PAD, W + 2 * PAD), jnp.float32),
                pltpu.VMEM((2, K, bblk, H + 2 * PAD, W), jnp.float32),
            ],
        ),
        compiler_params=pltpu.CompilerParams(
            # batch tiles are independent -> lets v7x shard the grid over its 2 TCs
            dimension_semantics=("parallel",),
        ),
        cost_estimate=cost,
    )(w_flat, x)


def reference_forward(x, w):
    """Pure-JAX reference mirroring the PyTorch forward."""
    a = jnp.mean(x, axis=1, keepdims=True)
    m = jnp.max(x, axis=1, keepdims=True)
    y = jnp.concatenate([a, m], axis=1)
    out = jax.lax.conv_general_dilated(
        y, w,
        window_strides=(1, 1),
        padding=((PAD, PAD), (PAD, PAD)),
        dimension_numbers=("NCHW", "OIHW", "NCHW"),
    )
    return jax.nn.sigmoid(out)


if __name__ == "__main__":
    key = jax.random.PRNGKey(0)
    kx, kwt = jax.random.split(key)

    B, C, H, W = 4, 4, 16, 16
    x = jax.random.normal(kx, (B, C, H, W), dtype=jnp.float32)

    # Deterministic conv weight (PyTorch-style uniform(-1/sqrt(fan_in), +1/sqrt(fan_in))).
    fan_in = 2 * K * K
    bound = 1.0 / (fan_in ** 0.5)
    w = jax.random.uniform(kwt, (1, 2, K, K), jnp.float32, -bound, bound)

    out = spatial_attention(x, w, bblk=2)   # grid=(2,), 2 images per step
    jax.block_until_ready(out)

    ref = reference_forward(x, w)
    assert out.shape == (B, 1, H, W), out.shape
    assert jnp.allclose(out, ref, atol=1e-5, rtol=1e-5), float(jnp.max(jnp.abs(out - ref)))

    print("KERNEL_OK")
</pallas_src>

<mosaic_0001>
module attributes {stable_mosaic.version = 11 : i64} {
  func.func @spatial_attention_kernel(%arg0: i32, %arg1: memref<98xf32, #tpu.memory_space<smem>>, %arg2: memref<2x4x16x16xf32, #tpu.memory_space<vmem>>, %arg3: memref<2x1x16x16xf32, #tpu.memory_space<vmem>>, %arg4: memref<2x2x22x22xf32, #tpu.memory_space<vmem>>, %arg5: memref<2x7x2x22x16xf32, #tpu.memory_space<vmem>>) attributes {dimension_semantics = [#tpu.dimension_semantics<parallel>], iteration_bounds = array<i64: 2>, scalar_prefetch = 1 : i64, scratch_operands = 2 : i64, tpu.core_type = #tpu.core_type<tc>, window_params = [{transform_indices = @transform_0, window_bounds = array<i64: 2, 4, 16, 16>}, {transform_indices = @transform_1, window_bounds = array<i64: 2, 1, 16, 16>}]} {
    %c0 = arith.constant 0 : index
    %c0_0 = arith.constant 0 : index
    %c0_1 = arith.constant 0 : index
    %c0_2 = arith.constant 0 : index
    %0 = vector.load %arg2[%c0, %c0_0, %c0_1, %c0_2] : memref<2x4x16x16xf32, #tpu.memory_space<vmem>>, vector<2x1x16x16xf32>
    %1 = vector.shape_cast %0 : vector<2x1x16x16xf32> to vector<2x16x16xf32>
    %c0_3 = arith.constant 0 : index
    %c1 = arith.constant 1 : index
    %c0_4 = arith.constant 0 : index
    %c0_5 = arith.constant 0 : index
    %2 = vector.load %arg2[%c0_3, %c1, %c0_4, %c0_5] : memref<2x4x16x16xf32, #tpu.memory_space<vmem>>, vector<2x1x16x16xf32>
    %3 = vector.shape_cast %2 : vector<2x1x16x16xf32> to vector<2x16x16xf32>
    %4 = arith.addf %1, %3 : vector<2x16x16xf32>
    %5 = arith.maximumf %1, %3 : vector<2x16x16xf32>
    %c0_6 = arith.constant 0 : index
    %c2 = arith.constant 2 : index
    %c0_7 = arith.constant 0 : index
    %c0_8 = arith.constant 0 : index
    %6 = vector.load %arg2[%c0_6, %c2, %c0_7, %c0_8] : memref<2x4x16x16xf32, #tpu.memory_space<vmem>>, vector<2x1x16x16xf32>
    %7 = vector.shape_cast %6 : vector<2x1x16x16xf32> to vector<2x16x16xf32>
    %8 = arith.addf %4, %7 : vector<2x16x16xf32>
    %9 = arith.maximumf %5, %7 : vector<2x16x16xf32>
    %c0_9 = arith.constant 0 : index
    %c3 = arith.constant 3 : index
    %c0_10 = arith.constant 0 : index
    %c0_11 = arith.constant 0 : index
    %10 = vector.load %arg2[%c0_9, %c3, %c0_10, %c0_11] : memref<2x4x16x16xf32, #tpu.memory_space<vmem>>, vector<2x1x16x16xf32>
    %11 = vector.shape_cast %10 : vector<2x1x16x16xf32> to vector<2x16x16xf32>
    %12 = arith.addf %8, %11 : vector<2x16x16xf32>
    %13 = arith.maximumf %9, %11 : vector<2x16x16xf32>
    %cst = arith.constant 2.500000e-01 : f32
    %14 = vector.broadcast %cst : f32 to vector<2x16x16xf32>
    %15 = arith.mulf %12, %14 : vector<2x16x16xf32>
    %cst_12 = arith.constant 0.000000e+00 : f32
    %16 = vector.broadcast %cst_12 : f32 to vector<2x2x3x22xf32>
    %c0_13 = arith.constant 0 : index
    %c0_14 = arith.constant 0 : index
    %c0_15 = arith.constant 0 : index
    %c0_16 = arith.constant 0 : index
    %17 = vector.load %arg4[%c0_13, %c0_14, %c0_15, %c0_16] : memref<2x2x22x22xf32, #tpu.memory_space<vmem>>, vector<2x2x3x22xf32>
    tpu.vector_store %arg4[%c0_13, %c0_14, %c0_15, %c0_16], %16 {strides = array<i32>} : memref<2x2x22x22xf32, #tpu.memory_space<vmem>>, vector<2x2x3x22xf32>,
    %c0_17 = arith.constant 0 : index
    %c0_18 = arith.constant 0 : index
    %c19 = arith.constant 19 : index
    %c0_19 = arith.constant 0 : index
    %18 = vector.load %arg4[%c0_17, %c0_18, %c19, %c0_19] : memref<2x2x22x22xf32, #tpu.memory_space<vmem>>, vector<2x2x3x22xf32>
    tpu.vector_store %arg4[%c0_17, %c0_18, %c19, %c0_19], %16 {strides = array<i32>} : memref<2x2x22x22xf32, #tpu.memory_space<vmem>>, vector<2x2x3x22xf32>,
    %cst_20 = arith.constant 0.000000e+00 : f32
    %19 = vector.broadcast %cst_20 : f32 to vector<2x2x22x3xf32>
    %c0_21 = arith.constant 0 : index
    %c0_22 = arith.constant 0 : index
    %c0_23 = arith.constant 0 : index
    %c0_24 = arith.constant 0 : index
    %20 = vector.load %arg4[%c0_21, %c0_22, %c0_23, %c0_24] : memref<2x2x22x22xf32, #tpu.memory_space<vmem>>, vector<2x2x22x3xf32>
    tpu.vector_store %arg4[%c0_21, %c0_22, %c0_23, %c0_24], %19 {strides = array<i32>} : memref<2x2x22x22xf32, #tpu.memory_space<vmem>>, vector<2x2x22x3xf32>,
    %c0_25 = arith.constant 0 : index
    %c0_26 = arith.constant 0 : index
    %c0_27 = arith.constant 0 : index
    %c19_28 = arith.constant 19 : index
    %21 = vector.load %arg4[%c0_25, %c0_26, %c0_27, %c19_28] : memref<2x2x22x22xf32, #tpu.memory_space<vmem>>, vector<2x2x22x3xf32>
    tpu.vector_store %arg4[%c0_25, %c0_26, %c0_27, %c19_28], %19 {strides = array<i32>} : memref<2x2x22x22xf32, #tpu.memory_space<vmem>>, vector<2x2x22x3xf32>,
    %c0_29 = arith.constant 0 : index
    %c0_30 = arith.constant 0 : index
    %c3_31 = arith.constant 3 : index
    %c3_32 = arith.constant 3 : index
    %22 = vector.load %arg4[%c0_29, %c0_30, %c3_31, %c3_32] : memref<2x2x22x22xf32, #tpu.memory_space<vmem>>, vector<1x2x16x16xf32>
    %23 = vector.shape_cast %22 : vector<1x2x16x16xf32> to vector<2x16x16xf32>
    %24 = vector.shape_cast %15 : vector<2x16x16xf32> to vector<1x2x16x16xf32>
    tpu.vector_store %arg4[%c0_29, %c0_30, %c3_31, %c3_32], %24 {strides = array<i32>} : memref<2x2x22x22xf32, #tpu.memory_space<vmem>>, vector<1x2x16x16xf32>,
    %c1_33 = arith.constant 1 : index
    %c0_34 = arith.constant 0 : index
    %c3_35 = arith.constant 3 : index
    %c3_36 = arith.constant 3 : index
    %25 = vector.load %arg4[%c1_33, %c0_34, %c3_35, %c3_36] : memref<2x2x22x22xf32, #tpu.memory_space<vmem>>, vector<1x2x16x16xf32>
    %26 = vector.shape_cast %25 : vector<1x2x16x16xf32> to vector<2x16x16xf32>
    %27 = vector.shape_cast %13 : vector<2x16x16xf32> to vector<1x2x16x16xf32>
    tpu.vector_store %arg4[%c1_33, %c0_34, %c3_35, %c3_36], %27 {strides = array<i32>} : memref<2x2x22x22xf32, #tpu.memory_space<vmem>>, vector<1x2x16x16xf32>,
    %c0_37 = arith.constant 0 : index
    %c0_38 = arith.constant 0 : index
    %c0_39 = arith.constant 0 : index
    %c0_40 = arith.constant 0 : index
    %28 = vector.load %arg4[%c0_37, %c0_38, %c0_39, %c0_40] : memref<2x2x22x22xf32, #tpu.memory_space<vmem>>, vector<1x2x22x16xf32>
    %29 = vector.shape_cast %28 : vector<1x2x22x16xf32> to vector<2x22x16xf32>
    %c0_41 = arith.constant 0 : index
    %c0_42 = arith.constant 0 : index
    %c0_43 = arith.constant 0 : index
    %c0_44 = arith.constant 0 : index
    %c0_45 = arith.constant 0 : index
    %30 = vector.load %arg5[%c0_41, %c0_42, %c0_43, %c0_44, %c0_45] : memref<2x7x2x22x16xf32, #tpu.memory_space<vmem>>, vector<1x1x2x22x16xf32>
    %31 = vector.shape_cast %30 : vector<1x1x2x22x16xf32> to vector<2x22x16xf32>
    %32 = vector.shape_cast %29 : vector<2x22x16xf32> to vector<1x1x2x22x16xf32>
    tpu.vector_store %arg5[%c0_41, %c0_42, %c0_43, %c0_44, %c0_45], %32 {strides = array<i32>} : memref<2x7x2x22x16xf32, #tpu.memory_space<vmem>>, vector<1x1x2x22x16xf32>,
    %c0_46 = arith.constant 0 : index
    %c0_47 = arith.constant 0 : index
    %c0_48 = arith.constant 0 : index
    %c1_49 = arith.constant 1 : index
    %33 = vector.load %arg4[%c0_46, %c0_47, %c0_48, %c1_49] : memref<2x2x22x22xf32, #tpu.memory_space<vmem>>, vector<1x2x22x16xf32>
    %34 = vector.shape_cast %33 : vector<1x2x22x16xf32> to vector<2x22x16xf32>
    %c0_50 = arith.constant 0 : index
    %c1_51 = arith.constant 1 : index
    %c0_52 = arith.constant 0 : index
    %c0_53 = arith.constant 0 : index
    %c0_54 = arith.constant 0 : index
    %35 = vector.load %arg5[%c0_50, %c1_51, %c0_52, %c0_53, %c0_54] : memref<2x7x2x22x16xf32, #tpu.memory_space<vmem>>, vector<1x1x2x22x16xf32>
    %36 = vector.shape_cast %35 : vector<1x1x2x22x16xf32> to vector<2x22x16xf32>
    %37 = vector.shape_cast %34 : vector<2x22x16xf32> to vector<1x1x2x22x16xf32>
    tpu.vector_store %arg5[%c0_50, %c1_51, %c0_52, %c0_53, %c0_54], %37 {strides = array<i32>} : memref<2x7x2x22x16xf32, #tpu.memory_space<vmem>>, vector<1x1x2x22x16xf32>,
    %c0_55 = arith.constant 0 : index
    %c0_56 = arith.constant 0 : index
    %c0_57 = arith.constant 0 : index
    %c2_58 = arith.constant 2 : index
    %38 = vector.load %arg4[%c0_55, %c0_56, %c0_57, %c2_58] : memref<2x2x22x22xf32, #tpu.memory_space<vmem>>, vector<1x2x22x16xf32>
    %39 = vector.shape_cast %38 : vector<1x2x22x16xf32> to vector<2x22x16xf32>
    %c0_59 = arith.constant 0 : index
    %c2_60 = arith.constant 2 : index
    %c0_61 = arith.constant 0 : index
    %c0_62 = arith.constant 0 : index
    %c0_63 = arith.constant 0 : index
    %40 = vector.load %arg5[%c0_59, %c2_60, %c0_61, %c0_62, %c0_63] : memref<2x7x2x22x16xf32, #tpu.memory_space<vmem>>, vector<1x1x2x22x16xf32>
    %41 = vector.shape_cast %40 : vector<1x1x2x22x16xf32> to vector<2x22x16xf32>
    %42 = vector.shape_cast %39 : vector<2x22x16xf32> to vector<1x1x2x22x16xf32>
    tpu.vector_store %arg5[%c0_59, %c2_60, %c0_61, %c0_62, %c0_63], %42 {strides = array<i32>} : memref<2x7x2x22x16xf32, #tpu.memory_space<vmem>>, vector<1x1x2x22x16xf32>,
    %c0_64 = arith.constant 0 : index
    %c0_65 = arith.constant 0 : index
    %c0_66 = arith.constant 0 : index
    %c3_67 = arith.constant 3 : index
    %43 = vector.load %arg4[%c0_64, %c0_65, %c0_66, %c3_67] : memref<2x2x22x22xf32, #tpu.memory_space<vmem>>, vector<1x2x22x16xf32>
    %44 = vector.shape_cast %43 : vector<1x2x22x16xf32> to vector<2x22x16xf32>
    %c0_68 = arith.constant 0 : index
    %c3_69 = arith.constant 3 : index
    %c0_70 = arith.constant 0 : index
    %c0_71 = arith.constant 0 : index
    %c0_72 = arith.constant 0 : index
    %45 = vector.load %arg5[%c0_68, %c3_69, %c0_70, %c0_71, %c0_72] : memref<2x7x2x22x16xf32, #tpu.memory_space<vmem>>, vector<1x1x2x22x16xf32>
    %46 = vector.shape_cast %45 : vector<1x1x2x22x16xf32> to vector<2x22x16xf32>
    %47 = vector.shape_cast %44 : vector<2x22x16xf32> to vector<1x1x2x22x16xf32>
    tpu.vector_store %arg5[%c0_68, %c3_69, %c0_70, %c0_71, %c0_72], %47 {strides = array<i32>} : memref<2x7x2x22x16xf32, #tpu.memory_space<vmem>>, vector<1x1x2x22x16xf32>,
    %c0_73 = arith.constant 0 : index
    %c0_74 = arith.constant 0 : index
    %c0_75 = arith.constant 0 : index
    %c4 = arith.constant 4 : index
    %48 = vector.load %arg4[%c0_73, %c0_74, %c0_75, %c4] : memref<2x2x22x22xf32, #tpu.memory_space<vmem>>, vector<1x2x22x16xf32>
    %49 = vector.shape_cast %48 : vector<1x2x22x16xf32> to vector<2x22x16xf32>
    %c0_76 = arith.constant 0 : index
    %c4_77 = arith.constant 4 : index
    %c0_78 = arith.constant 0 : index
    %c0_79 = arith.constant 0 : index
    %c0_80 = arith.constant 0 : index
    %50 = vector.load %arg5[%c0_76, %c4_77, %c0_78, %c0_79, %c0_80] : memref<2x7x2x22x16xf32, #tpu.memory_space<vmem>>, vector<1x1x2x22x16xf32>
    %51 = vector.shape_cast %50 : vector<1x1x2x22x16xf32> to vector<2x22x16xf32>
    %52 = vector.shape_cast %49 : vector<2x22x16xf32> to vector<1x1x2x22x16xf32>
    tpu.vector_store %arg5[%c0_76, %c4_77, %c0_78, %c0_79, %c0_80], %52 {strides = array<i32>} : memref<2x7x2x22x16xf32, #tpu.memory_space<vmem>>, vector<1x1x2x22x16xf32>,
    %c0_81 = arith.constant 0 : index
    %c0_82 = arith.constant 0 : index
    %c0_83 = arith.constant 0 : index
    %c5 = arith.constant 5 : index
    %53 = vector.load %arg4[%c0_81, %c0_82, %c0_83, %c5] : memref<2x2x22x22xf32, #tpu.memory_space<vmem>>, vector<1x2x22x16xf32>
    %54 = vector.shape_cast %53 : vector<1x2x22x16xf32> to vector<2x22x16xf32>
    %c0_84 = arith.constant 0 : index
    %c5_85 = arith.constant 5 : index
    %c0_86 = arith.constant 0 : index
    %c0_87 = arith.constant 0 : index
    %c0_88 = arith.constant 0 : index
    %55 = vector.load %arg5[%c0_84, %c5_85, %c0_86, %c0_87, %c0_88] : memref<2x7x2x22x16xf32, #tpu.memory_space<vmem>>, vector<1x1x2x22x16xf32>
    %56 = vector.shape_cast %55 : vector<1x1x2x22x16xf32> to vector<2x22x16xf32>
    %57 = vector.shape_cast %54 : vector<2x22x16xf32> to vector<1x1x2x22x16xf32>
    tpu.vector_store %arg5[%c0_84, %c5_85, %c0_86, %c0_87, %c0_88], %57 {strides = array<i32>} : memref<2x7x2x22x16xf32, #tpu.memory_space<vmem>>, vector<1x1x2x22x16xf32>,
    %c0_89 = arith.constant 0 : index
    %c0_90 = arith.constant 0 : index
    %c0_91 = arith.constant 0 : index
    %c6 = arith.constant 6 : index
    %58 = vector.load %arg4[%c0_89, %c0_90, %c0_91, %c6] : memref<2x2x22x22xf32, #tpu.memory_space<vmem>>, vector<1x2x22x16xf32>
    %59 = vector.shape_cast %58 : vector<1x2x22x16xf32> to vector<2x22x16xf32>
    %c0_92 = arith.constant 0 : index
    %c6_93 = arith.constant 6 : index
    %c0_94 = arith.constant 0 : index
    %c0_95 = arith.constant 0 : index
    %c0_96 = arith.constant 0 : index
    %60 = vector.load %arg5[%c0_92, %c6_93, %c0_94, %c0_95, %c0_96] : memref<2x7x2x22x16xf32, #tpu.memory_space<vmem>>, vector<1x1x2x22x16xf32>
    %61 = vector.shape_cast %60 : vector<1x1x2x22x16xf32> to vector<2x22x16xf32>
    %62 = vector.shape_cast %59 : vector<2x22x16xf32> to vector<1x1x2x22x16xf32>
    tpu.vector_store %arg5[%c0_92, %c6_93, %c0_94, %c0_95, %c0_96], %62 {strides = array<i32>} : memref<2x7x2x22x16xf32, #tpu.memory_space<vmem>>, vector<1x1x2x22x16xf32>,
    %c1_97 = arith.constant 1 : index
    %c0_98 = arith.constant 0 : index
    %c0_99 = arith.constant 0 : index
    %c0_100 = arith.constant 0 : index
    %63 = vector.load %arg4[%c1_97, %c0_98, %c0_99, %c0_100] : memref<2x2x22x22xf32, #tpu.memory_space<vmem>>, vector<1x2x22x16xf32>
    %64 = vector.shape_cast %63 : vector<1x2x22x16xf32> to vector<2x22x16xf32>
    %c1_101 = arith.constant 1 : index
    %c0_102 = arith.constant 0 : index
    %c0_103 = arith.constant 0 : index
    %c0_104 = arith.constant 0 : index
    %c0_105 = arith.constant 0 : index
    %65 = vector.load %arg5[%c1_101, %c0_102, %c0_103, %c0_104, %c0_105] : memref<2x7x2x22x16xf32, #tpu.memory_space<vmem>>, vector<1x1x2x22x16xf32>
    %66 = vector.shape_cast %65 : vector<1x1x2x22x16xf32> to vector<2x22x16xf32>
    %67 = vector.shape_cast %64 : vector<2x22x16xf32> to vector<1x1x2x22x16xf32>
    tpu.vector_store %arg5[%c1_101, %c0_102, %c0_103, %c0_104, %c0_105], %67 {strides = array<i32>} : memref<2x7x2x22x16xf32, #tpu.memory_space<vmem>>, vector<1x1x2x22x16xf32>,
    %c1_106 = arith.constant 1 : index
    %c0_107 = arith.constant 0 : index
    %c0_108 = arith.constant 0 : index
    %c1_109 = arith.constant 1 : index
    %68 = vector.load %arg4[%c1_106, %c0_107, %c0_108, %c1_109] : memref<2x2x22x22xf32, #tpu.memory_space<vmem>>, vector<1x2x22x16xf32>
    %69 = vector.shape_cast %68 : vector<1x2x22x16xf32> to vector<2x22x16xf32>
    %c1_110 = arith.constant 1 : index
    %c1_111 = arith.constant 1 : index
    %c0_112 = arith.constant 0 : index
    %c0_113 = arith.constant 0 : index
    %c0_114 = arith.constant 0 : index
    %70 = vector.load %arg5[%c1_110, %c1_111, %c0_112, %c0_113, %c0_114] : memref<2x7x2x22x16xf32, #tpu.memory_space<vmem>>, vector<1x1x2x22x16xf32>
    %71 = vector.shape_cast %70 : vector<1x1x2x22x16xf32> to vector<2x22x16xf32>
    %72 = vector.shape_cast %69 : vector<2x22x16xf32> to vector<1x1x2x22x16xf32>
    tpu.vector_store %arg5[%c1_110, %c1_111, %c0_112, %c0_113, %c0_114], %72 {strides = array<i32>} : memref<2x7x2x22x16xf32, #tpu.memory_space<vmem>>, vector<1x1x2x22x16xf32>,
    %c1_115 = arith.constant 1 : index
    %c0_116 = arith.constant 0 : index
    %c0_117 = arith.constant 0 : index
    %c2_118 = arith.constant 2 : index
    %73 = vector.load %arg4[%c1_115, %c0_116, %c0_117, %c2_118] : memref<2x2x22x22xf32, #tpu.memory_space<vmem>>, vector<1x2x22x16xf32>
    %74 = vector.shape_cast %73 : vector<1x2x22x16xf32> to vector<2x22x16xf32>
    %c1_119 = arith.constant 1 : index
    %c2_120 = arith.constant 2 : index
    %c0_121 = arith.constant 0 : index
    %c0_122 = arith.constant 0 : index
    %c0_123 = arith.constant 0 : index
    %75 = vector.load %arg5[%c1_119, %c2_120, %c0_121, %c0_122, %c0_123] : memref<2x7x2x22x16xf32, #tpu.memory_space<vmem>>, vector<1x1x2x22x16xf32>
    %76 = vector.shape_cast %75 : vector<1x1x2x22x16xf32> to vector<2x22x16xf32>
    %77 = vector.shape_cast %74 : vector<2x22x16xf32> to vector<1x1x2x22x16xf32>
    tpu.vector_store %arg5[%c1_119, %c2_120, %c0_121, %c0_122, %c0_123], %77 {strides = array<i32>} : memref<2x7x2x22x16xf32, #tpu.memory_space<vmem>>, vector<1x1x2x22x16xf32>,
    %c1_124 = arith.constant 1 : index
    %c0_125 = arith.constant 0 : index
    %c0_126 = arith.constant 0 : index
    %c3_127 = arith.constant 3 : index
    %78 = vector.load %arg4[%c1_124, %c0_125, %c0_126, %c3_127] : memref<2x2x22x22xf32, #tpu.memory_space<vmem>>, vector<1x2x22x16xf32>
    %79 = vector.shape_cast %78 : vector<1x2x22x16xf32> to vector<2x22x16xf32>
    %c1_128 = arith.constant 1 : index
    %c3_129 = arith.constant 3 : index
    %c0_130 = arith.constant 0 : index
    %c0_131 = arith.constant 0 : index
    %c0_132 = arith.constant 0 : index
    %80 = vector.load %arg5[%c1_128, %c3_129, %c0_130, %c0_131, %c0_132] : memref<2x7x2x22x16xf32, #tpu.memory_space<vmem>>, vector<1x1x2x22x16xf32>
    %81 = vector.shape_cast %80 : vector<1x1x2x22x16xf32> to vector<2x22x16xf32>
    %82 = vector.shape_cast %79 : vector<2x22x16xf32> to vector<1x1x2x22x16xf32>
    tpu.vector_store %arg5[%c1_128, %c3_129, %c0_130, %c0_131, %c0_132], %82 {strides = array<i32>} : memref<2x7x2x22x16xf32, #tpu.memory_space<vmem>>, vector<1x1x2x22x16xf32>,
    %c1_133 = arith.constant 1 : index
    %c0_134 = arith.constant 0 : index
    %c0_135 = arith.constant 0 : index
    %c4_136 = arith.constant 4 : index
    %83 = vector.load %arg4[%c1_133, %c0_134, %c0_135, %c4_136] : memref<2x2x22x22xf32, #tpu.memory_space<vmem>>, vector<1x2x22x16xf32>
    %84 = vector.shape_cast %83 : vector<1x2x22x16xf32> to vector<2x22x16xf32>
    %c1_137 = arith.constant 1 : index
    %c4_138 = arith.constant 4 : index
    %c0_139 = arith.constant 0 : index
    %c0_140 = arith.constant 0 : index
    %c0_141 = arith.constant 0 : index
    %85 = vector.load %arg5[%c1_137, %c4_138, %c0_139, %c0_140, %c0_141] : memref<2x7x2x22x16xf32, #tpu.memory_space<vmem>>, vector<1x1x2x22x16xf32>
    %86 = vector.shape_cast %85 : vector<1x1x2x22x16xf32> to vector<2x22x16xf32>
    %87 = vector.shape_cast %84 : vector<2x22x16xf32> to vector<1x1x2x22x16xf32>
    tpu.vector_store %arg5[%c1_137, %c4_138, %c0_139, %c0_140, %c0_141], %87 {strides = array<i32>} : memref<2x7x2x22x16xf32, #tpu.memory_space<vmem>>, vector<1x1x2x22x16xf32>,
    %c1_142 = arith.constant 1 : index
    %c0_143 = arith.constant 0 : index
    %c0_144 = arith.constant 0 : index
    %c5_145 = arith.constant 5 : index
    %88 = vector.load %arg4[%c1_142, %c0_143, %c0_144, %c5_145] : memref<2x2x22x22xf32, #tpu.memory_space<vmem>>, vector<1x2x22x16xf32>
    %89 = vector.shape_cast %88 : vector<1x2x22x16xf32> to vector<2x22x16xf32>
    %c1_146 = arith.constant 1 : index
    %c5_147 = arith.constant 5 : index
    %c0_148 = arith.constant 0 : index
    %c0_149 = arith.constant 0 : index
    %c0_150 = arith.constant 0 : index
    %90 = vector.load %arg5[%c1_146, %c5_147, %c0_148, %c0_149, %c0_150] : memref<2x7x2x22x16xf32, #tpu.memory_space<vmem>>, vector<1x1x2x22x16xf32>
    %91 = vector.shape_cast %90 : vector<1x1x2x22x16xf32> to vector<2x22x16xf32>
    %92 = vector.shape_cast %89 : vector<2x22x16xf32> to vector<1x1x2x22x16xf32>
    tpu.vector_store %arg5[%c1_146, %c5_147, %c0_148, %c0_149, %c0_150], %92 {strides = array<i32>} : memref<2x7x2x22x16xf32, #tpu.memory_space<vmem>>, vector<1x1x2x22x16xf32>,
    %c1_151 = arith.constant 1 : index
    %c0_152 = arith.constant 0 : index
    %c0_153 = arith.constant 0 : index
    %c6_154 = arith.constant 6 : index
    %93 = vector.load %arg4[%c1_151, %c0_152, %c0_153, %c6_154] : memref<2x2x22x22xf32, #tpu.memory_space<vmem>>, vector<1x2x22x16xf32>
    %94 = vector.shape_cast %93 : vector<1x2x22x16xf32> to vector<2x22x16xf32>
    %c1_155 = arith.constant 1 : index
    %c6_156 = arith.constant 6 : index
    %c0_157 = arith.constant 0 : index
    %c0_158 = arith.constant 0 : index
    %c0_159 = arith.constant 0 : index
    %95 = vector.load %arg5[%c1_155, %c6_156, %c0_157, %c0_158, %c0_159] : memref<2x7x2x22x16xf32, #tpu.memory_space<vmem>>, vector<1x1x2x22x16xf32>
    %96 = vector.shape_cast %95 : vector<1x1x2x22x16xf32> to vector<2x22x16xf32>
    %97 = vector.shape_cast %94 : vector<2x22x16xf32> to vector<1x1x2x22x16xf32>
    tpu.vector_store %arg5[%c1_155, %c6_156, %c0_157, %c0_158, %c0_159], %97 {strides = array<i32>} : memref<2x7x2x22x16xf32, #tpu.memory_space<vmem>>, vector<1x1x2x22x16xf32>,
    %cst_160 = arith.constant 0.000000e+00 : f32
    %98 = vector.broadcast %cst_160 : f32 to vector<2x16x16xf32>
    %c0_161 = arith.constant 0 : index
    %99 = memref.load %arg1[%c0_161] : memref<98xf32, #tpu.memory_space<smem>>
    %c0_162 = arith.constant 0 : index
    %c0_163 = arith.constant 0 : index
    %c0_164 = arith.constant 0 : index
    %c0_165 = arith.constant 0 : index
    %c0_166 = arith.constant 0 : index
    %100 = vector.load %arg5[%c0_162, %c0_163, %c0_164, %c0_165, %c0_166] : memref<2x7x2x22x16xf32, #tpu.memory_space<vmem>>, vector<1x1x2x16x16xf32>
    %101 = vector.shape_cast %100 : vector<1x1x2x16x16xf32> to vector<2x16x16xf32>
    %102 = vector.broadcast %99 : f32 to vector<2x16x16xf32>
    %103 = arith.mulf %102, %101 : vector<2x16x16xf32>
    %104 = arith.addf %98, %103 : vector<2x16x16xf32>
    %c7 = arith.constant 7 : index
    %105 = memref.load %arg1[%c7] : memref<98xf32, #tpu.memory_space<smem>>
    %c0_167 = arith.constant 0 : index
    %c0_168 = arith.constant 0 : index
    %c0_169 = arith.constant 0 : index
    %c1_170 = arith.constant 1 : index
    %c0_171 = arith.constant 0 : index
    %106 = vector.load %arg5[%c0_167, %c0_168, %c0_169, %c1_170, %c0_171] : memref<2x7x2x22x16xf32, #tpu.memory_space<vmem>>, vector<1x1x2x16x16xf32>
    %107 = vector.shape_cast %106 : vector<1x1x2x16x16xf32> to vector<2x16x16xf32>
    %108 = vector.broadcast %105 : f32 to vector<2x16x16xf32>
    %109 = arith.mulf %108, %107 : vector<2x16x16xf32>
    %110 = arith.addf %104, %109 : vector<2x16x16xf32>
    %c14 = arith.constant 14 : index
    %111 = memref.load %arg1[%c14] : memref<98xf32, #tpu.memory_space<smem>>
    %c0_172 = arith.constant 0 : index
    %c0_173 = arith.constant 0 : index
    %c0_174 = arith.constant 0 : index
    %c2_175 = arith.constant 2 : index
    %c0_176 = arith.constant 0 : index
    %112 = vector.load %arg5[%c0_172, %c0_173, %c0_174, %c2_175, %c0_176] : memref<2x7x2x22x16xf32, #tpu.memory_space<vmem>>, vector<1x1x2x16x16xf32>
    %113 = vector.shape_cast %112 : vector<1x1x2x16x16xf32> to vector<2x16x16xf32>
    %114 = vector.broadcast %111 : f32 to vector<2x16x16xf32>
    %115 = arith.mulf %114, %113 : vector<2x16x16xf32>
    %116 = arith.addf %110, %115 : vector<2x16x16xf32>
    %c21 = arith.constant 21 : index
    %117 = memref.load %arg1[%c21] : memref<98xf32, #tpu.memory_space<smem>>
    %c0_177 = arith.constant 0 : index
    %c0_178 = arith.constant 0 : index
    %c0_179 = arith.constant 0 : index
    %c3_180 = arith.constant 3 : index
    %c0_181 = arith.constant 0 : index
    %118 = vector.load %arg5[%c0_177, %c0_178, %c0_179, %c3_180, %c0_181] : memref<2x7x2x22x16xf32, #tpu.memory_space<vmem>>, vector<1x1x2x16x16xf32>
    %119 = vector.shape_cast %118 : vector<1x1x2x16x16xf32> to vector<2x16x16xf32>
    %120 = vector.broadcast %117 : f32 to vector<2x16x16xf32>
    %121 = arith.mulf %120, %119 : vector<2x16x16xf32>
    %122 = arith.addf %116, %121 : vector<2x16x16xf32>
    %c28 = arith.constant 28 : index
    %123 = memref.load %arg1[%c28] : memref<98xf32, #tpu.memory_space<smem>>
    %c0_182 = arith.constant 0 : index
    %c0_183 = arith.constant 0 : index
    %c0_184 = arith.constant 0 : index
    %c4_185 = arith.constant 4 : index
    %c0_186 = arith.constant 0 : index
    %124 = vector.load %arg5[%c0_182, %c0_183, %c0_184, %c4_185, %c0_186] : memref<2x7x2x22x16xf32, #tpu.memory_space<vmem>>, vector<1x1x2x16x16xf32>
    %125 = vector.shape_cast %124 : vector<1x1x2x16x16xf32> to vector<2x16x16xf32>
    %126 = vector.broadcast %123 : f32 to vector<2x16x16xf32>
    %127 = arith.mulf %126, %125 : vector<2x16x16xf32>
    %128 = arith.addf %122, %127 : vector<2x16x16xf32>
    %c35 = arith.constant 35 : index
    %129 = memref.load %arg1[%c35] : memref<98xf32, #tpu.memory_space<smem>>
    %c0_187 = arith.constant 0 : index
    %c0_188 = arith.constant 0 : index
    %c0_189 = arith.constant 0 : index
    %c5_190 = arith.constant 5 : index
    %c0_191 = arith.constant 0 : index
    %130 = vector.load %arg5[%c0_187, %c0_188, %c0_189, %c5_190, %c0_191] : memref<2x7x2x22x16xf32, #tpu.memory_space<vmem>>, vector<1x1x2x16x16xf32>
    %131 = vector.shape_cast %130 : vector<1x1x2x16x16xf32> to vector<2x16x16xf32>
    %132 = vector.broadcast %129 : f32 to vector<2x16x16xf32>
    %133 = arith.mulf %132, %131 : vector<2x16x16xf32>
    %134 = arith.addf %128, %133 : vector<2x16x16xf32>
    %c42 = arith.constant 42 : index
    %135 = memref.load %arg1[%c42] : memref<98xf32, #tpu.memory_space<smem>>
    %c0_192 = arith.constant 0 : index
    %c0_193 = arith.constant 0 : index
    %c0_194 = arith.constant 0 : index
    %c6_195 = arith.constant 6 : index
    %c0_196 = arith.constant 0 : index
    %136 = vector.load %arg5[%c0_192, %c0_193, %c0_194, %c6_195, %c0_196] : memref<2x7x2x22x16xf32, #tpu.memory_space<vmem>>, vector<1x1x2x16x16xf32>
    %137 = vector.shape_cast %136 : vector<1x1x2x16x16xf32> to vector<2x16x16xf32>
    %138 = vector.broadcast %135 : f32 to vector<2x16x16xf32>
    %139 = arith.mulf %138, %137 : vector<2x16x16xf32>
    %140 = arith.addf %134, %139 : vector<2x16x16xf32>
    %c1_197 = arith.constant 1 : index
    %141 = memref.load %arg1[%c1_197] : memref<98xf32, #tpu.memory_space<smem>>
    %c0_198 = arith.constant 0 : index
    %c1_199 = arith.constant 1 : index
    %c0_200 = arith.constant 0 : index
    %c0_201 = arith.constant 0 : index
    %c0_202 = arith.constant 0 : index
    %142 = vector.load %arg5[%c0_198, %c1_199, %c0_200, %c0_201, %c0_202] : memref<2x7x2x22x16xf32, #tpu.memory_space<vmem>>, vector<1x1x2x16x16xf32>
    %143 = vector.shape_cast %142 : vector<1x1x2x16x16xf32> to vector<2x16x16xf32>
    %144 = vector.broadcast %141 : f32 to vector<2x16x16xf32>
    %145 = arith.mulf %144, %143 : vector<2x16x16xf32>
    %146 = arith.addf %140, %145 : vector<2x16x16xf32>
    %c8 = arith.constant 8 : index
    %147 = memref.load %arg1[%c8] : memref<98xf32, #tpu.memory_space<smem>>
    %c0_203 = arith.constant 0 : index
    %c1_204 = arith.constant 1 : index
    %c0_205 = arith.constant 0 : index
    %c1_206 = arith.constant 1 : index
    %c0_207 = arith.constant 0 : index
    %148 = vector.load %arg5[%c0_203, %c1_204, %c0_205, %c1_206, %c0_207] : memref<2x7x2x22x16xf32, #tpu.memory_space<vmem>>, vector<1x1x2x16x16xf32>
    %149 = vector.shape_cast %148 : vector<1x1x2x16x16xf32> to vector<2x16x16xf32>
    %150 = vector.broadcast %147 : f32 to vector<2x16x16xf32>
    %151 = arith.mulf %150, %149 : vector<2x16x16xf32>
    %152 = arith.addf %146, %151 : vector<2x16x16xf32>
    %c15 = arith.constant 15 : index
    %153 = memref.load %arg1[%c15] : memref<98xf32, #tpu.memory_space<smem>>
    %c0_208 = arith.constant 0 : index
    %c1_209 = arith.constant 1 : index
    %c0_210 = arith.constant 0 : index
    %c2_211 = arith.constant 2 : index
    %c0_212 = arith.constant 0 : index
    %154 = vector.load %arg5[%c0_208, %c1_209, %c0_210, %c2_211, %c0_212] : memref<2x7x2x22x16xf32, #tpu.memory_space<vmem>>, vector<1x1x2x16x16xf32>
    %155 = vector.shape_cast %154 : vector<1x1x2x16x16xf32> to vector<2x16x16xf32>
    %156 = vector.broadcast %153 : f32 to vector<2x16x16xf32>
    %157 = arith.mulf %156, %155 : vector<2x16x16xf32>
    %158 = arith.addf %152, %157 : vector<2x16x16xf32>
    %c22 = arith.constant 22 : index
    %159 = memref.load %arg1[%c22] : memref<98xf32, #tpu.memory_space<smem>>
    %c0_213 = arith.constant 0 : index
    %c1_214 = arith.constant 1 : index
    %c0_215 = arith.constant 0 : index
    %c3_216 = arith.constant 3 : index
    %c0_217 = arith.constant 0 : index
    %160 = vector.load %arg5[%c0_213, %c1_214, %c0_215, %c3_216, %c0_217] : memref<2x7x2x22x16xf32, #tpu.memory_space<vmem>>, vector<1x1x2x16x16xf32>
    %161 = vector.shape_cast %160 : vector<1x1x2x16x16xf32> to vector<2x16x16xf32>
    %162 = vector.broadcast %159 : f32 to vector<2x16x16xf32>
    %163 = arith.mulf %162, %161 : vector<2x16x16xf32>
    %164 = arith.addf %158, %163 : vector<2x16x16xf32>
    %c29 = arith.constant 29 : index
    %165 = memref.load %arg1[%c29] : memref<98xf32, #tpu.memory_space<smem>>
    %c0_218 = arith.constant 0 : index
    %c1_219 = arith.constant 1 : index
    %c0_220 = arith.constant 0 : index
    %c4_221 = arith.constant 4 : index
    %c0_222 = arith.constant 0 : index
    %166 = vector.load %arg5[%c0_218, %c1_219, %c0_220, %c4_221, %c0_222] : memref<2x7x2x22x16xf32, #tpu.memory_space<vmem>>, vector<1x1x2x16x16xf32>
    %167 = vector.shape_cast %166 : vector<1x1x2x16x16xf32> to vector<2x16x16xf32>
    %168 = vector.broadcast %165 : f32 to vector<2x16x16xf32>
    %169 = arith.mulf %168, %167 : vector<2x16x16xf32>
    %170 = arith.addf %164, %169 : vector<2x16x16xf32>
    %c36 = arith.constant 36 : index
    %171 = memref.load %arg1[%c36] : memref<98xf32, #tpu.memory_space<smem>>
    %c0_223 = arith.constant 0 : index
    %c1_224 = arith.constant 1 : index
    %c0_225 = arith.constant 0 : index
    %c5_226 = arith.constant 5 : index
    %c0_227 = arith.constant 0 : index
    %172 = vector.load %arg5[%c0_223, %c1_224, %c0_225, %c5_226, %c0_227] : memref<2x7x2x22x16xf32, #tpu.memory_space<vmem>>, vector<1x1x2x16x16xf32>
    %173 = vector.shape_cast %172 : vector<1x1x2x16x16xf32> to vector<2x16x16xf32>
    %174 = vector.broadcast %171 : f32 to vector<2x16x16xf32>
    %175 = arith.mulf %174, %173 : vector<2x16x16xf32>
    %176 = arith.addf %170, %175 : vector<2x16x16xf32>
    %c43 = arith.constant 43 : index
    %177 = memref.load %arg1[%c43] : memref<98xf32, #tpu.memory_space<smem>>
    %c0_228 = arith.constant 0 : index
    %c1_229 = arith.constant 1 : index
    %c0_230 = arith.constant 0 : index
    %c6_231 = arith.constant 6 : index
    %c0_232 = arith.constant 0 : index
    %178 = vector.load %arg5[%c0_228, %c1_229, %c0_230, %c6_231, %c0_232] : memref<2x7x2x22x16xf32, #tpu.memory_space<vmem>>, vector<1x1x2x16x16xf32>
    %179 = vector.shape_cast %178 : vector<1x1x2x16x16xf32> to vector<2x16x16xf32>
    %180 = vector.broadcast %177 : f32 to vector<2x16x16xf32>
    %181 = arith.mulf %180, %179 : vector<2x16x16xf32>
    %182 = arith.addf %176, %181 : vector<2x16x16xf32>
    %c2_233 = arith.constant 2 : index
    %183 = memref.load %arg1[%c2_233] : memref<98xf32, #tpu.memory_space<smem>>
    %c0_234 = arith.constant 0 : index
    %c2_235 = arith.constant 2 : index
    %c0_236 = arith.constant 0 : index
    %c0_237 = arith.constant 0 : index
    %c0_238 = arith.constant 0 : index
    %184 = vector.load %arg5[%c0_234, %c2_235, %c0_236, %c0_237, %c0_238] : memref<2x7x2x22x16xf32, #tpu.memory_space<vmem>>, vector<1x1x2x16x16xf32>
    %185 = vector.shape_cast %184 : vector<1x1x2x16x16xf32> to vector<2x16x16xf32>
    %186 = vector.broadcast %183 : f32 to vector<2x16x16xf32>
    %187 = arith.mulf %186, %185 : vector<2x16x16xf32>
    %188 = arith.addf %182, %187 : vector<2x16x16xf32>
    %c9 = arith.constant 9 : index
    %189 = memref.load %arg1[%c9] : memref<98xf32, #tpu.memory_space<smem>>
    %c0_239 = arith.constant 0 : index
    %c2_240 = arith.constant 2 : index
    %c0_241 = arith.constant 0 : index
    %c1_242 = arith.constant 1 : index
    %c0_243 = arith.constant 0 : index
    %190 = vector.load %arg5[%c0_239, %c2_240, %c0_241, %c1_242, %c0_243] : memref<2x7x2x22x16xf32, #tpu.memory_space<vmem>>, vector<1x1x2x16x16xf32>
    %191 = vector.shape_cast %190 : vector<1x1x2x16x16xf32> to vector<2x16x16xf32>
    %192 = vector.broadcast %189 : f32 to vector<2x16x16xf32>
    %193 = arith.mulf %192, %191 : vector<2x16x16xf32>
    %194 = arith.addf %188, %193 : vector<2x16x16xf32>
    %c16 = arith.constant 16 : index
    %195 = memref.load %arg1[%c16] : memref<98xf32, #tpu.memory_space<smem>>
    %c0_244 = arith.constant 0 : index
    %c2_245 = arith.constant 2 : index
    %c0_246 = arith.constant 0 : index
    %c2_247 = arith.constant 2 : index
    %c0_248 = arith.constant 0 : index
    %196 = vector.load %arg5[%c0_244, %c2_245, %c0_246, %c2_247, %c0_248] : memref<2x7x2x22x16xf32, #tpu.memory_space<vmem>>, vector<1x1x2x16x16xf32>
    %197 = vector.shape_cast %196 : vector<1x1x2x16x16xf32> to vector<2x16x16xf32>
    %198 = vector.broadcast %195 : f32 to vector<2x16x16xf32>
    %199 = arith.mulf %198, %197 : vector<2x16x16xf32>
    %200 = arith.addf %194, %199 : vector<2x16x16xf32>
    %c23 = arith.constant 23 : index
    %201 = memref.load %arg1[%c23] : memref<98xf32, #tpu.memory_space<smem>>
    %c0_249 = arith.constant 0 : index
    %c2_250 = arith.constant 2 : index
    %c0_251 = arith.constant 0 : index
    %c3_252 = arith.constant 3 : index
    %c0_253 = arith.constant 0 : index
    %202 = vector.load %arg5[%c0_249, %c2_250, %c0_251, %c3_252, %c0_253] : memref<2x7x2x22x16xf32, #tpu.memory_space<vmem>>, vector<1x1x2x16x16xf32>
    %203 = vector.shape_cast %202 : vector<1x1x2x16x16xf32> to vector<2x16x16xf32>
    %204 = vector.broadcast %201 : f32 to vector<2x16x16xf32>
    %205 = arith.mulf %204, %203 : vector<2x16x16xf32>
    %206 = arith.addf %200, %205 : vector<2x16x16xf32>
    %c30 = arith.constant 30 : index
    %207 = memref.load %arg1[%c30] : memref<98xf32, #tpu.memory_space<smem>>
    %c0_254 = arith.constant 0 : index
    %c2_255 = arith.constant 2 : index
    %c0_256 = arith.constant 0 : index
    %c4_257 = arith.constant 4 : index
    %c0_258 = arith.constant 0 : index
    %208 = vector.load %arg5[%c0_254, %c2_255, %c0_256, %c4_257, %c0_258] : memref<2x7x2x22x16xf32, #tpu.memory_space<vmem>>, vector<1x1x2x16x16xf32>
    %209 = vector.shape_cast %208 : vector<1x1x2x16x16xf32> to vector<2x16x16xf32>
    %210 = vector.broadcast %207 : f32 to vector<2x16x16xf32>
    %211 = arith.mulf %210, %209 : vector<2x16x16xf32>
    %212 = arith.addf %206, %211 : vector<2x16x16xf32>
    %c37 = arith.constant 37 : index
    %213 = memref.load %arg1[%c37] : memref<98xf32, #tpu.memory_space<smem>>
    %c0_259 = arith.constant 0 : index
    %c2_260 = arith.constant 2 : index
    %c0_261 = arith.constant 0 : index
    %c5_262 = arith.constant 5 : index
    %c0_263 = arith.constant 0 : index
    %214 = vector.load %arg5[%c0_259, %c2_260, %c0_261, %c5_262, %c0_263] : memref<2x7x2x22x16xf32, #tpu.memory_space<vmem>>, vector<1x1x2x16x16xf32>
    %215 = vector.shape_cast %214 : vector<1x1x2x16x16xf32> to vector<2x16x16xf32>
    %216 = vector.broadcast %213 : f32 to vector<2x16x16xf32>
    %217 = arith.mulf %216, %215 : vector<2x16x16xf32>
    %218 = arith.addf %212, %217 : vector<2x16x16xf32>
    %c44 = arith.constant 44 : index
    %219 = memref.load %arg1[%c44] : memref<98xf32, #tpu.memory_space<smem>>
    %c0_264 = arith.constant 0 : index
    %c2_265 = arith.constant 2 : index
    %c0_266 = arith.constant 0 : index
    %c6_267 = arith.constant 6 : index
    %c0_268 = arith.constant 0 : index
    %220 = vector.load %arg5[%c0_264, %c2_265, %c0_266, %c6_267, %c0_268] : memref<2x7x2x22x16xf32, #tpu.memory_space<vmem>>, vector<1x1x2x16x16xf32>
    %221 = vector.shape_cast %220 : vector<1x1x2x16x16xf32> to vector<2x16x16xf32>
    %222 = vector.broadcast %219 : f32 to vector<2x16x16xf32>
    %223 = arith.mulf %222, %221 : vector<2x16x16xf32>
    %224 = arith.addf %218, %223 : vector<2x16x16xf32>
    %c3_269 = arith.constant 3 : index
    %225 = memref.load %arg1[%c3_269] : memref<98xf32, #tpu.memory_space<smem>>
    %c0_270 = arith.constant 0 : index
    %c3_271 = arith.constant 3 : index
    %c0_272 = arith.constant 0 : index
    %c0_273 = arith.constant 0 : index
    %c0_274 = arith.constant 0 : index
    %226 = vector.load %arg5[%c0_270, %c3_271, %c0_272, %c0_273, %c0_274] : memref<2x7x2x22x16xf32, #tpu.memory_space<vmem>>, vector<1x1x2x16x16xf32>
    %227 = vector.shape_cast %226 : vector<1x1x2x16x16xf32> to vector<2x16x16xf32>
    %228 = vector.broadcast %225 : f32 to vector<2x16x16xf32>
    %229 = arith.mulf %228, %227 : vector<2x16x16xf32>
    %230 = arith.addf %224, %229 : vector<2x16x16xf32>
    %c10 = arith.constant 10 : index
    %231 = memref.load %arg1[%c10] : memref<98xf32, #tpu.memory_space<smem>>
    %c0_275 = arith.constant 0 : index
    %c3_276 = arith.constant 3 : index
    %c0_277 = arith.constant 0 : index
    %c1_278 = arith.constant 1 : index
    %c0_279 = arith.constant 0 : index
    %232 = vector.load %arg5[%c0_275, %c3_276, %c0_277, %c1_278, %c0_279] : memref<2x7x2x22x16xf32, #tpu.memory_space<vmem>>, vector<1x1x2x16x16xf32>
    %233 = vector.shape_cast %232 : vector<1x1x2x16x16xf32> to vector<2x16x16xf32>
    %234 = vector.broadcast %231 : f32 to vector<2x16x16xf32>
    %235 = arith.mulf %234, %233 : vector<2x16x16xf32>
    %236 = arith.addf %230, %235 : vector<2x16x16xf32>
    %c17 = arith.constant 17 : index
    %237 = memref.load %arg1[%c17] : memref<98xf32, #tpu.memory_space<smem>>
    %c0_280 = arith.constant 0 : index
    %c3_281 = arith.constant 3 : index
    %c0_282 = arith.constant 0 : index
    %c2_283 = arith.constant 2 : index
    %c0_284 = arith.constant 0 : index
    %238 = vector.load %arg5[%c0_280, %c3_281, %c0_282, %c2_283, %c0_284] : memref<2x7x2x22x16xf32, #tpu.memory_space<vmem>>, vector<1x1x2x16x16xf32>
    %239 = vector.shape_cast %238 : vector<1x1x2x16x16xf32> to vector<2x16x16xf32>
    %240 = vector.broadcast %237 : f32 to vector<2x16x16xf32>
    %241 = arith.mulf %240, %239 : vector<2x16x16xf32>
    %242 = arith.addf %236, %241 : vector<2x16x16xf32>
    %c24 = arith.constant 24 : index
    %243 = memref.load %arg1[%c24] : memref<98xf32, #tpu.memory_space<smem>>
    %c0_285 = arith.constant 0 : index
    %c3_286 = arith.constant 3 : index
    %c0_287 = arith.constant 0 : index
    %c3_288 = arith.constant 3 : index
    %c0_289 = arith.constant 0 : index
    %244 = vector.load %arg5[%c0_285, %c3_286, %c0_287, %c3_288, %c0_289] : memref<2x7x2x22x16xf32, #tpu.memory_space<vmem>>, vector<1x1x2x16x16xf32>
    %245 = vector.shape_cast %244 : vector<1x1x2x16x16xf32> to vector<2x16x16xf32>
    %246 = vector.broadcast %243 : f32 to vector<2x16x16xf32>
    %247 = arith.mulf %246, %245 : vector<2x16x16xf32>
    %248 = arith.addf %242, %247 : vector<2x16x16xf32>
    %c31 = arith.constant 31 : index
    %249 = memref.load %arg1[%c31] : memref<98xf32, #tpu.memory_space<smem>>
    %c0_290 = arith.constant 0 : index
    %c3_291 = arith.constant 3 : index
    %c0_292 = arith.constant 0 : index
    %c4_293 = arith.constant 4 : index
    %c0_294 = arith.constant 0 : index
    %250 = vector.load %arg5[%c0_290, %c3_291, %c0_292, %c4_293, %c0_294] : memref<2x7x2x22x16xf32, #tpu.memory_space<vmem>>, vector<1x1x2x16x16xf32>
    %251 = vector.shape_cast %250 : vector<1x1x2x16x16xf32> to vector<2x16x16xf32>
    %252 = vector.broadcast %249 : f32 to vector<2x16x16xf32>
    %253 = arith.mulf %252, %251 : vector<2x16x16xf32>
    %254 = arith.addf %248, %253 : vector<2x16x16xf32>
    %c38 = arith.constant 38 : index
    %255 = memref.load %arg1[%c38] : memref<98xf32, #tpu.memory_space<smem>>
    %c0_295 = arith.constant 0 : index
    %c3_296 = arith.constant 3 : index
    %c0_297 = arith.constant 0 : index
    %c5_298 = arith.constant 5 : index
    %c0_299 = arith.constant 0 : index
    %256 = vector.load %arg5[%c0_295, %c3_296, %c0_297, %c5_298, %c0_299] : memref<2x7x2x22x16xf32, #tpu.memory_space<vmem>>, vector<1x1x2x16x16xf32>
    %257 = vector.shape_cast %256 : vector<1x1x2x16x16xf32> to vector<2x16x16xf32>
    %258 = vector.broadcast %255 : f32 to vector<2x16x16xf32>
    %259 = arith.mulf %258, %257 : vector<2x16x16xf32>
    %260 = arith.addf %254, %259 : vector<2x16x16xf32>
    %c45 = arith.constant 45 : index
    %261 = memref.load %arg1[%c45] : memref<98xf32, #tpu.memory_space<smem>>
    %c0_300 = arith.constant 0 : index
    %c3_301 = arith.constant 3 : index
    %c0_302 = arith.constant 0 : index
    %c6_303 = arith.constant 6 : index
    %c0_304 = arith.constant 0 : index
    %262 = vector.load %arg5[%c0_300, %c3_301, %c0_302, %c6_303, %c0_304] : memref<2x7x2x22x16xf32, #tpu.memory_space<vmem>>, vector<1x1x2x16x16xf32>
    %263 = vector.shape_cast %262 : vector<1x1x2x16x16xf32> to vector<2x16x16xf32>
    %264 = vector.broadcast %261 : f32 to vector<2x16x16xf32>
    %265 = arith.mulf %264, %263 : vector<2x16x16xf32>
    %266 = arith.addf %260, %265 : vector<2x16x16xf32>
    %c4_305 = arith.constant 4 : index
    %267 = memref.load %arg1[%c4_305] : memref<98xf32, #tpu.memory_space<smem>>
    %c0_306 = arith.constant 0 : index
    %c4_307 = arith.constant 4 : index
    %c0_308 = arith.constant 0 : index
    %c0_309 = arith.constant 0 : index
    %c0_310 = arith.constant 0 : index
    %268 = vector.load %arg5[%c0_306, %c4_307, %c0_308, %c0_309, %c0_310] : memref<2x7x2x22x16xf32, #tpu.memory_space<vmem>>, vector<1x1x2x16x16xf32>
    %269 = vector.shape_cast %268 : vector<1x1x2x16x16xf32> to vector<2x16x16xf32>
    %270 = vector.broadcast %267 : f32 to vector<2x16x16xf32>
    %271 = arith.mulf %270, %269 : vector<2x16x16xf32>
    %272 = arith.addf %266, %271 : vector<2x16x16xf32>
    %c11 = arith.constant 11 : index
    %273 = memref.load %arg1[%c11] : memref<98xf32, #tpu.memory_space<smem>>
    %c0_311 = arith.constant 0 : index
    %c4_312 = arith.constant 4 : index
    %c0_313 = arith.constant 0 : index
    %c1_314 = arith.constant 1 : index
    %c0_315 = arith.constant 0 : index
    %274 = vector.load %arg5[%c0_311, %c4_312, %c0_313, %c1_314, %c0_315] : memref<2x7x2x22x16xf32, #tpu.memory_space<vmem>>, vector<1x1x2x16x16xf32>
    %275 = vector.shape_cast %274 : vector<1x1x2x16x16xf32> to vector<2x16x16xf32>
    %276 = vector.broadcast %273 : f32 to vector<2x16x16xf32>
    %277 = arith.mulf %276, %275 : vector<2x16x16xf32>
    %278 = arith.addf %272, %277 : vector<2x16x16xf32>
    %c18 = arith.constant 18 : index
    %279 = memref.load %arg1[%c18] : memref<98xf32, #tpu.memory_space<smem>>
    %c0_316 = arith.constant 0 : index
    %c4_317 = arith.constant 4 : index
    %c0_318 = arith.constant 0 : index
    %c2_319 = arith.constant 2 : index
    %c0_320 = arith.constant 0 : index
    %280 = vector.load %arg5[%c0_316, %c4_317, %c0_318, %c2_319, %c0_320] : memref<2x7x2x22x16xf32, #tpu.memory_space<vmem>>, vector<1x1x2x16x16xf32>
    %281 = vector.shape_cast %280 : vector<1x1x2x16x16xf32> to vector<2x16x16xf32>
    %282 = vector.broadcast %279 : f32 to vector<2x16x16xf32>
    %283 = arith.mulf %282, %281 : vector<2x16x16xf32>
    %284 = arith.addf %278, %283 : vector<2x16x16xf32>
    %c25 = arith.constant 25 : index
    %285 = memref.load %arg1[%c25] : memref<98xf32, #tpu.memory_space<smem>>
    %c0_321 = arith.constant 0 : index
    %c4_322 = arith.constant 4 : index
    %c0_323 = arith.constant 0 : index
    %c3_324 = arith.constant 3 : index
    %c0_325 = arith.constant 0 : index
    %286 = vector.load %arg5[%c0_321, %c4_322, %c0_323, %c3_324, %c0_325] : memref<2x7x2x22x16xf32, #tpu.memory_space<vmem>>, vector<1x1x2x16x16xf32>
    %287 = vector.shape_cast %286 : vector<1x1x2x16x16xf32> to vector<2x16x16xf32>
    %288 = vector.broadcast %285 : f32 to vector<2x16x16xf32>
    %289 = arith.mulf %288, %287 : vector<2x16x16xf32>
    %290 = arith.addf %284, %289 : vector<2x16x16xf32>
    %c32 = arith.constant 32 : index
    %291 = memref.load %arg1[%c32] : memref<98xf32, #tpu.memory_space<smem>>
    %c0_326 = arith.constant 0 : index
    %c4_327 = arith.constant 4 : index
    %c0_328 = arith.constant 0 : index
    %c4_329 = arith.constant 4 : index
    %c0_330 = arith.constant 0 : index
    %292 = vector.load %arg5[%c0_326, %c4_327, %c0_328, %c4_329, %c0_330] : memref<2x7x2x22x16xf32, #tpu.memory_space<vmem>>, vector<1x1x2x16x16xf32>
    %293 = vector.shape_cast %292 : vector<1x1x2x16x16xf32> to vector<2x16x16xf32>
    %294 = vector.broadcast %291 : f32 to vector<2x16x16xf32>
    %295 = arith.mulf %294, %293 : vector<2x16x16xf32>
    %296 = arith.addf %290, %295 : vector<2x16x16xf32>
    %c39 = arith.constant 39 : index
    %297 = memref.load %arg1[%c39] : memref<98xf32, #tpu.memory_space<smem>>
    %c0_331 = arith.constant 0 : index
    %c4_332 = arith.constant 4 : index
    %c0_333 = arith.constant 0 : index
    %c5_334 = arith.constant 5 : index
    %c0_335 = arith.constant 0 : index
    %298 = vector.load %arg5[%c0_331, %c4_332, %c0_333, %c5_334, %c0_335] : memref<2x7x2x22x16xf32, #tpu.memory_space<vmem>>, vector<1x1x2x16x16xf32>
    %299 = vector.shape_cast %298 : vector<1x1x2x16x16xf32> to vector<2x16x16xf32>
    %300 = vector.broadcast %297 : f32 to vector<2x16x16xf32>
    %301 = arith.mulf %300, %299 : vector<2x16x16xf32>
    %302 = arith.addf %296, %301 : vector<2x16x16xf32>
    %c46 = arith.constant 46 : index
    %303 = memref.load %arg1[%c46] : memref<98xf32, #tpu.memory_space<smem>>
    %c0_336 = arith.constant 0 : index
    %c4_337 = arith.constant 4 : index
    %c0_338 = arith.constant 0 : index
    %c6_339 = arith.constant 6 : index
    %c0_340 = arith.constant 0 : index
    %304 = vector.load %arg5[%c0_336, %c4_337, %c0_338, %c6_339, %c0_340] : memref<2x7x2x22x16xf32, #tpu.memory_space<vmem>>, vector<1x1x2x16x16xf32>
    %305 = vector.shape_cast %304 : vector<1x1x2x16x16xf32> to vector<2x16x16xf32>
    %306 = vector.broadcast %303 : f32 to vector<2x16x16xf32>
    %307 = arith.mulf %306, %305 : vector<2x16x16xf32>
    %308 = arith.addf %302, %307 : vector<2x16x16xf32>
    %c5_341 = arith.constant 5 : index
    %309 = memref.load %arg1[%c5_341] : memref<98xf32, #tpu.memory_space<smem>>
    %c0_342 = arith.constant 0 : index
    %c5_343 = arith.constant 5 : index
    %c0_344 = arith.constant 0 : index
    %c0_345 = arith.constant 0 : index
    %c0_346 = arith.constant 0 : index
    %310 = vector.load %arg5[%c0_342, %c5_343, %c0_344, %c0_345, %c0_346] : memref<2x7x2x22x16xf32, #tpu.memory_space<vmem>>, vector<1x1x2x16x16xf32>
    %311 = vector.shape_cast %310 : vector<1x1x2x16x16xf32> to vector<2x16x16xf32>
    %312 = vector.broadcast %309 : f32 to vector<2x16x16xf32>
    %313 = arith.mulf %312, %311 : vector<2x16x16xf32>
    %314 = arith.addf %308, %313 : vector<2x16x16xf32>
    %c12 = arith.constant 12 : index
    %315 = memref.load %arg1[%c12] : memref<98xf32, #tpu.memory_space<smem>>
    %c0_347 = arith.constant 0 : index
    %c5_348 = arith.constant 5 : index
    %c0_349 = arith.constant 0 : index
    %c1_350 = arith.constant 1 : index
    %c0_351 = arith.constant 0 : index
    %316 = vector.load %arg5[%c0_347, %c5_348, %c0_349, %c1_350, %c0_351] : memref<2x7x2x22x16xf32, #tpu.memory_space<vmem>>, vector<1x1x2x16x16xf32>
    %317 = vector.shape_cast %316 : vector<1x1x2x16x16xf32> to vector<2x16x16xf32>
    %318 = vector.broadcast %315 : f32 to vector<2x16x16xf32>
    %319 = arith.mulf %318, %317 : vector<2x16x16xf32>
    %320 = arith.addf %314, %319 : vector<2x16x16xf32>
    %c19_352 = arith.constant 19 : index
    %321 = memref.load %arg1[%c19_352] : memref<98xf32, #tpu.memory_space<smem>>
    %c0_353 = arith.constant 0 : index
    %c5_354 = arith.constant 5 : index
    %c0_355 = arith.constant 0 : index
    %c2_356 = arith.constant 2 : index
    %c0_357 = arith.constant 0 : index
    %322 = vector.load %arg5[%c0_353, %c5_354, %c0_355, %c2_356, %c0_357] : memref<2x7x2x22x16xf32, #tpu.memory_space<vmem>>, vector<1x1x2x16x16xf32>
    %323 = vector.shape_cast %322 : vector<1x1x2x16x16xf32> to vector<2x16x16xf32>
    %324 = vector.broadcast %321 : f32 to vector<2x16x16xf32>
    %325 = arith.mulf %324, %323 : vector<2x16x16xf32>
    %326 = arith.addf %320, %325 : vector<2x16x16xf32>
    %c26 = arith.constant 26 : index
    %327 = memref.load %arg1[%c26] : memref<98xf32, #tpu.memory_space<smem>>
    %c0_358 = arith.constant 0 : index
    %c5_359 = arith.constant 5 : index
    %c0_360 = arith.constant 0 : index
    %c3_361 = arith.constant 3 : index
    %c0_362 = arith.constant 0 : index
    %328 = vector.load %arg5[%c0_358, %c5_359, %c0_360, %c3_361, %c0_362] : memref<2x7x2x22x16xf32, #tpu.memory_space<vmem>>, vector<1x1x2x16x16xf32>
    %329 = vector.shape_cast %328 : vector<1x1x2x16x16xf32> to vector<2x16x16xf32>
    %330 = vector.broadcast %327 : f32 to vector<2x16x16xf32>
    %331 = arith.mulf %330, %329 : vector<2x16x16xf32>
    %332 = arith.addf %326, %331 : vector<2x16x16xf32>
    %c33 = arith.constant 33 : index
    %333 = memref.load %arg1[%c33] : memref<98xf32, #tpu.memory_space<smem>>
    %c0_363 = arith.constant 0 : index
    %c5_364 = arith.constant 5 : index
    %c0_365 = arith.constant 0 : index
    %c4_366 = arith.constant 4 : index
    %c0_367 = arith.constant 0 : index
    %334 = vector.load %arg5[%c0_363, %c5_364, %c0_365, %c4_366, %c0_367] : memref<2x7x2x22x16xf32, #tpu.memory_space<vmem>>, vector<1x1x2x16x16xf32>
    %335 = vector.shape_cast %334 : vector<1x1x2x16x16xf32> to vector<2x16x16xf32>
    %336 = vector.broadcast %333 : f32 to vector<2x16x16xf32>
    %337 = arith.mulf %336, %335 : vector<2x16x16xf32>
    %338 = arith.addf %332, %337 : vector<2x16x16xf32>
    %c40 = arith.constant 40 : index
    %339 = memref.load %arg1[%c40] : memref<98xf32, #tpu.memory_space<smem>>
    %c0_368 = arith.constant 0 : index
    %c5_369 = arith.constant 5 : index
    %c0_370 = arith.constant 0 : index
    %c5_371 = arith.constant 5 : index
    %c0_372 = arith.constant 0 : index
    %340 = vector.load %arg5[%c0_368, %c5_369, %c0_370, %c5_371, %c0_372] : memref<2x7x2x22x16xf32, #tpu.memory_space<vmem>>, vector<1x1x2x16x16xf32>
    %341 = vector.shape_cast %340 : vector<1x1x2x16x16xf32> to vector<2x16x16xf32>
    %342 = vector.broadcast %339 : f32 to vector<2x16x16xf32>
    %343 = arith.mulf %342, %341 : vector<2x16x16xf32>
    %344 = arith.addf %338, %343 : vector<2x16x16xf32>
    %c47 = arith.constant 47 : index
    %345 = memref.load %arg1[%c47] : memref<98xf32, #tpu.memory_space<smem>>
    %c0_373 = arith.constant 0 : index
    %c5_374 = arith.constant 5 : index
    %c0_375 = arith.constant 0 : index
    %c6_376 = arith.constant 6 : index
    %c0_377 = arith.constant 0 : index
    %346 = vector.load %arg5[%c0_373, %c5_374, %c0_375, %c6_376, %c0_377] : memref<2x7x2x22x16xf32, #tpu.memory_space<vmem>>, vector<1x1x2x16x16xf32>
    %347 = vector.shape_cast %346 : vector<1x1x2x16x16xf32> to vector<2x16x16xf32>
    %348 = vector.broadcast %345 : f32 to vector<2x16x16xf32>
    %349 = arith.mulf %348, %347 : vector<2x16x16xf32>
    %350 = arith.addf %344, %349 : vector<2x16x16xf32>
    %c6_378 = arith.constant 6 : index
    %351 = memref.load %arg1[%c6_378] : memref<98xf32, #tpu.memory_space<smem>>
    %c0_379 = arith.constant 0 : index
    %c6_380 = arith.constant 6 : index
    %c0_381 = arith.constant 0 : index
    %c0_382 = arith.constant 0 : index
    %c0_383 = arith.constant 0 : index
    %352 = vector.load %arg5[%c0_379, %c6_380, %c0_381, %c0_382, %c0_383] : memref<2x7x2x22x16xf32, #tpu.memory_space<vmem>>, vector<1x1x2x16x16xf32>
    %353 = vector.shape_cast %352 : vector<1x1x2x16x16xf32> to vector<2x16x16xf32>
    %354 = vector.broadcast %351 : f32 to vector<2x16x16xf32>
    %355 = arith.mulf %354, %353 : vector<2x16x16xf32>
    %356 = arith.addf %350, %355 : vector<2x16x16xf32>
    %c13 = arith.constant 13 : index
    %357 = memref.load %arg1[%c13] : memref<98xf32, #tpu.memory_space<smem>>
    %c0_384 = arith.constant 0 : index
    %c6_385 = arith.constant 6 : index
    %c0_386 = arith.constant 0 : index
    %c1_387 = arith.constant 1 : index
    %c0_388 = arith.constant 0 : index
    %358 = vector.load %arg5[%c0_384, %c6_385, %c0_386, %c1_387, %c0_388] : memref<2x7x2x22x16xf32, #tpu.memory_space<vmem>>, vector<1x1x2x16x16xf32>
    %359 = vector.shape_cast %358 : vector<1x1x2x16x16xf32> to vector<2x16x16xf32>
    %360 = vector.broadcast %357 : f32 to vector<2x16x16xf32>
    %361 = arith.mulf %360, %359 : vector<2x16x16xf32>
    %362 = arith.addf %356, %361 : vector<2x16x16xf32>
    %c20 = arith.constant 20 : index
    %363 = memref.load %arg1[%c20] : memref<98xf32, #tpu.memory_space<smem>>
    %c0_389 = arith.constant 0 : index
    %c6_390 = arith.constant 6 : index
    %c0_391 = arith.constant 0 : index
    %c2_392 = arith.constant 2 : index
    %c0_393 = arith.constant 0 : index
    %364 = vector.load %arg5[%c0_389, %c6_390, %c0_391, %c2_392, %c0_393] : memref<2x7x2x22x16xf32, #tpu.memory_space<vmem>>, vector<1x1x2x16x16xf32>
    %365 = vector.shape_cast %364 : vector<1x1x2x16x16xf32> to vector<2x16x16xf32>
    %366 = vector.broadcast %363 : f32 to vector<2x16x16xf32>
    %367 = arith.mulf %366, %365 : vector<2x16x16xf32>
    %368 = arith.addf %362, %367 : vector<2x16x16xf32>
    %c27 = arith.constant 27 : index
    %369 = memref.load %arg1[%c27] : memref<98xf32, #tpu.memory_space<smem>>
    %c0_394 = arith.constant 0 : index
    %c6_395 = arith.constant 6 : index
    %c0_396 = arith.constant 0 : index
    %c3_397 = arith.constant 3 : index
    %c0_398 = arith.constant 0 : index
    %370 = vector.load %arg5[%c0_394, %c6_395, %c0_396, %c3_397, %c0_398] : memref<2x7x2x22x16xf32, #tpu.memory_space<vmem>>, vector<1x1x2x16x16xf32>
    %371 = vector.shape_cast %370 : vector<1x1x2x16x16xf32> to vector<2x16x16xf32>
    %372 = vector.broadcast %369 : f32 to vector<2x16x16xf32>
    %373 = arith.mulf %372, %371 : vector<2x16x16xf32>
    %374 = arith.addf %368, %373 : vector<2x16x16xf32>
    %c34 = arith.constant 34 : index
    %375 = memref.load %arg1[%c34] : memref<98xf32, #tpu.memory_space<smem>>
    %c0_399 = arith.constant 0 : index
    %c6_400 = arith.constant 6 : index
    %c0_401 = arith.constant 0 : index
    %c4_402 = arith.constant 4 : index
    %c0_403 = arith.constant 0 : index
    %376 = vector.load %arg5[%c0_399, %c6_400, %c0_401, %c4_402, %c0_403] : memref<2x7x2x22x16xf32, #tpu.memory_space<vmem>>, vector<1x1x2x16x16xf32>
    %377 = vector.shape_cast %376 : vector<1x1x2x16x16xf32> to vector<2x16x16xf32>
    %378 = vector.broadcast %375 : f32 to vector<2x16x16xf32>
    %379 = arith.mulf %378, %377 : vector<2x16x16xf32>
    %380 = arith.addf %374, %379 : vector<2x16x16xf32>
    %c41 = arith.constant 41 : index
    %381 = memref.load %arg1[%c41] : memref<98xf32, #tpu.memory_space<smem>>
    %c0_404 = arith.constant 0 : index
    %c6_405 = arith.constant 6 : index
    %c0_406 = arith.constant 0 : index
    %c5_407 = arith.constant 5 : index
    %c0_408 = arith.constant 0 : index
    %382 = vector.load %arg5[%c0_404, %c6_405, %c0_406, %c5_407, %c0_408] : memref<2x7x2x22x16xf32, #tpu.memory_space<vmem>>, vector<1x1x2x16x16xf32>
    %383 = vector.shape_cast %382 : vector<1x1x2x16x16xf32> to vector<2x16x16xf32>
    %384 = vector.broadcast %381 : f32 to vector<2x16x16xf32>
    %385 = arith.mulf %384, %383 : vector<2x16x16xf32>
    %386 = arith.addf %380, %385 : vector<2x16x16xf32>
    %c48 = arith.constant 48 : index
    %387 = memref.load %arg1[%c48] : memref<98xf32, #tpu.memory_space<smem>>
    %c0_409 = arith.constant 0 : index
    %c6_410 = arith.constant 6 : index
    %c0_411 = arith.constant 0 : index
    %c6_412 = arith.constant 6 : index
    %c0_413 = arith.constant 0 : index
    %388 = vector.load %arg5[%c0_409, %c6_410, %c0_411, %c6_412, %c0_413] : memref<2x7x2x22x16xf32, #tpu.memory_space<vmem>>, vector<1x1x2x16x16xf32>
    %389 = vector.shape_cast %388 : vector<1x1x2x16x16xf32> to vector<2x16x16xf32>
    %390 = vector.broadcast %387 : f32 to vector<2x16x16xf32>
    %391 = arith.mulf %390, %389 : vector<2x16x16xf32>
    %392 = arith.addf %386, %391 : vector<2x16x16xf32>
    %c49 = arith.constant 49 : index
    %393 = memref.load %arg1[%c49] : memref<98xf32, #tpu.memory_space<smem>>
    %c1_414 = arith.constant 1 : index
    %c0_415 = arith.constant 0 : index
    %c0_416 = arith.constant 0 : index
    %c0_417 = arith.constant 0 : index
    %c0_418 = arith.constant 0 : index
    %394 = vector.load %arg5[%c1_414, %c0_415, %c0_416, %c0_417, %c0_418] : memref<2x7x2x22x16xf32, #tpu.memory_space<vmem>>, vector<1x1x2x16x16xf32>
    %395 = vector.shape_cast %394 : vector<1x1x2x16x16xf32> to vector<2x16x16xf32>
    %396 = vector.broadcast %393 : f32 to vector<2x16x16xf32>
    %397 = arith.mulf %396, %395 : vector<2x16x16xf32>
    %398 = arith.addf %392, %397 : vector<2x16x16xf32>
    %c56 = arith.constant 56 : index
    %399 = memref.load %arg1[%c56] : memref<98xf32, #tpu.memory_space<smem>>
    %c1_419 = arith.constant 1 : index
    %c0_420 = arith.constant 0 : index
    %c0_421 = arith.constant 0 : index
    %c1_422 = arith.constant 1 : index
    %c0_423 = arith.constant 0 : index
    %400 = vector.load %arg5[%c1_419, %c0_420, %c0_421, %c1_422, %c0_423] : memref<2x7x2x22x16xf32, #tpu.memory_space<vmem>>, vector<1x1x2x16x16xf32>
    %401 = vector.shape_cast %400 : vector<1x1x2x16x16xf32> to vector<2x16x16xf32>
    %402 = vector.broadcast %399 : f32 to vector<2x16x16xf32>
    %403 = arith.mulf %402, %401 : vector<2x16x16xf32>
    %404 = arith.addf %398, %403 : vector<2x16x16xf32>
    %c63 = arith.constant 63 : index
    %405 = memref.load %arg1[%c63] : memref<98xf32, #tpu.memory_space<smem>>
    %c1_424 = arith.constant 1 : index
    %c0_425 = arith.constant 0 : index
    %c0_426 = arith.constant 0 : index
    %c2_427 = arith.constant 2 : index
    %c0_428 = arith.constant 0 : index
    %406 = vector.load %arg5[%c1_424, %c0_425, %c0_426, %c2_427, %c0_428] : memref<2x7x2x22x16xf32, #tpu.memory_space<vmem>>, vector<1x1x2x16x16xf32>
    %407 = vector.shape_cast %406 : vector<1x1x2x16x16xf32> to vector<2x16x16xf32>
    %408 = vector.broadcast %405 : f32 to vector<2x16x16xf32>
    %409 = arith.mulf %408, %407 : vector<2x16x16xf32>
    %410 = arith.addf %404, %409 : vector<2x16x16xf32>
    %c70 = arith.constant 70 : index
    %411 = memref.load %arg1[%c70] : memref<98xf32, #tpu.memory_space<smem>>
    %c1_429 = arith.constant 1 : index
    %c0_430 = arith.constant 0 : index
    %c0_431 = arith.constant 0 : index
    %c3_432 = arith.constant 3 : index
    %c0_433 = arith.constant 0 : index
    %412 = vector.load %arg5[%c1_429, %c0_430, %c0_431, %c3_432, %c0_433] : memref<2x7x2x22x16xf32, #tpu.memory_space<vmem>>, vector<1x1x2x16x16xf32>
    %413 = vector.shape_cast %412 : vector<1x1x2x16x16xf32> to vector<2x16x16xf32>
    %414 = vector.broadcast %411 : f32 to vector<2x16x16xf32>
    %415 = arith.mulf %414, %413 : vector<2x16x16xf32>
    %416 = arith.addf %410, %415 : vector<2x16x16xf32>
    %c77 = arith.constant 77 : index
    %417 = memref.load %arg1[%c77] : memref<98xf32, #tpu.memory_space<smem>>
    %c1_434 = arith.constant 1 : index
    %c0_435 = arith.constant 0 : index
    %c0_436 = arith.constant 0 : index
    %c4_437 = arith.constant 4 : index
    %c0_438 = arith.constant 0 : index
    %418 = vector.load %arg5[%c1_434, %c0_435, %c0_436, %c4_437, %c0_438] : memref<2x7x2x22x16xf32, #tpu.memory_space<vmem>>, vector<1x1x2x16x16xf32>
    %419 = vector.shape_cast %418 : vector<1x1x2x16x16xf32> to vector<2x16x16xf32>
    %420 = vector.broadcast %417 : f32 to vector<2x16x16xf32>
    %421 = arith.mulf %420, %419 : vector<2x16x16xf32>
    %422 = arith.addf %416, %421 : vector<2x16x16xf32>
    %c84 = arith.constant 84 : index
    %423 = memref.load %arg1[%c84] : memref<98xf32, #tpu.memory_space<smem>>
    %c1_439 = arith.constant 1 : index
    %c0_440 = arith.constant 0 : index
    %c0_441 = arith.constant 0 : index
    %c5_442 = arith.constant 5 : index
    %c0_443 = arith.constant 0 : index
    %424 = vector.load %arg5[%c1_439, %c0_440, %c0_441, %c5_442, %c0_443] : memref<2x7x2x22x16xf32, #tpu.memory_space<vmem>>, vector<1x1x2x16x16xf32>
    %425 = vector.shape_cast %424 : vector<1x1x2x16x16xf32> to vector<2x16x16xf32>
    %426 = vector.broadcast %423 : f32 to vector<2x16x16xf32>
    %427 = arith.mulf %426, %425 : vector<2x16x16xf32>
    %428 = arith.addf %422, %427 : vector<2x16x16xf32>
    %c91 = arith.constant 91 : index
    %429 = memref.load %arg1[%c91] : memref<98xf32, #tpu.memory_space<smem>>
    %c1_444 = arith.constant 1 : index
    %c0_445 = arith.constant 0 : index
    %c0_446 = arith.constant 0 : index
    %c6_447 = arith.constant 6 : index
    %c0_448 = arith.constant 0 : index
    %430 = vector.load %arg5[%c1_444, %c0_445, %c0_446, %c6_447, %c0_448] : memref<2x7x2x22x16xf32, #tpu.memory_space<vmem>>, vector<1x1x2x16x16xf32>
    %431 = vector.shape_cast %430 : vector<1x1x2x16x16xf32> to vector<2x16x16xf32>
    %432 = vector.broadcast %429 : f32 to vector<2x16x16xf32>
    %433 = arith.mulf %432, %431 : vector<2x16x16xf32>
    %434 = arith.addf %428, %433 : vector<2x16x16xf32>
    %c50 = arith.constant 50 : index
    %435 = memref.load %arg1[%c50] : memref<98xf32, #tpu.memory_space<smem>>
    %c1_449 = arith.constant 1 : index
    %c1_450 = arith.constant 1 : index
    %c0_451 = arith.constant 0 : index
    %c0_452 = arith.constant 0 : index
    %c0_453 = arith.constant 0 : index
    %436 = vector.load %arg5[%c1_449, %c1_450, %c0_451, %c0_452, %c0_453] : memref<2x7x2x22x16xf32, #tpu.memory_space<vmem>>, vector<1x1x2x16x16xf32>
    %437 = vector.shape_cast %436 : vector<1x1x2x16x16xf32> to vector<2x16x16xf32>
    %438 = vector.broadcast %435 : f32 to vector<2x16x16xf32>
    %439 = arith.mulf %438, %437 : vector<2x16x16xf32>
    %440 = arith.addf %434, %439 : vector<2x16x16xf32>
    %c57 = arith.constant 57 : index
    %441 = memref.load %arg1[%c57] : memref<98xf32, #tpu.memory_space<smem>>
    %c1_454 = arith.constant 1 : index
    %c1_455 = arith.constant 1 : index
    %c0_456 = arith.constant 0 : index
    %c1_457 = arith.constant 1 : index
    %c0_458 = arith.constant 0 : index
    %442 = vector.load %arg5[%c1_454, %c1_455, %c0_456, %c1_457, %c0_458] : memref<2x7x2x22x16xf32, #tpu.memory_space<vmem>>, vector<1x1x2x16x16xf32>
    %443 = vector.shape_cast %442 : vector<1x1x2x16x16xf32> to vector<2x16x16xf32>
    %444 = vector.broadcast %441 : f32 to vector<2x16x16xf32>
    %445 = arith.mulf %444, %443 : vector<2x16x16xf32>
    %446 = arith.addf %440, %445 : vector<2x16x16xf32>
    %c64 = arith.constant 64 : index
    %447 = memref.load %arg1[%c64] : memref<98xf32, #tpu.memory_space<smem>>
    %c1_459 = arith.constant 1 : index
    %c1_460 = arith.constant 1 : index
    %c0_461 = arith.constant 0 : index
    %c2_462 = arith.constant 2 : index
    %c0_463 = arith.constant 0 : index
    %448 = vector.load %arg5[%c1_459, %c1_460, %c0_461, %c2_462, %c0_463] : memref<2x7x2x22x16xf32, #tpu.memory_space<vmem>>, vector<1x1x2x16x16xf32>
    %449 = vector.shape_cast %448 : vector<1x1x2x16x16xf32> to vector<2x16x16xf32>
    %450 = vector.broadcast %447 : f32 to vector<2x16x16xf32>
    %451 = arith.mulf %450, %449 : vector<2x16x16xf32>
    %452 = arith.addf %446, %451 : vector<2x16x16xf32>
    %c71 = arith.constant 71 : index
    %453 = memref.load %arg1[%c71] : memref<98xf32, #tpu.memory_space<smem>>
    %c1_464 = arith.constant 1 : index
    %c1_465 = arith.constant 1 : index
    %c0_466 = arith.constant 0 : index
    %c3_467 = arith.constant 3 : index
    %c0_468 = arith.constant 0 : index
    %454 = vector.load %arg5[%c1_464, %c1_465, %c0_466, %c3_467, %c0_468] : memref<2x7x2x22x16xf32, #tpu.memory_space<vmem>>, vector<1x1x2x16x16xf32>
    %455 = vector.shape_cast %454 : vector<1x1x2x16x16xf32> to vector<2x16x16xf32>
    %456 = vector.broadcast %453 : f32 to vector<2x16x16xf32>
    %457 = arith.mulf %456, %455 : vector<2x16x16xf32>
    %458 = arith.addf %452, %457 : vector<2x16x16xf32>
    %c78 = arith.constant 78 : index
    %459 = memref.load %arg1[%c78] : memref<98xf32, #tpu.memory_space<smem>>
    %c1_469 = arith.constant 1 : index
    %c1_470 = arith.constant 1 : index
    %c0_471 = arith.constant 0 : index
    %c4_472 = arith.constant 4 : index
    %c0_473 = arith.constant 0 : index
    %460 = vector.load %arg5[%c1_469, %c1_470, %c0_471, %c4_472, %c0_473] : memref<2x7x2x22x16xf32, #tpu.memory_space<vmem>>, vector<1x1x2x16x16xf32>
    %461 = vector.shape_cast %460 : vector<1x1x2x16x16xf32> to vector<2x16x16xf32>
    %462 = vector.broadcast %459 : f32 to vector<2x16x16xf32>
    %463 = arith.mulf %462, %461 : vector<2x16x16xf32>
    %464 = arith.addf %458, %463 : vector<2x16x16xf32>
    %c85 = arith.constant 85 : index
    %465 = memref.load %arg1[%c85] : memref<98xf32, #tpu.memory_space<smem>>
    %c1_474 = arith.constant 1 : index
    %c1_475 = arith.constant 1 : index
    %c0_476 = arith.constant 0 : index
    %c5_477 = arith.constant 5 : index
    %c0_478 = arith.constant 0 : index
    %466 = vector.load %arg5[%c1_474, %c1_475, %c0_476, %c5_477, %c0_478] : memref<2x7x2x22x16xf32, #tpu.memory_space<vmem>>, vector<1x1x2x16x16xf32>
    %467 = vector.shape_cast %466 : vector<1x1x2x16x16xf32> to vector<2x16x16xf32>
    %468 = vector.broadcast %465 : f32 to vector<2x16x16xf32>
    %469 = arith.mulf %468, %467 : vector<2x16x16xf32>
    %470 = arith.addf %464, %469 : vector<2x16x16xf32>
    %c92 = arith.constant 92 : index
    %471 = memref.load %arg1[%c92] : memref<98xf32, #tpu.memory_space<smem>>
    %c1_479 = arith.constant 1 : index
    %c1_480 = arith.constant 1 : index
    %c0_481 = arith.constant 0 : index
    %c6_482 = arith.constant 6 : index
    %c0_483 = arith.constant 0 : index
    %472 = vector.load %arg5[%c1_479, %c1_480, %c0_481, %c6_482, %c0_483] : memref<2x7x2x22x16xf32, #tpu.memory_space<vmem>>, vector<1x1x2x16x16xf32>
    %473 = vector.shape_cast %472 : vector<1x1x2x16x16xf32> to vector<2x16x16xf32>
    %474 = vector.broadcast %471 : f32 to vector<2x16x16xf32>
    %475 = arith.mulf %474, %473 : vector<2x16x16xf32>
    %476 = arith.addf %470, %475 : vector<2x16x16xf32>
    %c51 = arith.constant 51 : index
    %477 = memref.load %arg1[%c51] : memref<98xf32, #tpu.memory_space<smem>>
    %c1_484 = arith.constant 1 : index
    %c2_485 = arith.constant 2 : index
    %c0_486 = arith.constant 0 : index
    %c0_487 = arith.constant 0 : index
    %c0_488 = arith.constant 0 : index
    %478 = vector.load %arg5[%c1_484, %c2_485, %c0_486, %c0_487, %c0_488] : memref<2x7x2x22x16xf32, #tpu.memory_space<vmem>>, vector<1x1x2x16x16xf32>
    %479 = vector.shape_cast %478 : vector<1x1x2x16x16xf32> to vector<2x16x16xf32>
    %480 = vector.broadcast %477 : f32 to vector<2x16x16xf32>
    %481 = arith.mulf %480, %479 : vector<2x16x16xf32>
    %482 = arith.addf %476, %481 : vector<2x16x16xf32>
    %c58 = arith.constant 58 : index
    %483 = memref.load %arg1[%c58] : memref<98xf32, #tpu.memory_space<smem>>
    %c1_489 = arith.constant 1 : index
    %c2_490 = arith.constant 2 : index
    %c0_491 = arith.constant 0 : index
    %c1_492 = arith.constant 1 : index
    %c0_493 = arith.constant 0 : index
    %484 = vector.load %arg5[%c1_489, %c2_490, %c0_491, %c1_492, %c0_493] : memref<2x7x2x22x16xf32, #tpu.memory_space<vmem>>, vector<1x1x2x16x16xf32>
    %485 = vector.shape_cast %484 : vector<1x1x2x16x16xf32> to vector<2x16x16xf32>
    %486 = vector.broadcast %483 : f32 to vector<2x16x16xf32>
    %487 = arith.mulf %486, %485 : vector<2x16x16xf32>
    %488 = arith.addf %482, %487 : vector<2x16x16xf32>
    %c65 = arith.constant 65 : index
    %489 = memref.load %arg1[%c65] : memref<98xf32, #tpu.memory_space<smem>>
    %c1_494 = arith.constant 1 : index
    %c2_495 = arith.constant 2 : index
    %c0_496 = arith.constant 0 : index
    %c2_497 = arith.constant 2 : index
    %c0_498 = arith.constant 0 : index
    %490 = vector.load %arg5[%c1_494, %c2_495, %c0_496, %c2_497, %c0_498] : memref<2x7x2x22x16xf32, #tpu.memory_space<vmem>>, vector<1x1x2x16x16xf32>
    %491 = vector.shape_cast %490 : vector<1x1x2x16x16xf32> to vector<2x16x16xf32>
    %492 = vector.broadcast %489 : f32 to vector<2x16x16xf32>
    %493 = arith.mulf %492, %491 : vector<2x16x16xf32>
    %494 = arith.addf %488, %493 : vector<2x16x16xf32>
    %c72 = arith.constant 72 : index
    %495 = memref.load %arg1[%c72] : memref<98xf32, #tpu.memory_space<smem>>
    %c1_499 = arith.constant 1 : index
    %c2_500 = arith.constant 2 : index
    %c0_501 = arith.constant 0 : index
    %c3_502 = arith.constant 3 : index
    %c0_503 = arith.constant 0 : index
    %496 = vector.load %arg5[%c1_499, %c2_500, %c0_501, %c3_502, %c0_503] : memref<2x7x2x22x16xf32, #tpu.memory_space<vmem>>, vector<1x1x2x16x16xf32>
    %497 = vector.shape_cast %496 : vector<1x1x2x16x16xf32> to vector<2x16x16xf32>
    %498 = vector.broadcast %495 : f32 to vector<2x16x16xf32>
    %499 = arith.mulf %498, %497 : vector<2x16x16xf32>
    %500 = arith.addf %494, %499 : vector<2x16x16xf32>
    %c79 = arith.constant 79 : index
    %501 = memref.load %arg1[%c79] : memref<98xf32, #tpu.memory_space<smem>>
    %c1_504 = arith.constant 1 : index
    %c2_505 = arith.constant 2 : index
    %c0_506 = arith.constant 0 : index
    %c4_507 = arith.constant 4 : index
    %c0_508 = arith.constant 0 : index
    %502 = vector.load %arg5[%c1_504, %c2_505, %c0_506, %c4_507, %c0_508] : memref<2x7x2x22x16xf32, #tpu.memory_space<vmem>>, vector<1x1x2x16x16xf32>
    %503 = vector.shape_cast %502 : vector<1x1x2x16x16xf32> to vector<2x16x16xf32>
    %504 = vector.broadcast %501 : f32 to vector<2x16x16xf32>
    %505 = arith.mulf %504, %503 : vector<2x16x16xf32>
    %506 = arith.addf %500, %505 : vector<2x16x16xf32>
    %c86 = arith.constant 86 : index
    %507 = memref.load %arg1[%c86] : memref<98xf32, #tpu.memory_space<smem>>
    %c1_509 = arith.constant 1 : index
    %c2_510 = arith.constant 2 : index
    %c0_511 = arith.constant 0 : index
    %c5_512 = arith.constant 5 : index
    %c0_513 = arith.constant 0 : index
    %508 = vector.load %arg5[%c1_509, %c2_510, %c0_511, %c5_512, %c0_513] : memref<2x7x2x22x16xf32, #tpu.memory_space<vmem>>, vector<1x1x2x16x16xf32>
    %509 = vector.shape_cast %508 : vector<1x1x2x16x16xf32> to vector<2x16x16xf32>
    %510 = vector.broadcast %507 : f32 to vector<2x16x16xf32>
    %511 = arith.mulf %510, %509 : vector<2x16x16xf32>
    %512 = arith.addf %506, %511 : vector<2x16x16xf32>
    %c93 = arith.constant 93 : index
    %513 = memref.load %arg1[%c93] : memref<98xf32, #tpu.memory_space<smem>>
    %c1_514 = arith.constant 1 : index
    %c2_515 = arith.constant 2 : index
    %c0_516 = arith.constant 0 : index
    %c6_517 = arith.constant 6 : index
    %c0_518 = arith.constant 0 : index
    %514 = vector.load %arg5[%c1_514, %c2_515, %c0_516, %c6_517, %c0_518] : memref<2x7x2x22x16xf32, #tpu.memory_space<vmem>>, vector<1x1x2x16x16xf32>
    %515 = vector.shape_cast %514 : vector<1x1x2x16x16xf32> to vector<2x16x16xf32>
    %516 = vector.broadcast %513 : f32 to vector<2x16x16xf32>
    %517 = arith.mulf %516, %515 : vector<2x16x16xf32>
    %518 = arith.addf %512, %517 : vector<2x16x16xf32>
    %c52 = arith.constant 52 : index
    %519 = memref.load %arg1[%c52] : memref<98xf32, #tpu.memory_space<smem>>
    %c1_519 = arith.constant 1 : index
    %c3_520 = arith.constant 3 : index
    %c0_521 = arith.constant 0 : index
    %c0_522 = arith.constant 0 : index
    %c0_523 = arith.constant 0 : index
    %520 = vector.load %arg5[%c1_519, %c3_520, %c0_521, %c0_522, %c0_523] : memref<2x7x2x22x16xf32, #tpu.memory_space<vmem>>, vector<1x1x2x16x16xf32>
    %521 = vector.shape_cast %520 : vector<1x1x2x16x16xf32> to vector<2x16x16xf32>
    %522 = vector.broadcast %519 : f32 to vector<2x16x16xf32>
    %523 = arith.mulf %522, %521 : vector<2x16x16xf32>
    %524 = arith.addf %518, %523 : vector<2x16x16xf32>
    %c59 = arith.constant 59 : index
    %525 = memref.load %arg1[%c59] : memref<98xf32, #tpu.memory_space<smem>>
    %c1_524 = arith.constant 1 : index
    %c3_525 = arith.constant 3 : index
    %c0_526 = arith.constant 0 : index
    %c1_527 = arith.constant 1 : index
    %c0_528 = arith.constant 0 : index
    %526 = vector.load %arg5[%c1_524, %c3_525, %c0_526, %c1_527, %c0_528] : memref<2x7x2x22x16xf32, #tpu.memory_space<vmem>>, vector<1x1x2x16x16xf32>
    %527 = vector.shape_cast %526 : vector<1x1x2x16x16xf32> to vector<2x16x16xf32>
    %528 = vector.broadcast %525 : f32 to vector<2x16x16xf32>
    %529 = arith.mulf %528, %527 : vector<2x16x16xf32>
    %530 = arith.addf %524, %529 : vector<2x16x16xf32>
    %c66 = arith.constant 66 : index
    %531 = memref.load %arg1[%c66] : memref<98xf32, #tpu.memory_space<smem>>
    %c1_529 = arith.constant 1 : index
    %c3_530 = arith.constant 3 : index
    %c0_531 = arith.constant 0 : index
    %c2_532 = arith.constant 2 : index
    %c0_533 = arith.constant 0 : index
    %532 = vector.load %arg5[%c1_529, %c3_530, %c0_531, %c2_532, %c0_533] : memref<2x7x2x22x16xf32, #tpu.memory_space<vmem>>, vector<1x1x2x16x16xf32>
    %533 = vector.shape_cast %532 : vector<1x1x2x16x16xf32> to vector<2x16x16xf32>
    %534 = vector.broadcast %531 : f32 to vector<2x16x16xf32>
    %535 = arith.mulf %534, %533 : vector<2x16x16xf32>
    %536 = arith.addf %530, %535 : vector<2x16x16xf32>
    %c73 = arith.constant 73 : index
    %537 = memref.load %arg1[%c73] : memref<98xf32, #tpu.memory_space<smem>>
    %c1_534 = arith.constant 1 : index
    %c3_535 = arith.constant 3 : index
    %c0_536 = arith.constant 0 : index
    %c3_537 = arith.constant 3 : index
    %c0_538 = arith.constant 0 : index
    %538 = vector.load %arg5[%c1_534, %c3_535, %c0_536, %c3_537, %c0_538] : memref<2x7x2x22x16xf32, #tpu.memory_space<vmem>>, vector<1x1x2x16x16xf32>
    %539 = vector.shape_cast %538 : vector<1x1x2x16x16xf32> to vector<2x16x16xf32>
    %540 = vector.broadcast %537 : f32 to vector<2x16x16xf32>
    %541 = arith.mulf %540, %539 : vector<2x16x16xf32>
    %542 = arith.addf %536, %541 : vector<2x16x16xf32>
    %c80 = arith.constant 80 : index
    %543 = memref.load %arg1[%c80] : memref<98xf32, #tpu.memory_space<smem>>
    %c1_539 = arith.constant 1 : index
    %c3_540 = arith.constant 3 : index
    %c0_541 = arith.constant 0 : index
    %c4_542 = arith.constant 4 : index
    %c0_543 = arith.constant 0 : index
    %544 = vector.load %arg5[%c1_539, %c3_540, %c0_541, %c4_542, %c0_543] : memref<2x7x2x22x16xf32, #tpu.memory_space<vmem>>, vector<1x1x2x16x16xf32>
    %545 = vector.shape_cast %544 : vector<1x1x2x16x16xf32> to vector<2x16x16xf32>
    %546 = vector.broadcast %543 : f32 to vector<2x16x16xf32>
    %547 = arith.mulf %546, %545 : vector<2x16x16xf32>
    %548 = arith.addf %542, %547 : vector<2x16x16xf32>
    %c87 = arith.constant 87 : index
    %549 = memref.load %arg1[%c87] : memref<98xf32, #tpu.memory_space<smem>>
    %c1_544 = arith.constant 1 : index
    %c3_545 = arith.constant 3 : index
    %c0_546 = arith.constant 0 : index
    %c5_547 = arith.constant 5 : index
    %c0_548 = arith.constant 0 : index
    %550 = vector.load %arg5[%c1_544, %c3_545, %c0_546, %c5_547, %c0_548] : memref<2x7x2x22x16xf32, #tpu.memory_space<vmem>>, vector<1x1x2x16x16xf32>
    %551 = vector.shape_cast %550 : vector<1x1x2x16x16xf32> to vector<2x16x16xf32>
    %552 = vector.broadcast %549 : f32 to vector<2x16x16xf32>
    %553 = arith.mulf %552, %551 : vector<2x16x16xf32>
    %554 = arith.addf %548, %553 : vector<2x16x16xf32>
    %c94 = arith.constant 94 : index
    %555 = memref.load %arg1[%c94] : memref<98xf32, #tpu.memory_space<smem>>
    %c1_549 = arith.constant 1 : index
    %c3_550 = arith.constant 3 : index
    %c0_551 = arith.constant 0 : index
    %c6_552 = arith.constant 6 : index
    %c0_553 = arith.constant 0 : index
    %556 = vector.load %arg5[%c1_549, %c3_550, %c0_551, %c6_552, %c0_553] : memref<2x7x2x22x16xf32, #tpu.memory_space<vmem>>, vector<1x1x2x16x16xf32>
    %557 = vector.shape_cast %556 : vector<1x1x2x16x16xf32> to vector<2x16x16xf32>
    %558 = vector.broadcast %555 : f32 to vector<2x16x16xf32>
    %559 = arith.mulf %558, %557 : vector<2x16x16xf32>
    %560 = arith.addf %554, %559 : vector<2x16x16xf32>
    %c53 = arith.constant 53 : index
    %561 = memref.load %arg1[%c53] : memref<98xf32, #tpu.memory_space<smem>>
    %c1_554 = arith.constant 1 : index
    %c4_555 = arith.constant 4 : index
    %c0_556 = arith.constant 0 : index
    %c0_557 = arith.constant 0 : index
    %c0_558 = arith.constant 0 : index
    %562 = vector.load %arg5[%c1_554, %c4_555, %c0_556, %c0_557, %c0_558] : memref<2x7x2x22x16xf32, #tpu.memory_space<vmem>>, vector<1x1x2x16x16xf32>
    %563 = vector.shape_cast %562 : vector<1x1x2x16x16xf32> to vector<2x16x16xf32>
    %564 = vector.broadcast %561 : f32 to vector<2x16x16xf32>
    %565 = arith.mulf %564, %563 : vector<2x16x16xf32>
    %566 = arith.addf %560, %565 : vector<2x16x16xf32>
    %c60 = arith.constant 60 : index
    %567 = memref.load %arg1[%c60] : memref<98xf32, #tpu.memory_space<smem>>
    %c1_559 = arith.constant 1 : index
    %c4_560 = arith.constant 4 : index
    %c0_561 = arith.constant 0 : index
    %c1_562 = arith.constant 1 : index
    %c0_563 = arith.constant 0 : index
    %568 = vector.load %arg5[%c1_559, %c4_560, %c0_561, %c1_562, %c0_563] : memref<2x7x2x22x16xf32, #tpu.memory_space<vmem>>, vector<1x1x2x16x16xf32>
    %569 = vector.shape_cast %568 : vector<1x1x2x16x16xf32> to vector<2x16x16xf32>
    %570 = vector.broadcast %567 : f32 to vector<2x16x16xf32>
    %571 = arith.mulf %570, %569 : vector<2x16x16xf32>
    %572 = arith.addf %566, %571 : vector<2x16x16xf32>
    %c67 = arith.constant 67 : index
    %573 = memref.load %arg1[%c67] : memref<98xf32, #tpu.memory_space<smem>>
    %c1_564 = arith.constant 1 : index
    %c4_565 = arith.constant 4 : index
    %c0_566 = arith.constant 0 : index
    %c2_567 = arith.constant 2 : index
    %c0_568 = arith.constant 0 : index
    %574 = vector.load %arg5[%c1_564, %c4_565, %c0_566, %c2_567, %c0_568] : memref<2x7x2x22x16xf32, #tpu.memory_space<vmem>>, vector<1x1x2x16x16xf32>
    %575 = vector.shape_cast %574 : vector<1x1x2x16x16xf32> to vector<2x16x16xf32>
    %576 = vector.broadcast %573 : f32 to vector<2x16x16xf32>
    %577 = arith.mulf %576, %575 : vector<2x16x16xf32>
    %578 = arith.addf %572, %577 : vector<2x16x16xf32>
    %c74 = arith.constant 74 : index
    %579 = memref.load %arg1[%c74] : memref<98xf32, #tpu.memory_space<smem>>
    %c1_569 = arith.constant 1 : index
    %c4_570 = arith.constant 4 : index
    %c0_571 = arith.constant 0 : index
    %c3_572 = arith.constant 3 : index
    %c0_573 = arith.constant 0 : index
    %580 = vector.load %arg5[%c1_569, %c4_570, %c0_571, %c3_572, %c0_573] : memref<2x7x2x22x16xf32, #tpu.memory_space<vmem>>, vector<1x1x2x16x16xf32>
    %581 = vector.shape_cast %580 : vector<1x1x2x16x16xf32> to vector<2x16x16xf32>
    %582 = vector.broadcast %579 : f32 to vector<2x16x16xf32>
    %583 = arith.mulf %582, %581 : vector<2x16x16xf32>
    %584 = arith.addf %578, %583 : vector<2x16x16xf32>
    %c81 = arith.constant 81 : index
    %585 = memref.load %arg1[%c81] : memref<98xf32, #tpu.memory_space<smem>>
    %c1_574 = arith.constant 1 : index
    %c4_575 = arith.constant 4 : index
    %c0_576 = arith.constant 0 : index
    %c4_577 = arith.constant 4 : index
    %c0_578 = arith.constant 0 : index
    %586 = vector.load %arg5[%c1_574, %c4_575, %c0_576, %c4_577, %c0_578] : memref<2x7x2x22x16xf32, #tpu.memory_space<vmem>>, vector<1x1x2x16x16xf32>
    %587 = vector.shape_cast %586 : vector<1x1x2x16x16xf32> to vector<2x16x16xf32>
    %588 = vector.broadcast %585 : f32 to vector<2x16x16xf32>
    %589 = arith.mulf %588, %587 : vector<2x16x16xf32>
    %590 = arith.addf %584, %589 : vector<2x16x16xf32>
    %c88 = arith.constant 88 : index
    %591 = memref.load %arg1[%c88] : memref<98xf32, #tpu.memory_space<smem>>
    %c1_579 = arith.constant 1 : index
    %c4_580 = arith.constant 4 : index
    %c0_581 = arith.constant 0 : index
    %c5_582 = arith.constant 5 : index
    %c0_583 = arith.constant 0 : index
    %592 = vector.load %arg5[%c1_579, %c4_580, %c0_581, %c5_582, %c0_583] : memref<2x7x2x22x16xf32, #tpu.memory_space<vmem>>, vector<1x1x2x16x16xf32>
    %593 = vector.shape_cast %592 : vector<1x1x2x16x16xf32> to vector<2x16x16xf32>
    %594 = vector.broadcast %591 : f32 to vector<2x16x16xf32>
    %595 = arith.mulf %594, %593 : vector<2x16x16xf32>
    %596 = arith.addf %590, %595 : vector<2x16x16xf32>
    %c95 = arith.constant 95 : index
    %597 = memref.load %arg1[%c95] : memref<98xf32, #tpu.memory_space<smem>>
    %c1_584 = arith.constant 1 : index
    %c4_585 = arith.constant 4 : index
    %c0_586 = arith.constant 0 : index
    %c6_587 = arith.constant 6 : index
    %c0_588 = arith.constant 0 : index
    %598 = vector.load %arg5[%c1_584, %c4_585, %c0_586, %c6_587, %c0_588] : memref<2x7x2x22x16xf32, #tpu.memory_space<vmem>>, vector<1x1x2x16x16xf32>
    %599 = vector.shape_cast %598 : vector<1x1x2x16x16xf32> to vector<2x16x16xf32>
    %600 = vector.broadcast %597 : f32 to vector<2x16x16xf32>
    %601 = arith.mulf %600, %599 : vector<2x16x16xf32>
    %602 = arith.addf %596, %601 : vector<2x16x16xf32>
    %c54 = arith.constant 54 : index
    %603 = memref.load %arg1[%c54] : memref<98xf32, #tpu.memory_space<smem>>
    %c1_589 = arith.constant 1 : index
    %c5_590 = arith.constant 5 : index
    %c0_591 = arith.constant 0 : index
    %c0_592 = arith.constant 0 : index
    %c0_593 = arith.constant 0 : index
    %604 = vector.load %arg5[%c1_589, %c5_590, %c0_591, %c0_592, %c0_593] : memref<2x7x2x22x16xf32, #tpu.memory_space<vmem>>, vector<1x1x2x16x16xf32>
    %605 = vector.shape_cast %604 : vector<1x1x2x16x16xf32> to vector<2x16x16xf32>
    %606 = vector.broadcast %603 : f32 to vector<2x16x16xf32>
    %607 = arith.mulf %606, %605 : vector<2x16x16xf32>
    %608 = arith.addf %602, %607 : vector<2x16x16xf32>
    %c61 = arith.constant 61 : index
    %609 = memref.load %arg1[%c61] : memref<98xf32, #tpu.memory_space<smem>>
    %c1_594 = arith.constant 1 : index
    %c5_595 = arith.constant 5 : index
    %c0_596 = arith.constant 0 : index
    %c1_597 = arith.constant 1 : index
    %c0_598 = arith.constant 0 : index
    %610 = vector.load %arg5[%c1_594, %c5_595, %c0_596, %c1_597, %c0_598] : memref<2x7x2x22x16xf32, #tpu.memory_space<vmem>>, vector<1x1x2x16x16xf32>
    %611 = vector.shape_cast %610 : vector<1x1x2x16x16xf32> to vector<2x16x16xf32>
    %612 = vector.broadcast %609 : f32 to vector<2x16x16xf32>
    %613 = arith.mulf %612, %611 : vector<2x16x16xf32>
    %614 = arith.addf %608, %613 : vector<2x16x16xf32>
    %c68 = arith.constant 68 : index
    %615 = memref.load %arg1[%c68] : memref<98xf32, #tpu.memory_space<smem>>
    %c1_599 = arith.constant 1 : index
    %c5_600 = arith.constant 5 : index
    %c0_601 = arith.constant 0 : index
    %c2_602 = arith.constant 2 : index
    %c0_603 = arith.constant 0 : index
    %616 = vector.load %arg5[%c1_599, %c5_600, %c0_601, %c2_602, %c0_603] : memref<2x7x2x22x16xf32, #tpu.memory_space<vmem>>, vector<1x1x2x16x16xf32>
    %617 = vector.shape_cast %616 : vector<1x1x2x16x16xf32> to vector<2x16x16xf32>
    %618 = vector.broadcast %615 : f32 to vector<2x16x16xf32>
    %619 = arith.mulf %618, %617 : vector<2x16x16xf32>
    %620 = arith.addf %614, %619 : vector<2x16x16xf32>
    %c75 = arith.constant 75 : index
    %621 = memref.load %arg1[%c75] : memref<98xf32, #tpu.memory_space<smem>>
    %c1_604 = arith.constant 1 : index
    %c5_605 = arith.constant 5 : index
    %c0_606 = arith.constant 0 : index
    %c3_607 = arith.constant 3 : index
    %c0_608 = arith.constant 0 : index
    %622 = vector.load %arg5[%c1_604, %c5_605, %c0_606, %c3_607, %c0_608] : memref<2x7x2x22x16xf32, #tpu.memory_space<vmem>>, vector<1x1x2x16x16xf32>
    %623 = vector.shape_cast %622 : vector<1x1x2x16x16xf32> to vector<2x16x16xf32>
    %624 = vector.broadcast %621 : f32 to vector<2x16x16xf32>
    %625 = arith.mulf %624, %623 : vector<2x16x16xf32>
    %626 = arith.addf %620, %625 : vector<2x16x16xf32>
    %c82 = arith.constant 82 : index
    %627 = memref.load %arg1[%c82] : memref<98xf32, #tpu.memory_space<smem>>
    %c1_609 = arith.constant 1 : index
    %c5_610 = arith.constant 5 : index
    %c0_611 = arith.constant 0 : index
    %c4_612 = arith.constant 4 : index
    %c0_613 = arith.constant 0 : index
    %628 = vector.load %arg5[%c1_609, %c5_610, %c0_611, %c4_612, %c0_613] : memref<2x7x2x22x16xf32, #tpu.memory_space<vmem>>, vector<1x1x2x16x16xf32>
    %629 = vector.shape_cast %628 : vector<1x1x2x16x16xf32> to vector<2x16x16xf32>
    %630 = vector.broadcast %627 : f32 to vector<2x16x16xf32>
    %631 = arith.mulf %630, %629 : vector<2x16x16xf32>
    %632 = arith.addf %626, %631 : vector<2x16x16xf32>
    %c89 = arith.constant 89 : index
    %633 = memref.load %arg1[%c89] : memref<98xf32, #tpu.memory_space<smem>>
    %c1_614 = arith.constant 1 : index
    %c5_615 = arith.constant 5 : index
    %c0_616 = arith.constant 0 : index
    %c5_617 = arith.constant 5 : index
    %c0_618 = arith.constant 0 : index
    %634 = vector.load %arg5[%c1_614, %c5_615, %c0_616, %c5_617, %c0_618] : memref<2x7x2x22x16xf32, #tpu.memory_space<vmem>>, vector<1x1x2x16x16xf32>
    %635 = vector.shape_cast %634 : vector<1x1x2x16x16xf32> to vector<2x16x16xf32>
    %636 = vector.broadcast %633 : f32 to vector<2x16x16xf32>
    %637 = arith.mulf %636, %635 : vector<2x16x16xf32>
    %638 = arith.addf %632, %637 : vector<2x16x16xf32>
    %c96 = arith.constant 96 : index
    %639 = memref.load %arg1[%c96] : memref<98xf32, #tpu.memory_space<smem>>
    %c1_619 = arith.constant 1 : index
    %c5_620 = arith.constant 5 : index
    %c0_621 = arith.constant 0 : index
    %c6_622 = arith.constant 6 : index
    %c0_623 = arith.constant 0 : index
    %640 = vector.load %arg5[%c1_619, %c5_620, %c0_621, %c6_622, %c0_623] : memref<2x7x2x22x16xf32, #tpu.memory_space<vmem>>, vector<1x1x2x16x16xf32>
    %641 = vector.shape_cast %640 : vector<1x1x2x16x16xf32> to vector<2x16x16xf32>
    %642 = vector.broadcast %639 : f32 to vector<2x16x16xf32>
    %643 = arith.mulf %642, %641 : vector<2x16x16xf32>
    %644 = arith.addf %638, %643 : vector<2x16x16xf32>
    %c55 = arith.constant 55 : index
    %645 = memref.load %arg1[%c55] : memref<98xf32, #tpu.memory_space<smem>>
    %c1_624 = arith.constant 1 : index
    %c6_625 = arith.constant 6 : index
    %c0_626 = arith.constant 0 : index
    %c0_627 = arith.constant 0 : index
    %c0_628 = arith.constant 0 : index
    %646 = vector.load %arg5[%c1_624, %c6_625, %c0_626, %c0_627, %c0_628] : memref<2x7x2x22x16xf32, #tpu.memory_space<vmem>>, vector<1x1x2x16x16xf32>
    %647 = vector.shape_cast %646 : vector<1x1x2x16x16xf32> to vector<2x16x16xf32>
    %648 = vector.broadcast %645 : f32 to vector<2x16x16xf32>
    %649 = arith.mulf %648, %647 : vector<2x16x16xf32>
    %650 = arith.addf %644, %649 : vector<2x16x16xf32>
    %c62 = arith.constant 62 : index
    %651 = memref.load %arg1[%c62] : memref<98xf32, #tpu.memory_space<smem>>
    %c1_629 = arith.constant 1 : index
    %c6_630 = arith.constant 6 : index
    %c0_631 = arith.constant 0 : index
    %c1_632 = arith.constant 1 : index
    %c0_633 = arith.constant 0 : index
    %652 = vector.load %arg5[%c1_629, %c6_630, %c0_631, %c1_632, %c0_633] : memref<2x7x2x22x16xf32, #tpu.memory_space<vmem>>, vector<1x1x2x16x16xf32>
    %653 = vector.shape_cast %652 : vector<1x1x2x16x16xf32> to vector<2x16x16xf32>
    %654 = vector.broadcast %651 : f32 to vector<2x16x16xf32>
    %655 = arith.mulf %654, %653 : vector<2x16x16xf32>
    %656 = arith.addf %650, %655 : vector<2x16x16xf32>
    %c69 = arith.constant 69 : index
    %657 = memref.load %arg1[%c69] : memref<98xf32, #tpu.memory_space<smem>>
    %c1_634 = arith.constant 1 : index
    %c6_635 = arith.constant 6 : index
    %c0_636 = arith.constant 0 : index
    %c2_637 = arith.constant 2 : index
    %c0_638 = arith.constant 0 : index
    %658 = vector.load %arg5[%c1_634, %c6_635, %c0_636, %c2_637, %c0_638] : memref<2x7x2x22x16xf32, #tpu.memory_space<vmem>>, vector<1x1x2x16x16xf32>
    %659 = vector.shape_cast %658 : vector<1x1x2x16x16xf32> to vector<2x16x16xf32>
    %660 = vector.broadcast %657 : f32 to vector<2x16x16xf32>
    %661 = arith.mulf %660, %659 : vector<2x16x16xf32>
    %662 = arith.addf %656, %661 : vector<2x16x16xf32>
    %c76 = arith.constant 76 : index
    %663 = memref.load %arg1[%c76] : memref<98xf32, #tpu.memory_space<smem>>
    %c1_639 = arith.constant 1 : index
    %c6_640 = arith.constant 6 : index
    %c0_641 = arith.constant 0 : index
    %c3_642 = arith.constant 3 : index
    %c0_643 = arith.constant 0 : index
    %664 = vector.load %arg5[%c1_639, %c6_640, %c0_641, %c3_642, %c0_643] : memref<2x7x2x22x16xf32, #tpu.memory_space<vmem>>, vector<1x1x2x16x16xf32>
    %665 = vector.shape_cast %664 : vector<1x1x2x16x16xf32> to vector<2x16x16xf32>
    %666 = vector.broadcast %663 : f32 to vector<2x16x16xf32>
    %667 = arith.mulf %666, %665 : vector<2x16x16xf32>
    %668 = arith.addf %662, %667 : vector<2x16x16xf32>
    %c83 = arith.constant 83 : index
    %669 = memref.load %arg1[%c83] : memref<98xf32, #tpu.memory_space<smem>>
    %c1_644 = arith.constant 1 : index
    %c6_645 = arith.constant 6 : index
    %c0_646 = arith.constant 0 : index
    %c4_647 = arith.constant 4 : index
    %c0_648 = arith.constant 0 : index
    %670 = vector.load %arg5[%c1_644, %c6_645, %c0_646, %c4_647, %c0_648] : memref<2x7x2x22x16xf32, #tpu.memory_space<vmem>>, vector<1x1x2x16x16xf32>
    %671 = vector.shape_cast %670 : vector<1x1x2x16x16xf32> to vector<2x16x16xf32>
    %672 = vector.broadcast %669 : f32 to vector<2x16x16xf32>
    %673 = arith.mulf %672, %671 : vector<2x16x16xf32>
    %674 = arith.addf %668, %673 : vector<2x16x16xf32>
    %c90 = arith.constant 90 : index
    %675 = memref.load %arg1[%c90] : memref<98xf32, #tpu.memory_space<smem>>
    %c1_649 = arith.constant 1 : index
    %c6_650 = arith.constant 6 : index
    %c0_651 = arith.constant 0 : index
    %c5_652 = arith.constant 5 : index
    %c0_653 = arith.constant 0 : index
    %676 = vector.load %arg5[%c1_649, %c6_650, %c0_651, %c5_652, %c0_653] : memref<2x7x2x22x16xf32, #tpu.memory_space<vmem>>, vector<1x1x2x16x16xf32>
    %677 = vector.shape_cast %676 : vector<1x1x2x16x16xf32> to vector<2x16x16xf32>
    %678 = vector.broadcast %675 : f32 to vector<2x16x16xf32>
    %679 = arith.mulf %678, %677 : vector<2x16x16xf32>
    %680 = arith.addf %674, %679 : vector<2x16x16xf32>
    %c97 = arith.constant 97 : index
    %681 = memref.load %arg1[%c97] : memref<98xf32, #tpu.memory_space<smem>>
    %c1_654 = arith.constant 1 : index
    %c6_655 = arith.constant 6 : index
    %c0_656 = arith.constant 0 : index
    %c6_657 = arith.constant 6 : index
    %c0_658 = arith.constant 0 : index
    %682 = vector.load %arg5[%c1_654, %c6_655, %c0_656, %c6_657, %c0_658] : memref<2x7x2x22x16xf32, #tpu.memory_space<vmem>>, vector<1x1x2x16x16xf32>
    %683 = vector.shape_cast %682 : vector<1x1x2x16x16xf32> to vector<2x16x16xf32>
    %684 = vector.broadcast %681 : f32 to vector<2x16x16xf32>
    %685 = arith.mulf %684, %683 : vector<2x16x16xf32>
    %686 = arith.addf %680, %685 : vector<2x16x16xf32>
    %687 = arith.negf %686 : vector<2x16x16xf32>
    %688 = math.exp %687 : vector<2x16x16xf32>
    %cst_659 = arith.constant 1.000000e+00 : f32
    %689 = vector.broadcast %cst_659 : f32 to vector<2x16x16xf32>
    %690 = arith.addf %689, %688 : vector<2x16x16xf32>
    %691 = arith.divf %689, %690 : vector<2x16x16xf32>
    %692 = vector.shape_cast %691 : vector<2x16x16xf32> to vector<2x1x16x16xf32>
    %c0_660 = arith.constant 0 : index
    %c0_661 = arith.constant 0 : index
    %c0_662 = arith.constant 0 : index
    %c0_663 = arith.constant 0 : index
    %693 = vector.load %arg3[%c0_660, %c0_661, %c0_662, %c0_663] : memref<2x1x16x16xf32, #tpu.memory_space<vmem>>, vector<2x1x16x16xf32>
    tpu.vector_store %arg3[%c0_660, %c0_661, %c0_662, %c0_663], %692 {strides = array<i32>} : memref<2x1x16x16xf32, #tpu.memory_space<vmem>>, vector<2x1x16x16xf32>,
    return
  }
  func.func @transform_0(%arg0: i32, %arg1: memref<98xf32, #tpu.memory_space<smem>>) -> (i32, i32, i32, i32) {
    %c0_i32 = arith.constant 0 : i32
    %c0_i32_0 = arith.constant 0 : i32
    %c0_i32_1 = arith.constant 0 : i32
    %c0_i32_2 = arith.constant 0 : i32
    return %arg0, %c0_i32, %c0_i32_0, %c0_i32_1 : i32, i32, i32, i32
  }
  func.func @transform_1(%arg0: i32, %arg1: memref<98xf32, #tpu.memory_space<smem>>) -> (i32, i32, i32, i32) {
    %c0_i32 = arith.constant 0 : i32
    %c0_i32_0 = arith.constant 0 : i32
    %c0_i32_1 = arith.constant 0 : i32
    %c0_i32_2 = arith.constant 0 : i32
    return %arg0, %c0_i32, %c0_i32_0, %c0_i32_1 : i32, i32, i32, i32
  }
}

</mosaic_0001>

<llo_original>
// kernel: tpu_custom_call.1
$region0: #{tpu_custom_call.1}
  #allocation0 [shape = 'u32[]', space=smem, size = 0x4, offset = 0x4, fixed_abs, tag = 'smem constant byte address 0x4 - core index']
  #allocation1 [shape = 'u32[72,128]{1,0:T(1,128)}', space=vmem, size = 0x9000, scoped, tag = 'internal scratch']
  #allocation2 [shape = 'f32[2,2,22,22]{3,2,1,0:T(8,128)}', space=vmem, size = 0xc000, scoped, tag = 'scratch operand']
  #allocation3 [shape = 'f32[2,7,2,22,16]{4,3,2,1,0:T(8,128)}', space=vmem, size = 0x54000, scoped, tag = 'scratch operand']
  #allocation4 [shape = 's32[1]{0}', space=sflag, size = 0x4, scoped, tag = 'scoped memory for tpu_custom_call.1']
  #allocation5 [shape = 'u8[512]{0}', space=smem, size = 0x200, scoped, tag = 'prefetched SMEM operand 0']
  %s0 = inlined_call_operand.hbm [shape: f32[98], index: 0, kind: input, shape index: {}]
  %s1 = inlined_call_operand.hbm [shape: f32[4,4,16,16], index: 1, kind: input, shape index: {}]
  %s2 = inlined_call_operand.hbm [shape: f32[4,1,16,16], index: 2, kind: output, shape index: {}]
  %s3 = sld [smem:[#allocation0]]
  $region41: #{tpu_custom_call.1} parent=0
    _
  %s5 = ssub.s32 1, %s3
  %s6 = scalar_select 0, %s5, %s3
  %s8 = sshll.u32 %s0, 4
  %s9 = int_to_ptr.hbm [resolvable:$true] %s8
  %11 = dma.hbm_to_smem %s9, 16, [#allocation5], [#allocation4]
  %13 = dma.done [#allocation4], 16
  %14 = sfence
  $region1: #{tpu_custom_call.1} parent=0
    #allocation6 [shape = 'u8[131072]{0}', space=vmem, size = 0x20000, scoped, tag = 'input window, operand 1']
    #allocation7 [shape = 's32[2]{0}', space=sflag, size = 0x8, scoped, tag = 'scoped memory for tpu_custom_call.1']
    #allocation8 [shape = 's32[2]{0}', space=sflag, size = 0x8, scoped, tag = 'scoped memory for tpu_custom_call.1']
    #allocation9 [shape = 'u8[32768]{0}', space=vmem, size = 0x8000, scoped, tag = 'output window, operand 0']
    %15 = vsyncpa [#allocation7], 0
    %s16 = scalar_lea.sflag [#allocation7], 1
    %17 = vsyncpa %s16, 0
    %18 = vsyncpa [#allocation8], 0
    %s19 = scalar_lea.sflag [#allocation8], 1
    %20 = vsyncpa %s19, 0
    loop: start=0, step=1, limit=4
    $region2: #{tpu_custom_call.1} parent=1 // loop_pre_header
      _
    $region3: #{tpu_custom_call.1} parent=1 // loop_header
      %s22 = sphi 0, %s26
      %p23 = scmp.ge.s32.totalorder %s22, 4
      %s32 = sphi 0, %s34
      %s35 = sphi 0, %s32
      %s36 = sphi 0, %s35
      %s52 = sphi 0, %s36
      %s58 = sphi 0, %s60
      %s61 = sphi 0, %s58
      %s62 = sphi 0, %s61
      %s78 = sphi 0, %s62
    $region4: #{tpu_custom_call.1} parent=1 // loop_header_branch
      %25 = sbr.rel (%p23) target = $region8
    $region5: #{tpu_custom_call.1} parent=1 // loop_body
      %s27 = ssub.s32 %s22, 1
      %s28 = ssub.s32 %s22, 2
      %s29 = sadd.s32 %s22, 1
      %s30 = ssub.s32 %s22, %s29
      %p31 = scmp.eq.s32.totalorder %s30, 0
      %s33 = sadd.s32 %s32, 1
      %s34 = scalar_select %p31, %s32, %s33
      %p37 = pneg %p31
      %p38 = scmp.eq.s32.totalorder %s22, 1
      %p39 = por %p37, %p38
      %p40 = scmp.ne.s32.totalorder %s32, %s35
      %p41 = scmp.eq.s32.totalorder %s22, 0
      %p42 = por %p40, %p41
      %p43 = scmp.ne.s32.totalorder %s32, %s35
      %p44 = scmp.eq.s32.totalorder %s27, 1
      %p45 = por %p43, %p44
      %p46 = scmp.ne.s32.totalorder %s35, %s36
      %p47 = scmp.eq.s32.totalorder %s27, 0
      %p48 = por %p46, %p47
      %p49 = scmp.ne.s32.totalorder %s35, %s36
      %p50 = scmp.eq.s32.totalorder %s28, 1
      %p51 = por %p49, %p50
      %p53 = scmp.ne.s32.totalorder %s36, %s52
      %p54 = scmp.eq.s32.totalorder %s28, 0
      %p55 = por %p53, %p54
      %s56 = ssub.s32 %s22, %s29
      %p57 = scmp.eq.s32.totalorder %s56, 0
      %s59 = sadd.s32 %s58, 1
      %s60 = scalar_select %p57, %s58, %s59
      %p63 = pneg %p57
      %p64 = scmp.eq.s32.totalorder %s22, 1
      %p65 = por %p63, %p64
      %p66 = scmp.ne.s32.totalorder %s58, %s61
      %p67 = scmp.eq.s32.totalorder %s22, 0
      %p68 = por %p66, %p67
      %p69 = scmp.ne.s32.totalorder %s58, %s61
      %p70 = scmp.eq.s32.totalorder %s27, 1
      %p71 = por %p69, %p70
      %p72 = scmp.ne.s32.totalorder %s61, %s62
      %p73 = scmp.eq.s32.totalorder %s27, 0
      %p74 = por %p72, %p73
      %p75 = scmp.ne.s32.totalorder %s61, %s62
      %p76 = scmp.eq.s32.totalorder %s28, 1
      %p77 = por %p75, %p76
      %p79 = scmp.ne.s32.totalorder %s62, %s78
      %p80 = scmp.eq.s32.totalorder %s28, 0
      %p81 = por %p79, %p80
      %p82 = scmp.le.s32.totalorder 1, %s22
      %p83 = scmp.lt.s32.totalorder %s22, 3
      %p84 = pnand %p82, %p83
      %p85 = pneg %p84
      // Predicated region
      $region9: #{tpu_custom_call.1} parent=5 // pred_check
        _
      $region10: #{tpu_custom_call.1} parent=5 // pred_check_branch
        %87 = sbr.rel (%p84) target = $region12
      $region11: #{tpu_custom_call.1} parent=5 // pred_region
        %s88 = ssub.s32 %s22, 1
      $region12: #{tpu_custom_call.1} parent=5 // pred_fallthru
        _
      %p89 = scmp.lt.s32.totalorder %s22, 2
      // Predicated region
      $region13: #{tpu_custom_call.1} parent=5 // pred_check
        %p90 = pneg %p89
      $region14: #{tpu_custom_call.1} parent=5 // pred_check_branch
        %92 = sbr.rel (%p90) target = $region16
      $region15: #{tpu_custom_call.1} parent=5 // pred_region
        // Predicated region
        $region17: #{tpu_custom_call.1} parent=15 // pred_check
          %p93 = pneg %p42
        $region18: #{tpu_custom_call.1} parent=15 // pred_check_branch
          %95 = sbr.rel (%p93) target = $region20
        $region19: #{tpu_custom_call.1} parent=15 // pred_region
          %s96 = sand.u32 %s32, 1
          %s97 = scalar_lea.sflag [#allocation7], %s96
          %s98 = sand.u32 %s32, 1
          %s99 = smul.addr %s98, 128
          %s100 = scalar_lea.vmem [#allocation6], %s99
          %s101 = smul.u32 2, %s22
          %103 = vsyncadd %s97, 0
          %s104 = smul.addr %s101, 8
          %s105 = smul.addr %s104, 8
          %s106 = scalar_lea.hbm %s1, %s105
          %s107 = sshll.u32 %s106, 4
          %s108 = int_to_ptr.hbm [resolvable:$true] %s107
          %s109 = sshll.u32 %s100, 4
          %s110 = int_to_ptr.vmem [resolvable:$true] %s109
          %115 = dma.hbm_to_vmem [thread:$0]  %s108, 2048, %s110, %s97, 128, 128, 8
        $region20: #{tpu_custom_call.1} parent=15 // pred_fallthru
          _
      $region16: #{tpu_custom_call.1} parent=5 // pred_fallthru
        _
      %p116 = scmp.le.s32.totalorder 1, %s22
      %p117 = scmp.lt.s32.totalorder %s22, 3
      %p118 = pnand %p116, %p117
      %p119 = pneg %p118
      // Predicated region
      $region21: #{tpu_custom_call.1} parent=5 // pred_check
        _
      $region22: #{tpu_custom_call.1} parent=5 // pred_check_branch
        %121 = sbr.rel (%p118) target = $region24
      $region23: #{tpu_custom_call.1} parent=5 // pred_region
        %s122 = ssub.s32 %s22, 1
        %s123 = sand.u32 %s35, 1
        %s124 = scalar_lea.sflag [#allocation7], %s123
        %s125 = sand.u32 %s35, 1
        %s126 = smul.addr %s125, 128
        %s127 = scalar_lea.vmem [#allocation6], %s126
        // Predicated region
        $region25: #{tpu_custom_call.1} parent=23 // pred_check
          %p128 = pneg %p48
        $region26: #{tpu_custom_call.1} parent=23 // pred_check_branch
          %130 = sbr.rel (%p128) target = $region28
        $region27: #{tpu_custom_call.1} parent=23 // pred_region
          %132 = dma.done %s124, 2048
        $region28: #{tpu_custom_call.1} parent=23 // pred_fallthru
          _
        %s133 = sand.u32 %s35, 1
        %s134 = scalar_lea.sflag [#allocation7], %s133
        %s135 = sand.u32 %s35, 1
        %s136 = smul.addr %s135, 128
        %s137 = scalar_lea.vmem [#allocation6], %s136
        %p138 = pneg %p48
        %p139 = pneg %p45
        %p140 = pneg %p74
        %p141 = pneg %p71
        %s142 = sand.u32 %s61, 1
        %s143 = scalar_lea.sflag [#allocation8], %s142
        %s144 = sand.u32 %s61, 1
        %s145 = smul.addr %s144, 32
        %s146 = scalar_lea.vmem [#allocation9], %s145
        %s147 = smul.u32 2, %s27
        %s148 = smul.u32 2, %s27
        %v149 = vld [vmem:[%s127] sm:$0xff]
        %v150 = vld [vmem:[%s127 + $0x8] sm:$0xff]
        %v151 = vld [vmem:[%s127 + $0x40] sm:$0xff]
        %v152 = vld [vmem:[%s127 + $0x48] sm:$0xff]
        %s153 = scalar_lea.vmem %s127, 16 [#allocation6]
        %v154 = vld [vmem:[%s153] sm:$0xff]
        %v155 = vld [vmem:[%s153 + $0x8] sm:$0xff]
        %v156 = vld [vmem:[%s153 + $0x40] sm:$0xff]
        %v157 = vld [vmem:[%s153 + $0x48] sm:$0xff]
        %v158 = vadd.f32 %v149, %v154
        %v159 = vadd.f32 %v150, %v155
        %v160 = vadd.f32 %v151, %v156
        %v161 = vadd.f32 %v152, %v157
        %v162 = vmax.f32 %v149, %v154
        %v163 = vmax.f32 %v150, %v155
        %v164 = vmax.f32 %v151, %v156
        %v165 = vmax.f32 %v152, %v157
        %s166 = scalar_lea.vmem %s127, 32 [#allocation6]
        %v167 = vld [vmem:[%s166] sm:$0xff]
        %v168 = vld [vmem:[%s166 + $0x8] sm:$0xff]
        %v169 = vld [vmem:[%s166 + $0x40] sm:$0xff]
        %v170 = vld [vmem:[%s166 + $0x48] sm:$0xff]
        %v171 = vadd.f32 %v158, %v167
        %v172 = vadd.f32 %v159, %v168
        %v173 = vadd.f32 %v160, %v169
        %v174 = vadd.f32 %v161, %v170
        %v175 = vmax.f32 %v162, %v167
        %v176 = vmax.f32 %v163, %v168
        %v177 = vmax.f32 %v164, %v169
        %v178 = vmax.f32 %v165, %v170
        %s179 = scalar_lea.vmem %s127, 48 [#allocation6]
        %v180 = vld [vmem:[%s179] sm:$0xff]
        %v181 = vld [vmem:[%s179 + $0x8] sm:$0xff]
        %v182 = vld [vmem:[%s179 + $0x40] sm:$0xff]
        %v183 = vld [vmem:[%s179 + $0x48] sm:$0xff]
        %v184 = vadd.f32 %v171, %v180
        %v185 = vadd.f32 %v172, %v181
        %v186 = vadd.f32 %v173, %v182
        %v187 = vadd.f32 %v174, %v183
        %v188 = vmax.f32 %v175, %v180
        %v189 = vmax.f32 %v176, %v181
        %v190 = vmax.f32 %v177, %v182
        %v191 = vmax.f32 %v178, %v183
        %v192 = vmul.f32 %v184, 0.25
        %v193 = vmul.f32 %v185, 0.25
        %v194 = vmul.f32 %v186, 0.25
        %v195 = vmul.f32 %v187, 0.25
        %vm196 = vcmask 174080
        %197 = vst.msk [vmem:[#allocation2] sm:$0x7] %vm196, 0.0
        %198 = vst.msk [vmem:[#allocation2 + $0x18] sm:$0x7] %vm196, 0.0
        %199 = vst.msk [vmem:[#allocation2 + $0x30] sm:$0x7] %vm196, 0.0
        %200 = vst.msk [vmem:[#allocation2 + $0x48] sm:$0x7] %vm196, 0.0
        %201 = vst.msk [vmem:[#allocation2 + $0x13] sm:$0x7] %vm196, 0.0
        %202 = vst.msk [vmem:[#allocation2 + $0x2b] sm:$0x7] %vm196, 0.0
        %203 = vst.msk [vmem:[#allocation2 + $0x43] sm:$0x7] %vm196, 0.0
        %204 = vst.msk [vmem:[#allocation2 + $0x5b] sm:$0x7] %vm196, 0.0
        %vm205 = vcmask 23552
        %206 = vst.msk [vmem:[#allocation2] sm:$0xff] %vm205, 0.0
        %207 = vst.msk [vmem:[#allocation2 + $0x8] sm:$0xff] %vm205, 0.0
        %vm208 = vcmask 21504
        %209 = vst.msk [vmem:[#allocation2 + $0x10] sm:$0x3f] %vm208, 0.0
        %210 = vst.msk [vmem:[#allocation2 + $0x18] sm:$0xff] %vm205, 0.0
        %211 = vst.msk [vmem:[#allocation2 + $0x20] sm:$0xff] %vm205, 0.0
        %212 = vst.msk [vmem:[#allocation2 + $0x28] sm:$0x3f] %vm208, 0.0
        %213 = vst.msk [vmem:[#allocation2 + $0x30] sm:$0xff] %vm205, 0.0
        %214 = vst.msk [vmem:[#allocation2 + $0x38] sm:$0xff] %vm205, 0.0
        %215 = vst.msk [vmem:[#allocation2 + $0x40] sm:$0x3f] %vm208, 0.0
        %216 = vst.msk [vmem:[#allocation2 + $0x48] sm:$0xff] %vm205, 0.0
        %217 = vst.msk [vmem:[#allocation2 + $0x50] sm:$0xff] %vm205, 0.0
        %218 = vst.msk [vmem:[#allocation2 + $0x58] sm:$0x3f] %vm208, 0.0
        %vm219 = vcmask 179352
        %220 = vst.msk [vmem:[#allocation2] sm:$0xff] %vm219, 0.0
        %221 = vst.msk [vmem:[#allocation2 + $0x8] sm:$0xff] %vm219, 0.0
        %vm222 = vcmask 177304
        %223 = vst.msk [vmem:[#allocation2 + $0x10] sm:$0x3f] %vm222, 0.0
        %224 = vst.msk [vmem:[#allocation2 + $0x18] sm:$0xff] %vm219, 0.0
        %225 = vst.msk [vmem:[#allocation2 + $0x20] sm:$0xff] %vm219, 0.0
        %226 = vst.msk [vmem:[#allocation2 + $0x28] sm:$0x3f] %vm222, 0.0
        %227 = vst.msk [vmem:[#allocation2 + $0x30] sm:$0xff] %vm219, 0.0
        %228 = vst.msk [vmem:[#allocation2 + $0x38] sm:$0xff] %vm219, 0.0
        %229 = vst.msk [vmem:[#allocation2 + $0x40] sm:$0x3f] %vm222, 0.0
        %230 = vst.msk [vmem:[#allocation2 + $0x48] sm:$0xff] %vm219, 0.0
        %231 = vst.msk [vmem:[#allocation2 + $0x50] sm:$0xff] %vm219, 0.0
        %232 = vst.msk [vmem:[#allocation2 + $0x58] sm:$0x3f] %vm222, 0.0
        %237 = vrot.lane.b32.xlu0 %v192, 3
        %v238 = vpop.permute.xlu0 %237
        %239 = vrot.lane.b32.xlu0 %v193, 3
        %v240 = vpop.permute.xlu0 %239
        %241 = vrot.lane.b32.xlu0 %v194, 3
        %v242 = vpop.permute.xlu0 %241
        %243 = vrot.lane.b32.xlu0 %v195, 3
        %v244 = vpop.permute.xlu0 %243
        %vm249 = vcmask 154648
        %250 = vst.msk [vmem:[#allocation2 + $0x3] sm:$0xff] %vm249, %v238
        %251 = vst.msk [vmem:[#allocation2 + $0xb] sm:$0xff] %vm249, %v240
        %252 = vst.msk [vmem:[#allocation2 + $0x1b] sm:$0xff] %vm249, %v242
        %253 = vst.msk [vmem:[#allocation2 + $0x23] sm:$0xff] %vm249, %v244
        %258 = vrot.lane.b32.xlu0 %v188, 3
        %v259 = vpop.permute.xlu0 %258
        %260 = vrot.lane.b32.xlu0 %v189, 3
        %v261 = vpop.permute.xlu0 %260
        %262 = vrot.lane.b32.xlu0 %v190, 3
        %v263 = vpop.permute.xlu0 %262
        %264 = vrot.lane.b32.xlu0 %v191, 3
        %v265 = vpop.permute.xlu0 %264
        %s270 = scalar_lea.vmem [#allocation2], 48
        %271 = vst.msk [vmem:[%s270 + $0x3] sm:$0xff] %vm249, %v259
        %272 = vst.msk [vmem:[%s270 + $0xb] sm:$0xff] %vm249, %v261
        %273 = vst.msk [vmem:[%s270 + $0x1b] sm:$0xff] %vm249, %v263
        %274 = vst.msk [vmem:[%s270 + $0x23] sm:$0xff] %vm249, %v265
        %v275 = vld [vmem:[#allocation2] sm:$0xff]
        %v276 = vld [vmem:[#allocation2 + $0x8] sm:$0xff]
        %v277 = vld [vmem:[#allocation2 + $0x10] sm:$0x3f]
        %v278 = vld [vmem:[#allocation2 + $0x18] sm:$0xff]
        %v279 = vld [vmem:[#allocation2 + $0x20] sm:$0xff]
        %v280 = vld [vmem:[#allocation2 + $0x28] sm:$0x3f]
        %vm281 = vcmask 130048
        %282 = vst.msk [vmem:[#allocation3] sm:$0xff] %vm281, %v275
        %283 = vst.msk [vmem:[#allocation3 + $0x8] sm:$0xff] %vm281, %v276
        %vm284 = vcmask 128000
        %285 = vst.msk [vmem:[#allocation3 + $0x10] sm:$0x3f] %vm284, %v277
        %286 = vst.msk [vmem:[#allocation3 + $0x18] sm:$0xff] %vm281, %v278
        %287 = vst.msk [vmem:[#allocation3 + $0x20] sm:$0xff] %vm281, %v279
        %288 = vst.msk [vmem:[#allocation3 + $0x28] sm:$0x3f] %vm284, %v280
        %v289 = vld [vmem:[#allocation2] sm:$0xff]
        %v290 = vld [vmem:[#allocation2 + $0x8] sm:$0xff]
        %v291 = vld [vmem:[#allocation2 + $0x10] sm:$0x3f]
        %v292 = vld [vmem:[#allocation2 + $0x18] sm:$0xff]
        %v293 = vld [vmem:[#allocation2 + $0x20] sm:$0xff]
        %v294 = vld [vmem:[#allocation2 + $0x28] sm:$0x3f]
        %301 = vrot.lane.b32.xlu0 %v289, 127
        %v302 = vpop.permute.xlu0 %301
        %303 = vrot.lane.b32.xlu0 %v290, 127
        %v304 = vpop.permute.xlu0 %303
        %305 = vrot.lane.b32.xlu0 %v291, 127
        %v306 = vpop.permute.xlu0 %305
        %307 = vrot.lane.b32.xlu0 %v292, 127
        %v308 = vpop.permute.xlu0 %307
        %309 = vrot.lane.b32.xlu0 %v293, 127
        %v310 = vpop.permute.xlu0 %309
        %311 = vrot.lane.b32.xlu0 %v294, 127
        %v312 = vpop.permute.xlu0 %311
        %s319 = scalar_lea.vmem [#allocation3], 48
        %320 = vst.msk [vmem:[%s319] sm:$0xff] %vm281, %v302
        %321 = vst.msk [vmem:[%s319 + $0x8] sm:$0xff] %vm281, %v304
        %322 = vst.msk [vmem:[%s319 + $0x10] sm:$0x3f] %vm284, %v306
        %323 = vst.msk [vmem:[%s319 + $0x18] sm:$0xff] %vm281, %v308
        %324 = vst.msk [vmem:[%s319 + $0x20] sm:$0xff] %vm281, %v310
        %325 = vst.msk [vmem:[%s319 + $0x28] sm:$0x3f] %vm284, %v312
        %v326 = vld [vmem:[#allocation2] sm:$0xff]
        %v327 = vld [vmem:[#allocation2 + $0x8] sm:$0xff]
        %v328 = vld [vmem:[#allocation2 + $0x10] sm:$0x3f]
        %v329 = vld [vmem:[#allocation2 + $0x18] sm:$0xff]
        %v330 = vld [vmem:[#allocation2 + $0x20] sm:$0xff]
        %v331 = vld [vmem:[#allocation2 + $0x28] sm:$0x3f]
        %338 = vrot.lane.b32.xlu0 %v326, 126
        %v339 = vpop.permute.xlu0 %338
        %340 = vrot.lane.b32.xlu0 %v327, 126
        %v341 = vpop.permute.xlu0 %340
        %342 = vrot.lane.b32.xlu0 %v328, 126
        %v343 = vpop.permute.xlu0 %342
        %344 = vrot.lane.b32.xlu0 %v329, 126
        %v345 = vpop.permute.xlu0 %344
        %346 = vrot.lane.b32.xlu0 %v330, 126
        %v347 = vpop.permute.xlu0 %346
        %348 = vrot.lane.b32.xlu0 %v331, 126
        %v349 = vpop.permute.xlu0 %348
        %s356 = scalar_lea.vmem [#allocation3], 96
        %357 = vst.msk [vmem:[%s356] sm:$0xff] %vm281, %v339
        %358 = vst.msk [vmem:[%s356 + $0x8] sm:$0xff] %vm281, %v341
        %359 = vst.msk [vmem:[%s356 + $0x10] sm:$0x3f] %vm284, %v343
        %360 = vst.msk [vmem:[%s356 + $0x18] sm:$0xff] %vm281, %v345
        %361 = vst.msk [vmem:[%s356 + $0x20] sm:$0xff] %vm281, %v347
        %362 = vst.msk [vmem:[%s356 + $0x28] sm:$0x3f] %vm284, %v349
        %v363 = vld [vmem:[#allocation2] sm:$0xff]
        %v364 = vld [vmem:[#allocation2 + $0x8] sm:$0xff]
        %v365 = vld [vmem:[#allocation2 + $0x10] sm:$0x3f]
        %v366 = vld [vmem:[#allocation2 + $0x18] sm:$0xff]
        %v367 = vld [vmem:[#allocation2 + $0x20] sm:$0xff]
        %v368 = vld [vmem:[#allocation2 + $0x28] sm:$0x3f]
        %375 = vrot.lane.b32.xlu0 %v363, 125
        %v376 = vpop.permute.xlu0 %375
        %377 = vrot.lane.b32.xlu0 %v364, 125
        %v378 = vpop.permute.xlu0 %377
        %379 = vrot.lane.b32.xlu0 %v365, 125
        %v380 = vpop.permute.xlu0 %379
        %381 = vrot.lane.b32.xlu0 %v366, 125
        %v382 = vpop.permute.xlu0 %381
        %383 = vrot.lane.b32.xlu0 %v367, 125
        %v384 = vpop.permute.xlu0 %383
        %385 = vrot.lane.b32.xlu0 %v368, 125
        %v386 = vpop.permute.xlu0 %385
        %s393 = scalar_lea.vmem [#allocation3], 144
        %394 = vst.msk [vmem:[%s393] sm:$0xff] %vm281, %v376
        %395 = vst.msk [vmem:[%s393 + $0x8] sm:$0xff] %vm281, %v378
        %396 = vst.msk [vmem:[%s393 + $0x10] sm:$0x3f] %vm284, %v380
        %397 = vst.msk [vmem:[%s393 + $0x18] sm:$0xff] %vm281, %v382
        %398 = vst.msk [vmem:[%s393 + $0x20] sm:$0xff] %vm281, %v384
        %399 = vst.msk [vmem:[%s393 + $0x28] sm:$0x3f] %vm284, %v386
        %v400 = vld [vmem:[#allocation2] sm:$0xff]
        %v401 = vld [vmem:[#allocation2 + $0x8] sm:$0xff]
        %v402 = vld [vmem:[#allocation2 + $0x10] sm:$0x3f]
        %v403 = vld [vmem:[#allocation2 + $0x18] sm:$0xff]
        %v404 = vld [vmem:[#allocation2 + $0x20] sm:$0xff]
        %v405 = vld [vmem:[#allocation2 + $0x28] sm:$0x3f]
        %412 = vrot.lane.b32.xlu0 %v400, 124
        %v413 = vpop.permute.xlu0 %412
        %414 = vrot.lane.b32.xlu0 %v401, 124
        %v415 = vpop.permute.xlu0 %414
        %416 = vrot.lane.b32.xlu0 %v402, 124
        %v417 = vpop.permute.xlu0 %416
        %418 = vrot.lane.b32.xlu0 %v403, 124
        %v419 = vpop.permute.xlu0 %418
        %420 = vrot.lane.b32.xlu0 %v404, 124
        %v421 = vpop.permute.xlu0 %420
        %422 = vrot.lane.b32.xlu0 %v405, 124
        %v423 = vpop.permute.xlu0 %422
        %s430 = scalar_lea.vmem [#allocation3], 192
        %431 = vst.msk [vmem:[%s430] sm:$0xff] %vm281, %v413
        %432 = vst.msk [vmem:[%s430 + $0x8] sm:$0xff] %vm281, %v415
        %433 = vst.msk [vmem:[%s430 + $0x10] sm:$0x3f] %vm284, %v417
        %434 = vst.msk [vmem:[%s430 + $0x18] sm:$0xff] %vm281, %v419
        %435 = vst.msk [vmem:[%s430 + $0x20] sm:$0xff] %vm281, %v421
        %436 = vst.msk [vmem:[%s430 + $0x28] sm:$0x3f] %vm284, %v423
        %v437 = vld [vmem:[#allocation2] sm:$0xff]
        %v438 = vld [vmem:[#allocation2 + $0x8] sm:$0xff]
        %v439 = vld [vmem:[#allocation2 + $0x10] sm:$0x3f]
        %v440 = vld [vmem:[#allocation2 + $0x18] sm:$0xff]
        %v441 = vld [vmem:[#allocation2 + $0x20] sm:$0xff]
        %v442 = vld [vmem:[#allocation2 + $0x28] sm:$0x3f]
        %449 = vrot.lane.b32.xlu0 %v437, 123
        %v450 = vpop.permute.xlu0 %449
        %451 = vrot.lane.b32.xlu0 %v438, 123
        %v452 = vpop.permute.xlu0 %451
        %453 = vrot.lane.b32.xlu0 %v439, 123
        %v454 = vpop.permute.xlu0 %453
        %455 = vrot.lane.b32.xlu0 %v440, 123
        %v456 = vpop.permute.xlu0 %455
        %457 = vrot.lane.b32.xlu0 %v441, 123
        %v458 = vpop.permute.xlu0 %457
        %459 = vrot.lane.b32.xlu0 %v442, 123
        %v460 = vpop.permute.xlu0 %459
        %s467 = scalar_lea.vmem [#allocation3], 240
        %468 = vst.msk [vmem:[%s467] sm:$0xff] %vm281, %v450
        %469 = vst.msk [vmem:[%s467 + $0x8] sm:$0xff] %vm281, %v452
        %470 = vst.msk [vmem:[%s467 + $0x10] sm:$0x3f] %vm284, %v454
        %471 = vst.msk [vmem:[%s467 + $0x18] sm:$0xff] %vm281, %v456
        %472 = vst.msk [vmem:[%s467 + $0x20] sm:$0xff] %vm281, %v458
        %473 = vst.msk [vmem:[%s467 + $0x28] sm:$0x3f] %vm284, %v460
        %v474 = vld [vmem:[#allocation2] sm:$0xff]
        %v475 = vld [vmem:[#allocation2 + $0x8] sm:$0xff]
        %v476 = vld [vmem:[#allocation2 + $0x10] sm:$0x3f]
        %v477 = vld [vmem:[#allocation2 + $0x18] sm:$0xff]
        %v478 = vld [vmem:[#allocation2 + $0x20] sm:$0xff]
        %v479 = vld [vmem:[#allocation2 + $0x28] sm:$0x3f]
        %486 = vrot.lane.b32.xlu0 %v474, 122
        %v487 = vpop.permute.xlu0 %486
        %488 = vrot.lane.b32.xlu0 %v475, 122
        %v489 = vpop.permute.xlu0 %488
        %490 = vrot.lane.b32.xlu0 %v476, 122
        %v491 = vpop.permute.xlu0 %490
        %492 = vrot.lane.b32.xlu0 %v477, 122
        %v493 = vpop.permute.xlu0 %492
        %494 = vrot.lane.b32.xlu0 %v478, 122
        %v495 = vpop.permute.xlu0 %494
        %496 = vrot.lane.b32.xlu0 %v479, 122
        %v497 = vpop.permute.xlu0 %496
        %s504 = scalar_lea.vmem [#allocation3], 288
        %505 = vst.msk [vmem:[%s504] sm:$0xff] %vm281, %v487
        %506 = vst.msk [vmem:[%s504 + $0x8] sm:$0xff] %vm281, %v489
        %507 = vst.msk [vmem:[%s504 + $0x10] sm:$0x3f] %vm284, %v491
        %508 = vst.msk [vmem:[%s504 + $0x18] sm:$0xff] %vm281, %v493
        %509 = vst.msk [vmem:[%s504 + $0x20] sm:$0xff] %vm281, %v495
        %510 = vst.msk [vmem:[%s504 + $0x28] sm:$0x3f] %vm284, %v497
        %v511 = vld [vmem:[%s270] sm:$0xff]
        %v512 = vld [vmem:[%s270 + $0x8] sm:$0xff]
        %v513 = vld [vmem:[%s270 + $0x10] sm:$0x3f]
        %v514 = vld [vmem:[%s270 + $0x18] sm:$0xff]
        %v515 = vld [vmem:[%s270 + $0x20] sm:$0xff]
        %v516 = vld [vmem:[%s270 + $0x28] sm:$0x3f]
        %s517 = scalar_lea.vmem [#allocation3], 336
        %518 = vst.msk [vmem:[%s517] sm:$0xff] %vm281, %v511
        %519 = vst.msk [vmem:[%s517 + $0x8] sm:$0xff] %vm281, %v512
        %520 = vst.msk [vmem:[%s517 + $0x10] sm:$0x3f] %vm284, %v513
        %521 = vst.msk [vmem:[%s517 + $0x18] sm:$0xff] %vm281, %v514
        %522 = vst.msk [vmem:[%s517 + $0x20] sm:$0xff] %vm281, %v515
        %523 = vst.msk [vmem:[%s517 + $0x28] sm:$0x3f] %vm284, %v516
        %v524 = vld [vmem:[%s270] sm:$0xff]
        %v525 = vld [vmem:[%s270 + $0x8] sm:$0xff]
        %v526 = vld [vmem:[%s270 + $0x10] sm:$0x3f]
        %v527 = vld [vmem:[%s270 + $0x18] sm:$0xff]
        %v528 = vld [vmem:[%s270 + $0x20] sm:$0xff]
        %v529 = vld [vmem:[%s270 + $0x28] sm:$0x3f]
        %536 = vrot.lane.b32.xlu0 %v524, 127
        %v537 = vpop.permute.xlu0 %536
        %538 = vrot.lane.b32.xlu0 %v525, 127
        %v539 = vpop.permute.xlu0 %538
        %540 = vrot.lane.b32.xlu0 %v526, 127
        %v541 = vpop.permute.xlu0 %540
        %542 = vrot.lane.b32.xlu0 %v527, 127
        %v543 = vpop.permute.xlu0 %542
        %544 = vrot.lane.b32.xlu0 %v528, 127
        %v545 = vpop.permute.xlu0 %544
        %546 = vrot.lane.b32.xlu0 %v529, 127
        %v547 = vpop.permute.xlu0 %546
        %s554 = scalar_lea.vmem [#allocation3], 384
        %555 = vst.msk [vmem:[%s554] sm:$0xff] %vm281, %v537
        %556 = vst.msk [vmem:[%s554 + $0x8] sm:$0xff] %vm281, %v539
        %557 = vst.msk [vmem:[%s554 + $0x10] sm:$0x3f] %vm284, %v541
        %558 = vst.msk [vmem:[%s554 + $0x18] sm:$0xff] %vm281, %v543
        %559 = vst.msk [vmem:[%s554 + $0x20] sm:$0xff] %vm281, %v545
        %560 = vst.msk [vmem:[%s554 + $0x28] sm:$0x3f] %vm284, %v547
        %v561 = vld [vmem:[%s270] sm:$0xff]
        %v562 = vld [vmem:[%s270 + $0x8] sm:$0xff]
        %v563 = vld [vmem:[%s270 + $0x10] sm:$0x3f]
        %v564 = vld [vmem:[%s270 + $0x18] sm:$0xff]
        %v565 = vld [vmem:[%s270 + $0x20] sm:$0xff]
        %v566 = vld [vmem:[%s270 + $0x28] sm:$0x3f]
        %573 = vrot.lane.b32.xlu0 %v561, 126
        %v574 = vpop.permute.xlu0 %573
        %575 = vrot.lane.b32.xlu0 %v562, 126
        %v576 = vpop.permute.xlu0 %575
        %577 = vrot.lane.b32.xlu0 %v563, 126
        %v578 = vpop.permute.xlu0 %577
        %579 = vrot.lane.b32.xlu0 %v564, 126
        %v580 = vpop.permute.xlu0 %579
        %581 = vrot.lane.b32.xlu0 %v565, 126
        %v582 = vpop.permute.xlu0 %581
        %583 = vrot.lane.b32.xlu0 %v566, 126
        %v584 = vpop.permute.xlu0 %583
        %s591 = scalar_lea.vmem [#allocation3], 432
        %592 = vst.msk [vmem:[%s591] sm:$0xff] %vm281, %v574
        %593 = vst.msk [vmem:[%s591 + $0x8] sm:$0xff] %vm281, %v576
        %594 = vst.msk [vmem:[%s591 + $0x10] sm:$0x3f] %vm284, %v578
        %595 = vst.msk [vmem:[%s591 + $0x18] sm:$0xff] %vm281, %v580
        %596 = vst.msk [vmem:[%s591 + $0x20] sm:$0xff] %vm281, %v582
        %597 = vst.msk [vmem:[%s591 + $0x28] sm:$0x3f] %vm284, %v584
        %v598 = vld [vmem:[%s270] sm:$0xff]
        %v599 = vld [vmem:[%s270 + $0x8] sm:$0xff]
        %v600 = vld [vmem:[%s270 + $0x10] sm:$0x3f]
        %v601 = vld [vmem:[%s270 + $0x18] sm:$0xff]
        %v602 = vld [vmem:[%s270 + $0x20] sm:$0xff]
        %v603 = vld [vmem:[%s270 + $0x28] sm:$0x3f]
        %610 = vrot.lane.b32.xlu0 %v598, 125
        %v611 = vpop.permute.xlu0 %610
        %612 = vrot.lane.b32.xlu0 %v599, 125
        %v613 = vpop.permute.xlu0 %612
        %614 = vrot.lane.b32.xlu0 %v600, 125
        %v615 = vpop.permute.xlu0 %614
        %616 = vrot.lane.b32.xlu0 %v601, 125
        %v617 = vpop.permute.xlu0 %616
        %618 = vrot.lane.b32.xlu0 %v602, 125
        %v619 = vpop.permute.xlu0 %618
        %620 = vrot.lane.b32.xlu0 %v603, 125
        %v621 = vpop.permute.xlu0 %620
        %s628 = scalar_lea.vmem [#allocation3], 480
        %629 = vst.msk [vmem:[%s628] sm:$0xff] %vm281, %v611
        %630 = vst.msk [vmem:[%s628 + $0x8] sm:$0xff] %vm281, %v613
        %631 = vst.msk [vmem:[%s628 + $0x10] sm:$0x3f] %vm284, %v615
        %632 = vst.msk [vmem:[%s628 + $0x18] sm:$0xff] %vm281, %v617
        %633 = vst.msk [vmem:[%s628 + $0x20] sm:$0xff] %vm281, %v619
        %634 = vst.msk [vmem:[%s628 + $0x28] sm:$0x3f] %vm284, %v621
        %v635 = vld [vmem:[%s270] sm:$0xff]
        %v636 = vld [vmem:[%s270 + $0x8] sm:$0xff]
        %v637 = vld [vmem:[%s270 + $0x10] sm:$0x3f]
        %v638 = vld [vmem:[%s270 + $0x18] sm:$0xff]
        %v639 = vld [vmem:[%s270 + $0x20] sm:$0xff]
        %v640 = vld [vmem:[%s270 + $0x28] sm:$0x3f]
        %647 = vrot.lane.b32.xlu0 %v635, 124
        %v648 = vpop.permute.xlu0 %647
        %649 = vrot.lane.b32.xlu0 %v636, 124
        %v650 = vpop.permute.xlu0 %649
        %651 = vrot.lane.b32.xlu0 %v637, 124
        %v652 = vpop.permute.xlu0 %651
        %653 = vrot.lane.b32.xlu0 %v638, 124
        %v654 = vpop.permute.xlu0 %653
        %655 = vrot.lane.b32.xlu0 %v639, 124
        %v656 = vpop.permute.xlu0 %655
        %657 = vrot.lane.b32.xlu0 %v640, 124
        %v658 = vpop.permute.xlu0 %657
        %s665 = scalar_lea.vmem [#allocation3], 528
        %666 = vst.msk [vmem:[%s665] sm:$0xff] %vm281, %v648
        %667 = vst.msk [vmem:[%s665 + $0x8] sm:$0xff] %vm281, %v650
        %668 = vst.msk [vmem:[%s665 + $0x10] sm:$0x3f] %vm284, %v652
        %669 = vst.msk [vmem:[%s665 + $0x18] sm:$0xff] %vm281, %v654
        %670 = vst.msk [vmem:[%s665 + $0x20] sm:$0xff] %vm281, %v656
        %671 = vst.msk [vmem:[%s665 + $0x28] sm:$0x3f] %vm284, %v658
        %v672 = vld [vmem:[%s270] sm:$0xff]
        %v673 = vld [vmem:[%s270 + $0x8] sm:$0xff]
        %v674 = vld [vmem:[%s270 + $0x10] sm:$0x3f]
        %v675 = vld [vmem:[%s270 + $0x18] sm:$0xff]
        %v676 = vld [vmem:[%s270 + $0x20] sm:$0xff]
        %v677 = vld [vmem:[%s270 + $0x28] sm:$0x3f]
        %684 = vrot.lane.b32.xlu0 %v672, 123
        %v685 = vpop.permute.xlu0 %684
        %686 = vrot.lane.b32.xlu0 %v673, 123
        %v687 = vpop.permute.xlu0 %686
        %688 = vrot.lane.b32.xlu0 %v674, 123
        %v689 = vpop.permute.xlu0 %688
        %690 = vrot.lane.b32.xlu0 %v675, 123
        %v691 = vpop.permute.xlu0 %690
        %692 = vrot.lane.b32.xlu0 %v676, 123
        %v693 = vpop.permute.xlu0 %692
        %694 = vrot.lane.b32.xlu0 %v677, 123
        %v695 = vpop.permute.xlu0 %694
        %s702 = scalar_lea.vmem [#allocation3], 576
        %703 = vst.msk [vmem:[%s702] sm:$0xff] %vm281, %v685
        %704 = vst.msk [vmem:[%s702 + $0x8] sm:$0xff] %vm281, %v687
        %705 = vst.msk [vmem:[%s702 + $0x10] sm:$0x3f] %vm284, %v689
        %706 = vst.msk [vmem:[%s702 + $0x18] sm:$0xff] %vm281, %v691
        %707 = vst.msk [vmem:[%s702 + $0x20] sm:$0xff] %vm281, %v693
        %708 = vst.msk [vmem:[%s702 + $0x28] sm:$0x3f] %vm284, %v695
        %v709 = vld [vmem:[%s270] sm:$0xff]
        %v710 = vld [vmem:[%s270 + $0x8] sm:$0xff]
        %v711 = vld [vmem:[%s270 + $0x10] sm:$0x3f]
        %v712 = vld [vmem:[%s270 + $0x18] sm:$0xff]
        %v713 = vld [vmem:[%s270 + $0x20] sm:$0xff]
        %v714 = vld [vmem:[%s270 + $0x28] sm:$0x3f]
        %721 = vrot.lane.b32.xlu0 %v709, 122
        %v722 = vpop.permute.xlu0 %721
        %723 = vrot.lane.b32.xlu0 %v710, 122
        %v724 = vpop.permute.xlu0 %723
        %725 = vrot.lane.b32.xlu0 %v711, 122
        %v726 = vpop.permute.xlu0 %725
        %727 = vrot.lane.b32.xlu0 %v712, 122
        %v728 = vpop.permute.xlu0 %727
        %729 = vrot.lane.b32.xlu0 %v713, 122
        %v730 = vpop.permute.xlu0 %729
        %731 = vrot.lane.b32.xlu0 %v714, 122
        %v732 = vpop.permute.xlu0 %731
        %s739 = scalar_lea.vmem [#allocation3], 624
        %740 = vst.msk [vmem:[%s739] sm:$0xff] %vm281, %v722
        %741 = vst.msk [vmem:[%s739 + $0x8] sm:$0xff] %vm281, %v724
        %742 = vst.msk [vmem:[%s739 + $0x10] sm:$0x3f] %vm284, %v726
        %743 = vst.msk [vmem:[%s739 + $0x18] sm:$0xff] %vm281, %v728
        %744 = vst.msk [vmem:[%s739 + $0x20] sm:$0xff] %vm281, %v730
        %745 = vst.msk [vmem:[%s739 + $0x28] sm:$0x3f] %vm284, %v732
        %s746 = sld [smem:[#allocation5]]
        %v747 = vld [vmem:[#allocation3] sm:$0xff]
        %v748 = vld [vmem:[#allocation3 + $0x8] sm:$0xff]
        %v749 = vld [vmem:[#allocation3 + $0x18] sm:$0xff]
        %v750 = vld [vmem:[#allocation3 + $0x20] sm:$0xff]
        %v751 = vstv %s746
        %v752 = vmul.f32 %v751, %v747
        %v753 = vmul.f32 %v751, %v748
        %v754 = vmul.f32 %v751, %v749
        %v755 = vmul.f32 %v751, %v750
        %v756 = vadd.f32 %v752, 0.0
        %v757 = vadd.f32 %v753, 0.0
        %v758 = vadd.f32 %v754, 0.0
        %v759 = vadd.f32 %v755, 0.0
        %s760 = sld [smem:[#allocation5 + $0x7]]
        %v761 = vld [vmem:[#allocation3 + $0x1] sm:$0xff]
        %v762 = vld [vmem:[#allocation3 + $0x9] sm:$0xff]
        %v763 = vld [vmem:[#allocation3 + $0x19] sm:$0xff]
        %v764 = vld [vmem:[#allocation3 + $0x21] sm:$0xff]
        %v765 = vstv %s760
        %v766 = vmul.f32 %v765, %v761
        %v767 = vmul.f32 %v765, %v762
        %v768 = vmul.f32 %v765, %v763
        %v769 = vmul.f32 %v765, %v764
        %v770 = vadd.f32 %v756, %v766
        %v771 = vadd.f32 %v757, %v767
        %v772 = vadd.f32 %v758, %v768
        %v773 = vadd.f32 %v759, %v769
        %s774 = sld [smem:[#allocation5 + $0xe]]
        %v775 = vld [vmem:[#allocation3 + $0x2] sm:$0xff]
        %v776 = vld [vmem:[#allocation3 + $0xa] sm:$0xff]
        %v777 = vld [vmem:[#allocation3 + $0x1a] sm:$0xff]
        %v778 = vld [vmem:[#allocation3 + $0x22] sm:$0xff]
        %v779 = vstv %s774
        %v780 = vmul.f32 %v779, %v775
        %v781 = vmul.f32 %v779, %v776
        %v782 = vmul.f32 %v779, %v777
        %v783 = vmul.f32 %v779, %v778
        %v784 = vadd.f32 %v770, %v780
        %v785 = vadd.f32 %v771, %v781
        %v786 = vadd.f32 %v772, %v782
        %v787 = vadd.f32 %v773, %v783
        %s788 = sld [smem:[#allocation5 + $0x15]]
        %v789 = vld [vmem:[#allocation3 + $0x3] sm:$0xff]
        %v790 = vld [vmem:[#allocation3 + $0xb] sm:$0xff]
        %v791 = vld [vmem:[#allocation3 + $0x1b] sm:$0xff]
        %v792 = vld [vmem:[#allocation3 + $0x23] sm:$0xff]
        %v793 = vstv %s788
        %v794 = vmul.f32 %v793, %v789
        %v795 = vmul.f32 %v793, %v790
        %v796 = vmul.f32 %v793, %v791
        %v797 = vmul.f32 %v793, %v792
        %v798 = vadd.f32 %v784, %v794
        %v799 = vadd.f32 %v785, %v795
        %v800 = vadd.f32 %v786, %v796
        %v801 = vadd.f32 %v787, %v797
        %s802 = sld [smem:[#allocation5 + $0x1c]]
        %v803 = vld [vmem:[#allocation3 + $0x4] sm:$0xff]
        %v804 = vld [vmem:[#allocation3 + $0xc] sm:$0xff]
        %v805 = vld [vmem:[#allocation3 + $0x1c] sm:$0xff]
        %v806 = vld [vmem:[#allocation3 + $0x24] sm:$0xff]
        %v807 = vstv %s802
        %v808 = vmul.f32 %v807, %v803
        %v809 = vmul.f32 %v807, %v804
        %v810 = vmul.f32 %v807, %v805
        %v811 = vmul.f32 %v807, %v806
        %v812 = vadd.f32 %v798, %v808
        %v813 = vadd.f32 %v799, %v809
        %v814 = vadd.f32 %v800, %v810
        %v815 = vadd.f32 %v801, %v811
        %s816 = sld [smem:[#allocation5 + $0x23]]
        %v817 = vld [vmem:[#allocation3 + $0x5] sm:$0xff]
        %v818 = vld [vmem:[#allocation3 + $0xd] sm:$0xff]
        %v819 = vld [vmem:[#allocation3 + $0x1d] sm:$0xff]
        %v820 = vld [vmem:[#allocation3 + $0x25] sm:$0xff]
        %v821 = vstv %s816
        %v822 = vmul.f32 %v821, %v817
        %v823 = vmul.f32 %v821, %v818
        %v824 = vmul.f32 %v821, %v819
        %v825 = vmul.f32 %v821, %v820
        %v826 = vadd.f32 %v812, %v822
        %v827 = vadd.f32 %v813, %v823
        %v828 = vadd.f32 %v814, %v824
        %v829 = vadd.f32 %v815, %v825
        %s830 = sld [smem:[#allocation5 + $0x2a]]
        %v831 = vld [vmem:[#allocation3 + $0x6] sm:$0xff]
        %v832 = vld [vmem:[#allocation3 + $0xe] sm:$0xff]
        %v833 = vld [vmem:[#allocation3 + $0x1e] sm:$0xff]
        %v834 = vld [vmem:[#allocation3 + $0x26] sm:$0xff]
        %v835 = vstv %s830
        %v836 = vmul.f32 %v835, %v831
        %v837 = vmul.f32 %v835, %v832
        %v838 = vmul.f32 %v835, %v833
        %v839 = vmul.f32 %v835, %v834
        %v840 = vadd.f32 %v826, %v836
        %v841 = vadd.f32 %v827, %v837
        %v842 = vadd.f32 %v828, %v838
        %v843 = vadd.f32 %v829, %v839
        %s844 = sld [smem:[#allocation5 + $0x1]]
        %v845 = vld [vmem:[%s319] sm:$0xff]
        %v846 = vld [vmem:[%s319 + $0x8] sm:$0xff]
        %v847 = vld [vmem:[%s319 + $0x18] sm:$0xff]
        %v848 = vld [vmem:[%s319 + $0x20] sm:$0xff]
        %v849 = vstv %s844
        %v850 = vmul.f32 %v849, %v845
        %v851 = vmul.f32 %v849, %v846
        %v852 = vmul.f32 %v849, %v847
        %v853 = vmul.f32 %v849, %v848
        %v854 = vadd.f32 %v840, %v850
        %v855 = vadd.f32 %v841, %v851
        %v856 = vadd.f32 %v842, %v852
        %v857 = vadd.f32 %v843, %v853
        %s858 = sld [smem:[#allocation5 + $0x8]]
        %v859 = vld [vmem:[%s319 + $0x1] sm:$0xff]
        %v860 = vld [vmem:[%s319 + $0x9] sm:$0xff]
        %v861 = vld [vmem:[%s319 + $0x19] sm:$0xff]
        %v862 = vld [vmem:[%s319 + $0x21] sm:$0xff]
        %v863 = vstv %s858
        %v864 = vmul.f32 %v863, %v859
        %v865 = vmul.f32 %v863, %v860
        %v866 = vmul.f32 %v863, %v861
        %v867 = vmul.f32 %v863, %v862
        %v868 = vadd.f32 %v854, %v864
        %v869 = vadd.f32 %v855, %v865
        %v870 = vadd.f32 %v856, %v866
        %v871 = vadd.f32 %v857, %v867
        %s872 = sld [smem:[#allocation5 + $0xf]]
        %v873 = vld [vmem:[%s319 + $0x2] sm:$0xff]
        %v874 = vld [vmem:[%s319 + $0xa] sm:$0xff]
        %v875 = vld [vmem:[%s319 + $0x1a] sm:$0xff]
        %v876 = vld [vmem:[%s319 + $0x22] sm:$0xff]
        %v877 = vstv %s872
        %v878 = vmul.f32 %v877, %v873
        %v879 = vmul.f32 %v877, %v874
        %v880 = vmul.f32 %v877, %v875
        %v881 = vmul.f32 %v877, %v876
        %v882 = vadd.f32 %v868, %v878
        %v883 = vadd.f32 %v869, %v879
        %v884 = vadd.f32 %v870, %v880
        %v885 = vadd.f32 %v871, %v881
        %s886 = sld [smem:[#allocation5 + $0x16]]
        %v887 = vld [vmem:[%s319 + $0x3] sm:$0xff]
        %v888 = vld [vmem:[%s319 + $0xb] sm:$0xff]
        %v889 = vld [vmem:[%s319 + $0x1b] sm:$0xff]
        %v890 = vld [vmem:[%s319 + $0x23] sm:$0xff]
        %v891 = vstv %s886
        %v892 = vmul.f32 %v891, %v887
        %v893 = vmul.f32 %v891, %v888
        %v894 = vmul.f32 %v891, %v889
        %v895 = vmul.f32 %v891, %v890
        %v896 = vadd.f32 %v882, %v892
        %v897 = vadd.f32 %v883, %v893
        %v898 = vadd.f32 %v884, %v894
        %v899 = vadd.f32 %v885, %v895
        %s900 = sld [smem:[#allocation5 + $0x1d]]
        %v901 = vld [vmem:[%s319 + $0x4] sm:$0xff]
        %v902 = vld [vmem:[%s319 + $0xc] sm:$0xff]
        %v903 = vld [vmem:[%s319 + $0x1c] sm:$0xff]
        %v904 = vld [vmem:[%s319 + $0x24] sm:$0xff]
        %v905 = vstv %s900
        %v906 = vmul.f32 %v905, %v901
        %v907 = vmul.f32 %v905, %v902
        %v908 = vmul.f32 %v905, %v903
        %v909 = vmul.f32 %v905, %v904
        %v910 = vadd.f32 %v896, %v906
        %v911 = vadd.f32 %v897, %v907
        %v912 = vadd.f32 %v898, %v908
        %v913 = vadd.f32 %v899, %v909
        %s914 = sld [smem:[#allocation5 + $0x24]]
        %v915 = vld [vmem:[%s319 + $0x5] sm:$0xff]
        %v916 = vld [vmem:[%s319 + $0xd] sm:$0xff]
        %v917 = vld [vmem:[%s319 + $0x1d] sm:$0xff]
        %v918 = vld [vmem:[%s319 + $0x25] sm:$0xff]
        %v919 = vstv %s914
        %v920 = vmul.f32 %v919, %v915
        %v921 = vmul.f32 %v919, %v916
        %v922 = vmul.f32 %v919, %v917
        %v923 = vmul.f32 %v919, %v918
        %v924 = vadd.f32 %v910, %v920
        %v925 = vadd.f32 %v911, %v921
        %v926 = vadd.f32 %v912, %v922
        %v927 = vadd.f32 %v913, %v923
        %s928 = sld [smem:[#allocation5 + $0x2b]]
        %v929 = vld [vmem:[%s319 + $0x6] sm:$0xff]
        %v930 = vld [vmem:[%s319 + $0xe] sm:$0xff]
        %v931 = vld [vmem:[%s319 + $0x1e] sm:$0xff]
        %v932 = vld [vmem:[%s319 + $0x26] sm:$0xff]
        %v933 = vstv %s928
        %v934 = vmul.f32 %v933, %v929
        %v935 = vmul.f32 %v933, %v930
        %v936 = vmul.f32 %v933, %v931
        %v937 = vmul.f32 %v933, %v932
        %v938 = vadd.f32 %v924, %v934
        %v939 = vadd.f32 %v925, %v935
        %v940 = vadd.f32 %v926, %v936
        %v941 = vadd.f32 %v927, %v937
        %s942 = sld [smem:[#allocation5 + $0x2]]
        %v943 = vld [vmem:[%s356] sm:$0xff]
        %v944 = vld [vmem:[%s356 + $0x8] sm:$0xff]
        %v945 = vld [vmem:[%s356 + $0x18] sm:$0xff]
        %v946 = vld [vmem:[%s356 + $0x20] sm:$0xff]
        %v947 = vstv %s942
        %v948 = vmul.f32 %v947, %v943
        %v949 = vmul.f32 %v947, %v944
        %v950 = vmul.f32 %v947, %v945
        %v951 = vmul.f32 %v947, %v946
        %v952 = vadd.f32 %v938, %v948
        %v953 = vadd.f32 %v939, %v949
        %v954 = vadd.f32 %v940, %v950
        %v955 = vadd.f32 %v941, %v951
        %s956 = sld [smem:[#allocation5 + $0x9]]
        %v957 = vld [vmem:[%s356 + $0x1] sm:$0xff]
        %v958 = vld [vmem:[%s356 + $0x9] sm:$0xff]
        %v959 = vld [vmem:[%s356 + $0x19] sm:$0xff]
        %v960 = vld [vmem:[%s356 + $0x21] sm:$0xff]
        %v961 = vstv %s956
        %v962 = vmul.f32 %v961, %v957
        %v963 = vmul.f32 %v961, %v958
        %v964 = vmul.f32 %v961, %v959
        %v965 = vmul.f32 %v961, %v960
        %v966 = vadd.f32 %v952, %v962
        %v967 = vadd.f32 %v953, %v963
        %v968 = vadd.f32 %v954, %v964
        %v969 = vadd.f32 %v955, %v965
        %s970 = sld [smem:[#allocation5 + $0x10]]
        %v971 = vld [vmem:[%s356 + $0x2] sm:$0xff]
        %v972 = vld [vmem:[%s356 + $0xa] sm:$0xff]
        %v973 = vld [vmem:[%s356 + $0x1a] sm:$0xff]
        %v974 = vld [vmem:[%s356 + $0x22] sm:$0xff]
        %v975 = vstv %s970
        %v976 = vmul.f32 %v975, %v971
        %v977 = vmul.f32 %v975, %v972
        %v978 = vmul.f32 %v975, %v973
        %v979 = vmul.f32 %v975, %v974
        %v980 = vadd.f32 %v966, %v976
        %v981 = vadd.f32 %v967, %v977
        %v982 = vadd.f32 %v968, %v978
        %v983 = vadd.f32 %v969, %v979
        %s984 = sld [smem:[#allocation5 + $0x17]]
        %v985 = vld [vmem:[%s356 + $0x3] sm:$0xff]
        %v986 = vld [vmem:[%s356 + $0xb] sm:$0xff]
        %v987 = vld [vmem:[%s356 + $0x1b] sm:$0xff]
        %v988 = vld [vmem:[%s356 + $0x23] sm:$0xff]
        %v989 = vstv %s984
        %v990 = vmul.f32 %v989, %v985
        %v991 = vmul.f32 %v989, %v986
        %v992 = vmul.f32 %v989, %v987
        %v993 = vmul.f32 %v989, %v988
        %v994 = vadd.f32 %v980, %v990
        %v995 = vadd.f32 %v981, %v991
        %v996 = vadd.f32 %v982, %v992
        %v997 = vadd.f32 %v983, %v993
        %s998 = sld [smem:[#allocation5 + $0x1e]]
        %v999 = vld [vmem:[%s356 + $0x4] sm:$0xff]
        %v1000 = vld [vmem:[%s356 + $0xc] sm:$0xff]
        %v1001 = vld [vmem:[%s356 + $0x1c] sm:$0xff]
        %v1002 = vld [vmem:[%s356 + $0x24] sm:$0xff]
        %v1003 = vstv %s998
        %v1004 = vmul.f32 %v1003, %v999
        %v1005 = vmul.f32 %v1003, %v1000
        %v1006 = vmul.f32 %v1003, %v1001
        %v1007 = vmul.f32 %v1003, %v1002
        %v1008 = vadd.f32 %v994, %v1004
        %v1009 = vadd.f32 %v995, %v1005
        %v1010 = vadd.f32 %v996, %v1006
        %v1011 = vadd.f32 %v997, %v1007
        %s1012 = sld [smem:[#allocation5 + $0x25]]
        %v1013 = vld [vmem:[%s356 + $0x5] sm:$0xff]
        %v1014 = vld [vmem:[%s356 + $0xd] sm:$0xff]
        %v1015 = vld [vmem:[%s356 + $0x1d] sm:$0xff]
        %v1016 = vld [vmem:[%s356 + $0x25] sm:$0xff]
        %v1017 = vstv %s1012
        %v1018 = vmul.f32 %v1017, %v1013
        %v1019 = vmul.f32 %v1017, %v1014
        %v1020 = vmul.f32 %v1017, %v1015
        %v1021 = vmul.f32 %v1017, %v1016
        %v1022 = vadd.f32 %v1008, %v1018
        %v1023 = vadd.f32 %v1009, %v1019
        %v1024 = vadd.f32 %v1010, %v1020
        %v1025 = vadd.f32 %v1011, %v1021
        %s1026 = sld [smem:[#allocation5 + $0x2c]]
        %v1027 = vld [vmem:[%s356 + $0x6] sm:$0xff]
        %v1028 = vld [vmem:[%s356 + $0xe] sm:$0xff]
        %v1029 = vld [vmem:[%s356 + $0x1e] sm:$0xff]
        %v1030 = vld [vmem:[%s356 + $0x26] sm:$0xff]
        %v1031 = vstv %s1026
        %v1032 = vmul.f32 %v1031, %v1027
        %v1033 = vmul.f32 %v1031, %v1028
        %v1034 = vmul.f32 %v1031, %v1029
        %v1035 = vmul.f32 %v1031, %v1030
        %v1036 = vadd.f32 %v1022, %v1032
        %v1037 = vadd.f32 %v1023, %v1033
        %v1038 = vadd.f32 %v1024, %v1034
        %v1039 = vadd.f32 %v1025, %v1035
        %s1040 = sld [smem:[#allocation5 + $0x3]]
        %v1041 = vld [vmem:[%s393] sm:$0xff]
        %v1042 = vld [vmem:[%s393 + $0x8] sm:$0xff]
        %v1043 = vld [vmem:[%s393 + $0x18] sm:$0xff]
        %v1044 = vld [vmem:[%s393 + $0x20] sm:$0xff]
        %v1045 = vstv %s1040
        %v1046 = vmul.f32 %v1045, %v1041
        %v1047 = vmul.f32 %v1045, %v1042
        %v1048 = vmul.f32 %v1045, %v1043
        %v1049 = vmul.f32 %v1045, %v1044
        %v1050 = vadd.f32 %v1036, %v1046
        %v1051 = vadd.f32 %v1037, %v1047
        %v1052 = vadd.f32 %v1038, %v1048
        %v1053 = vadd.f32 %v1039, %v1049
        %s1054 = sld [smem:[#allocation5 + $0xa]]
        %v1055 = vld [vmem:[%s393 + $0x1] sm:$0xff]
        %v1056 = vld [vmem:[%s393 + $0x9] sm:$0xff]
        %v1057 = vld [vmem:[%s393 + $0x19] sm:$0xff]
        %v1058 = vld [vmem:[%s393 + $0x21] sm:$0xff]
        %v1059 = vstv %s1054
        %v1060 = vmul.f32 %v1059, %v1055
        %v1061 = vmul.f32 %v1059, %v1056
        %v1062 = vmul.f32 %v1059, %v1057
        %v1063 = vmul.f32 %v1059, %v1058
        %v1064 = vadd.f32 %v1050, %v1060
        %v1065 = vadd.f32 %v1051, %v1061
        %v1066 = vadd.f32 %v1052, %v1062
        %v1067 = vadd.f32 %v1053, %v1063
        %s1068 = sld [smem:[#allocation5 + $0x11]]
        %v1069 = vld [vmem:[%s393 + $0x2] sm:$0xff]
        %v1070 = vld [vmem:[%s393 + $0xa] sm:$0xff]
        %v1071 = vld [vmem:[%s393 + $0x1a] sm:$0xff]
        %v1072 = vld [vmem:[%s393 + $0x22] sm:$0xff]
        %v1073 = vstv %s1068
        %v1074 = vmul.f32 %v1073, %v1069
        %v1075 = vmul.f32 %v1073, %v1070
        %v1076 = vmul.f32 %v1073, %v1071
        %v1077 = vmul.f32 %v1073, %v1072
        %v1078 = vadd.f32 %v1064, %v1074
        %v1079 = vadd.f32 %v1065, %v1075
        %v1080 = vadd.f32 %v1066, %v1076
        %v1081 = vadd.f32 %v1067, %v1077
        %s1082 = sld [smem:[#allocation5 + $0x18]]
        %v1083 = vld [vmem:[%s393 + $0x3] sm:$0xff]
        %v1084 = vld [vmem:[%s393 + $0xb] sm:$0xff]
        %v1085 = vld [vmem:[%s393 + $0x1b] sm:$0xff]
        %v1086 = vld [vmem:[%s393 + $0x23] sm:$0xff]
        %v1087 = vstv %s1082
        %v1088 = vmul.f32 %v1087, %v1083
        %v1089 = vmul.f32 %v1087, %v1084
        %v1090 = vmul.f32 %v1087, %v1085
        %v1091 = vmul.f32 %v1087, %v1086
        %v1092 = vadd.f32 %v1078, %v1088
        %v1093 = vadd.f32 %v1079, %v1089
        %v1094 = vadd.f32 %v1080, %v1090
        %v1095 = vadd.f32 %v1081, %v1091
        %s1096 = sld [smem:[#allocation5 + $0x1f]]
        %v1097 = vld [vmem:[%s393 + $0x4] sm:$0xff]
        %v1098 = vld [vmem:[%s393 + $0xc] sm:$0xff]
        %v1099 = vld [vmem:[%s393 + $0x1c] sm:$0xff]
        %v1100 = vld [vmem:[%s393 + $0x24] sm:$0xff]
        %v1101 = vstv %s1096
        %v1102 = vmul.f32 %v1101, %v1097
        %v1103 = vmul.f32 %v1101, %v1098
        %v1104 = vmul.f32 %v1101, %v1099
        %v1105 = vmul.f32 %v1101, %v1100
        %v1106 = vadd.f32 %v1092, %v1102
        %v1107 = vadd.f32 %v1093, %v1103
        %v1108 = vadd.f32 %v1094, %v1104
        %v1109 = vadd.f32 %v1095, %v1105
        %s1110 = sld [smem:[#allocation5 + $0x26]]
        %v1111 = vld [vmem:[%s393 + $0x5] sm:$0xff]
        %v1112 = vld [vmem:[%s393 + $0xd] sm:$0xff]
        %v1113 = vld [vmem:[%s393 + $0x1d] sm:$0xff]
        %v1114 = vld [vmem:[%s393 + $0x25] sm:$0xff]
        %v1115 = vstv %s1110
        %v1116 = vmul.f32 %v1115, %v1111
        %v1117 = vmul.f32 %v1115, %v1112
        %v1118 = vmul.f32 %v1115, %v1113
        %v1119 = vmul.f32 %v1115, %v1114
        %v1120 = vadd.f32 %v1106, %v1116
        %v1121 = vadd.f32 %v1107, %v1117
        %v1122 = vadd.f32 %v1108, %v1118
        %v1123 = vadd.f32 %v1109, %v1119
        %s1124 = sld [smem:[#allocation5 + $0x2d]]
        %v1125 = vld [vmem:[%s393 + $0x6] sm:$0xff]
        %v1126 = vld [vmem:[%s393 + $0xe] sm:$0xff]
        %v1127 = vld [vmem:[%s393 + $0x1e] sm:$0xff]
        %v1128 = vld [vmem:[%s393 + $0x26] sm:$0xff]
        %v1129 = vstv %s1124
        %v1130 = vmul.f32 %v1129, %v1125
        %v1131 = vmul.f32 %v1129, %v1126
        %v1132 = vmul.f32 %v1129, %v1127
        %v1133 = vmul.f32 %v1129, %v1128
        %v1134 = vadd.f32 %v1120, %v1130
        %v1135 = vadd.f32 %v1121, %v1131
        %v1136 = vadd.f32 %v1122, %v1132
        %v1137 = vadd.f32 %v1123, %v1133
        %s1138 = sld [smem:[#allocation5 + $0x4]]
        %v1139 = vld [vmem:[%s430] sm:$0xff]
        %v1140 = vld [vmem:[%s430 + $0x8] sm:$0xff]
        %v1141 = vld [vmem:[%s430 + $0x18] sm:$0xff]
        %v1142 = vld [vmem:[%s430 + $0x20] sm:$0xff]
        %v1143 = vstv %s1138
        %v1144 = vmul.f32 %v1143, %v1139
        %v1145 = vmul.f32 %v1143, %v1140
        %v1146 = vmul.f32 %v1143, %v1141
        %v1147 = vmul.f32 %v1143, %v1142
        %v1148 = vadd.f32 %v1134, %v1144
        %v1149 = vadd.f32 %v1135, %v1145
        %v1150 = vadd.f32 %v1136, %v1146
        %v1151 = vadd.f32 %v1137, %v1147
        %s1152 = sld [smem:[#allocation5 + $0xb]]
        %v1153 = vld [vmem:[%s430 + $0x1] sm:$0xff]
        %v1154 = vld [vmem:[%s430 + $0x9] sm:$0xff]
        %v1155 = vld [vmem:[%s430 + $0x19] sm:$0xff]
        %v1156 = vld [vmem:[%s430 + $0x21] sm:$0xff]
        %v1157 = vstv %s1152
        %v1158 = vmul.f32 %v1157, %v1153
        %v1159 = vmul.f32 %v1157, %v1154
        %v1160 = vmul.f32 %v1157, %v1155
        %v1161 = vmul.f32 %v1157, %v1156
        %v1162 = vadd.f32 %v1148, %v1158
        %v1163 = vadd.f32 %v1149, %v1159
        %v1164 = vadd.f32 %v1150, %v1160
        %v1165 = vadd.f32 %v1151, %v1161
        %s1166 = sld [smem:[#allocation5 + $0x12]]
        %v1167 = vld [vmem:[%s430 + $0x2] sm:$0xff]
        %v1168 = vld [vmem:[%s430 + $0xa] sm:$0xff]
        %v1169 = vld [vmem:[%s430 + $0x1a] sm:$0xff]
        %v1170 = vld [vmem:[%s430 + $0x22] sm:$0xff]
        %v1171 = vstv %s1166
        %v1172 = vmul.f32 %v1171, %v1167
        %v1173 = vmul.f32 %v1171, %v1168
        %v1174 = vmul.f32 %v1171, %v1169
        %v1175 = vmul.f32 %v1171, %v1170
        %v1176 = vadd.f32 %v1162, %v1172
        %v1177 = vadd.f32 %v1163, %v1173
        %v1178 = vadd.f32 %v1164, %v1174
        %v1179 = vadd.f32 %v1165, %v1175
        %s1180 = sld [smem:[#allocation5 + $0x19]]
        %v1181 = vld [vmem:[%s430 + $0x3] sm:$0xff]
        %v1182 = vld [vmem:[%s430 + $0xb] sm:$0xff]
        %v1183 = vld [vmem:[%s430 + $0x1b] sm:$0xff]
        %v1184 = vld [vmem:[%s430 + $0x23] sm:$0xff]
        %v1185 = vstv %s1180
        %v1186 = vmul.f32 %v1185, %v1181
        %v1187 = vmul.f32 %v1185, %v1182
        %v1188 = vmul.f32 %v1185, %v1183
        %v1189 = vmul.f32 %v1185, %v1184
        %v1190 = vadd.f32 %v1176, %v1186
        %v1191 = vadd.f32 %v1177, %v1187
        %v1192 = vadd.f32 %v1178, %v1188
        %v1193 = vadd.f32 %v1179, %v1189
        %s1194 = sld [smem:[#allocation5 + $0x20]]
        %v1195 = vld [vmem:[%s430 + $0x4] sm:$0xff]
        %v1196 = vld [vmem:[%s430 + $0xc] sm:$0xff]
        %v1197 = vld [vmem:[%s430 + $0x1c] sm:$0xff]
        %v1198 = vld [vmem:[%s430 + $0x24] sm:$0xff]
        %v1199 = vstv %s1194
        %v1200 = vmul.f32 %v1199, %v1195
        %v1201 = vmul.f32 %v1199, %v1196
        %v1202 = vmul.f32 %v1199, %v1197
        %v1203 = vmul.f32 %v1199, %v1198
        %v1204 = vadd.f32 %v1190, %v1200
        %v1205 = vadd.f32 %v1191, %v1201
        %v1206 = vadd.f32 %v1192, %v1202
        %v1207 = vadd.f32 %v1193, %v1203
        %s1208 = sld [smem:[#allocation5 + $0x27]]
        %v1209 = vld [vmem:[%s430 + $0x5] sm:$0xff]
        %v1210 = vld [vmem:[%s430 + $0xd] sm:$0xff]
        %v1211 = vld [vmem:[%s430 + $0x1d] sm:$0xff]
        %v1212 = vld [vmem:[%s430 + $0x25] sm:$0xff]
        %v1213 = vstv %s1208
        %v1214 = vmul.f32 %v1213, %v1209
        %v1215 = vmul.f32 %v1213, %v1210
        %v1216 = vmul.f32 %v1213, %v1211
        %v1217 = vmul.f32 %v1213, %v1212
        %v1218 = vadd.f32 %v1204, %v1214
        %v1219 = vadd.f32 %v1205, %v1215
        %v1220 = vadd.f32 %v1206, %v1216
        %v1221 = vadd.f32 %v1207, %v1217
        %s1222 = sld [smem:[#allocation5 + $0x2e]]
        %v1223 = vld [vmem:[%s430 + $0x6] sm:$0xff]
        %v1224 = vld [vmem:[%s430 + $0xe] sm:$0xff]
        %v1225 = vld [vmem:[%s430 + $0x1e] sm:$0xff]
        %v1226 = vld [vmem:[%s430 + $0x26] sm:$0xff]
        %v1227 = vstv %s1222
        %v1228 = vmul.f32 %v1227, %v1223
        %v1229 = vmul.f32 %v1227, %v1224
        %v1230 = vmul.f32 %v1227, %v1225
        %v1231 = vmul.f32 %v1227, %v1226
        %v1232 = vadd.f32 %v1218, %v1228
        %v1233 = vadd.f32 %v1219, %v1229
        %v1234 = vadd.f32 %v1220, %v1230
        %v1235 = vadd.f32 %v1221, %v1231
        %s1236 = sld [smem:[#allocation5 + $0x5]]
        %v1237 = vld [vmem:[%s467] sm:$0xff]
        %v1238 = vld [vmem:[%s467 + $0x8] sm:$0xff]
        %v1239 = vld [vmem:[%s467 + $0x18] sm:$0xff]
        %v1240 = vld [vmem:[%s467 + $0x20] sm:$0xff]
        %v1241 = vstv %s1236
        %v1242 = vmul.f32 %v1241, %v1237
        %v1243 = vmul.f32 %v1241, %v1238
        %v1244 = vmul.f32 %v1241, %v1239
        %v1245 = vmul.f32 %v1241, %v1240
        %v1246 = vadd.f32 %v1232, %v1242
        %v1247 = vadd.f32 %v1233, %v1243
        %v1248 = vadd.f32 %v1234, %v1244
        %v1249 = vadd.f32 %v1235, %v1245
        %s1250 = sld [smem:[#allocation5 + $0xc]]
        %v1251 = vld [vmem:[%s467 + $0x1] sm:$0xff]
        %v1252 = vld [vmem:[%s467 + $0x9] sm:$0xff]
        %v1253 = vld [vmem:[%s467 + $0x19] sm:$0xff]
        %v1254 = vld [vmem:[%s467 + $0x21] sm:$0xff]
        %v1255 = vstv %s1250
        %v1256 = vmul.f32 %v1255, %v1251
        %v1257 = vmul.f32 %v1255, %v1252
        %v1258 = vmul.f32 %v1255, %v1253
        %v1259 = vmul.f32 %v1255, %v1254
        %v1260 = vadd.f32 %v1246, %v1256
        %v1261 = vadd.f32 %v1247, %v1257
        %v1262 = vadd.f32 %v1248, %v1258
        %v1263 = vadd.f32 %v1249, %v1259
        %s1264 = sld [smem:[#allocation5 + $0x13]]
        %v1265 = vld [vmem:[%s467 + $0x2] sm:$0xff]
        %v1266 = vld [vmem:[%s467 + $0xa] sm:$0xff]
        %v1267 = vld [vmem:[%s467 + $0x1a] sm:$0xff]
        %v1268 = vld [vmem:[%s467 + $0x22] sm:$0xff]
        %v1269 = vstv %s1264
        %v1270 = vmul.f32 %v1269, %v1265
        %v1271 = vmul.f32 %v1269, %v1266
        %v1272 = vmul.f32 %v1269, %v1267
        %v1273 = vmul.f32 %v1269, %v1268
        %v1274 = vadd.f32 %v1260, %v1270
        %v1275 = vadd.f32 %v1261, %v1271
        %v1276 = vadd.f32 %v1262, %v1272
        %v1277 = vadd.f32 %v1263, %v1273
        %s1278 = sld [smem:[#allocation5 + $0x1a]]
        %v1279 = vld [vmem:[%s467 + $0x3] sm:$0xff]
        %v1280 = vld [vmem:[%s467 + $0xb] sm:$0xff]
        %v1281 = vld [vmem:[%s467 + $0x1b] sm:$0xff]
        %v1282 = vld [vmem:[%s467 + $0x23] sm:$0xff]
        %v1283 = vstv %s1278
        %v1284 = vmul.f32 %v1283, %v1279
        %v1285 = vmul.f32 %v1283, %v1280
        %v1286 = vmul.f32 %v1283, %v1281
        %v1287 = vmul.f32 %v1283, %v1282
        %v1288 = vadd.f32 %v1274, %v1284
        %v1289 = vadd.f32 %v1275, %v1285
        %v1290 = vadd.f32 %v1276, %v1286
        %v1291 = vadd.f32 %v1277, %v1287
        %s1292 = sld [smem:[#allocation5 + $0x21]]
        %v1293 = vld [vmem:[%s467 + $0x4] sm:$0xff]
        %v1294 = vld [vmem:[%s467 + $0xc] sm:$0xff]
        %v1295 = vld [vmem:[%s467 + $0x1c] sm:$0xff]
        %v1296 = vld [vmem:[%s467 + $0x24] sm:$0xff]
        %v1297 = vstv %s1292
        %v1298 = vmul.f32 %v1297, %v1293
        %v1299 = vmul.f32 %v1297, %v1294
        %v1300 = vmul.f32 %v1297, %v1295
        %v1301 = vmul.f32 %v1297, %v1296
        %v1302 = vadd.f32 %v1288, %v1298
        %v1303 = vadd.f32 %v1289, %v1299
        %v1304 = vadd.f32 %v1290, %v1300
        %v1305 = vadd.f32 %v1291, %v1301
        %s1306 = sld [smem:[#allocation5 + $0x28]]
        %v1307 = vld [vmem:[%s467 + $0x5] sm:$0xff]
        %v1308 = vld [vmem:[%s467 + $0xd] sm:$0xff]
        %v1309 = vld [vmem:[%s467 + $0x1d] sm:$0xff]
        %v1310 = vld [vmem:[%s467 + $0x25] sm:$0xff]
        %v1311 = vstv %s1306
        %v1312 = vmul.f32 %v1311, %v1307
        %v1313 = vmul.f32 %v1311, %v1308
        %v1314 = vmul.f32 %v1311, %v1309
        %v1315 = vmul.f32 %v1311, %v1310
        %v1316 = vadd.f32 %v1302, %v1312
        %v1317 = vadd.f32 %v1303, %v1313
        %v1318 = vadd.f32 %v1304, %v1314
        %v1319 = vadd.f32 %v1305, %v1315
        %s1320 = sld [smem:[#allocation5 + $0x2f]]
        %v1321 = vld [vmem:[%s467 + $0x6] sm:$0xff]
        %v1322 = vld [vmem:[%s467 + $0xe] sm:$0xff]
        %v1323 = vld [vmem:[%s467 + $0x1e] sm:$0xff]
        %v1324 = vld [vmem:[%s467 + $0x26] sm:$0xff]
        %v1325 = vstv %s1320
        %v1326 = vmul.f32 %v1325, %v1321
        %v1327 = vmul.f32 %v1325, %v1322
        %v1328 = vmul.f32 %v1325, %v1323
        %v1329 = vmul.f32 %v1325, %v1324
        %v1330 = vadd.f32 %v1316, %v1326
        %v1331 = vadd.f32 %v1317, %v1327
        %v1332 = vadd.f32 %v1318, %v1328
        %v1333 = vadd.f32 %v1319, %v1329
        %s1334 = sld [smem:[#allocation5 + $0x6]]
        %v1335 = vld [vmem:[%s504] sm:$0xff]
        %v1336 = vld [vmem:[%s504 + $0x8] sm:$0xff]
        %v1337 = vld [vmem:[%s504 + $0x18] sm:$0xff]
        %v1338 = vld [vmem:[%s504 + $0x20] sm:$0xff]
        %v1339 = vstv %s1334
        %v1340 = vmul.f32 %v1339, %v1335
        %v1341 = vmul.f32 %v1339, %v1336
        %v1342 = vmul.f32 %v1339, %v1337
        %v1343 = vmul.f32 %v1339, %v1338
        %v1344 = vadd.f32 %v1330, %v1340
        %v1345 = vadd.f32 %v1331, %v1341
        %v1346 = vadd.f32 %v1332, %v1342
        %v1347 = vadd.f32 %v1333, %v1343
        %s1348 = sld [smem:[#allocation5 + $0xd]]
        %v1349 = vld [vmem:[%s504 + $0x1] sm:$0xff]
        %v1350 = vld [vmem:[%s504 + $0x9] sm:$0xff]
        %v1351 = vld [vmem:[%s504 + $0x19] sm:$0xff]
        %v1352 = vld [vmem:[%s504 + $0x21] sm:$0xff]
        %v1353 = vstv %s1348
        %v1354 = vmul.f32 %v1353, %v1349
        %v1355 = vmul.f32 %v1353, %v1350
        %v1356 = vmul.f32 %v1353, %v1351
        %v1357 = vmul.f32 %v1353, %v1352
        %v1358 = vadd.f32 %v1344, %v1354
        %v1359 = vadd.f32 %v1345, %v1355
        %v1360 = vadd.f32 %v1346, %v1356
        %v1361 = vadd.f32 %v1347, %v1357
        %s1362 = sld [smem:[#allocation5 + $0x14]]
        %v1363 = vld [vmem:[%s504 + $0x2] sm:$0xff]
        %v1364 = vld [vmem:[%s504 + $0xa] sm:$0xff]
        %v1365 = vld [vmem:[%s504 + $0x1a] sm:$0xff]
        %v1366 = vld [vmem:[%s504 + $0x22] sm:$0xff]
        %v1367 = vstv %s1362
        %v1368 = vmul.f32 %v1367, %v1363
        %v1369 = vmul.f32 %v1367, %v1364
        %v1370 = vmul.f32 %v1367, %v1365
        %v1371 = vmul.f32 %v1367, %v1366
        %v1372 = vadd.f32 %v1358, %v1368
        %v1373 = vadd.f32 %v1359, %v1369
        %v1374 = vadd.f32 %v1360, %v1370
        %v1375 = vadd.f32 %v1361, %v1371
        %s1376 = sld [smem:[#allocation5 + $0x1b]]
        %v1377 = vld [vmem:[%s504 + $0x3] sm:$0xff]
        %v1378 = vld [vmem:[%s504 + $0xb] sm:$0xff]
        %v1379 = vld [vmem:[%s504 + $0x1b] sm:$0xff]
        %v1380 = vld [vmem:[%s504 + $0x23] sm:$0xff]
        %v1381 = vstv %s1376
        %v1382 = vmul.f32 %v1381, %v1377
        %v1383 = vmul.f32 %v1381, %v1378
        %v1384 = vmul.f32 %v1381, %v1379
        %v1385 = vmul.f32 %v1381, %v1380
        %v1386 = vadd.f32 %v1372, %v1382
        %v1387 = vadd.f32 %v1373, %v1383
        %v1388 = vadd.f32 %v1374, %v1384
        %v1389 = vadd.f32 %v1375, %v1385
        %s1390 = sld [smem:[#allocation5 + $0x22]]
        %v1391 = vld [vmem:[%s504 + $0x4] sm:$0xff]
        %v1392 = vld [vmem:[%s504 + $0xc] sm:$0xff]
        %v1393 = vld [vmem:[%s504 + $0x1c] sm:$0xff]
        %v1394 = vld [vmem:[%s504 + $0x24] sm:$0xff]
        %v1395 = vstv %s1390
        %v1396 = vmul.f32 %v1395, %v1391
        %v1397 = vmul.f32 %v1395, %v1392
        %v1398 = vmul.f32 %v1395, %v1393
        %v1399 = vmul.f32 %v1395, %v1394
        %v1400 = vadd.f32 %v1386, %v1396
        %v1401 = vadd.f32 %v1387, %v1397
        %v1402 = vadd.f32 %v1388, %v1398
        %v1403 = vadd.f32 %v1389, %v1399
        %s1404 = sld [smem:[#allocation5 + $0x29]]
        %v1405 = vld [vmem:[%s504 + $0x5] sm:$0xff]
        %v1406 = vld [vmem:[%s504 + $0xd] sm:$0xff]
        %v1407 = vld [vmem:[%s504 + $0x1d] sm:$0xff]
        %v1408 = vld [vmem:[%s504 + $0x25] sm:$0xff]
        %v1409 = vstv %s1404
        %v1410 = vmul.f32 %v1409, %v1405
        %v1411 = vmul.f32 %v1409, %v1406
        %v1412 = vmul.f32 %v1409, %v1407
        %v1413 = vmul.f32 %v1409, %v1408
        %v1414 = vadd.f32 %v1400, %v1410
        %v1415 = vadd.f32 %v1401, %v1411
        %v1416 = vadd.f32 %v1402, %v1412
        %v1417 = vadd.f32 %v1403, %v1413
        %s1418 = sld [smem:[#allocation5 + $0x30]]
        %v1419 = vld [vmem:[%s504 + $0x6] sm:$0xff]
        %v1420 = vld [vmem:[%s504 + $0xe] sm:$0xff]
        %v1421 = vld [vmem:[%s504 + $0x1e] sm:$0xff]
        %v1422 = vld [vmem:[%s504 + $0x26] sm:$0xff]
        %v1423 = vstv %s1418
        %v1424 = vmul.f32 %v1423, %v1419
        %v1425 = vmul.f32 %v1423, %v1420
        %v1426 = vmul.f32 %v1423, %v1421
        %v1427 = vmul.f32 %v1423, %v1422
        %v1428 = vadd.f32 %v1414, %v1424
        %v1429 = vadd.f32 %v1415, %v1425
        %v1430 = vadd.f32 %v1416, %v1426
        %v1431 = vadd.f32 %v1417, %v1427
        %s1432 = sld [smem:[#allocation5 + $0x31]]
        %v1433 = vld [vmem:[%s517] sm:$0xff]
        %v1434 = vld [vmem:[%s517 + $0x8] sm:$0xff]
        %v1435 = vld [vmem:[%s517 + $0x18] sm:$0xff]
        %v1436 = vld [vmem:[%s517 + $0x20] sm:$0xff]
        %v1437 = vstv %s1432
        %v1438 = vmul.f32 %v1437, %v1433
        %v1439 = vmul.f32 %v1437, %v1434
        %v1440 = vmul.f32 %v1437, %v1435
        %v1441 = vmul.f32 %v1437, %v1436
        %v1442 = vadd.f32 %v1428, %v1438
        %v1443 = vadd.f32 %v1429, %v1439
        %v1444 = vadd.f32 %v1430, %v1440
        %v1445 = vadd.f32 %v1431, %v1441
        %s1446 = sld [smem:[#allocation5 + $0x38]]
        %v1447 = vld [vmem:[%s517 + $0x1] sm:$0xff]
        %v1448 = vld [vmem:[%s517 + $0x9] sm:$0xff]
        %v1449 = vld [vmem:[%s517 + $0x19] sm:$0xff]
        %v1450 = vld [vmem:[%s517 + $0x21] sm:$0xff]
        %v1451 = vstv %s1446
        %v1452 = vmul.f32 %v1451, %v1447
        %v1453 = vmul.f32 %v1451, %v1448
        %v1454 = vmul.f32 %v1451, %v1449
        %v1455 = vmul.f32 %v1451, %v1450
        %v1456 = vadd.f32 %v1442, %v1452
        %v1457 = vadd.f32 %v1443, %v1453
        %v1458 = vadd.f32 %v1444, %v1454
        %v1459 = vadd.f32 %v1445, %v1455
        %s1460 = sld [smem:[#allocation5 + $0x3f]]
        %v1461 = vld [vmem:[%s517 + $0x2] sm:$0xff]
        %v1462 = vld [vmem:[%s517 + $0xa] sm:$0xff]
        %v1463 = vld [vmem:[%s517 + $0x1a] sm:$0xff]
        %v1464 = vld [vmem:[%s517 + $0x22] sm:$0xff]
        %v1465 = vstv %s1460
        %v1466 = vmul.f32 %v1465, %v1461
        %v1467 = vmul.f32 %v1465, %v1462
        %v1468 = vmul.f32 %v1465, %v1463
        %v1469 = vmul.f32 %v1465, %v1464
        %v1470 = vadd.f32 %v1456, %v1466
        %v1471 = vadd.f32 %v1457, %v1467
        %v1472 = vadd.f32 %v1458, %v1468
        %v1473 = vadd.f32 %v1459, %v1469
        %s1474 = sld [smem:[#allocation5 + $0x46]]
        %v1475 = vld [vmem:[%s517 + $0x3] sm:$0xff]
        %v1476 = vld [vmem:[%s517 + $0xb] sm:$0xff]
        %v1477 = vld [vmem:[%s517 + $0x1b] sm:$0xff]
        %v1478 = vld [vmem:[%s517 + $0x23] sm:$0xff]
        %v1479 = vstv %s1474
        %v1480 = vmul.f32 %v1479, %v1475
        %v1481 = vmul.f32 %v1479, %v1476
        %v1482 = vmul.f32 %v1479, %v1477
        %v1483 = vmul.f32 %v1479, %v1478
        %v1484 = vadd.f32 %v1470, %v1480
        %v1485 = vadd.f32 %v1471, %v1481
        %v1486 = vadd.f32 %v1472, %v1482
        %v1487 = vadd.f32 %v1473, %v1483
        %s1488 = sld [smem:[#allocation5 + $0x4d]]
        %v1489 = vld [vmem:[%s517 + $0x4] sm:$0xff]
        %v1490 = vld [vmem:[%s517 + $0xc] sm:$0xff]
        %v1491 = vld [vmem:[%s517 + $0x1c] sm:$0xff]
        %v1492 = vld [vmem:[%s517 + $0x24] sm:$0xff]
        %v1493 = vstv %s1488
        %v1494 = vmul.f32 %v1493, %v1489
        %v1495 = vmul.f32 %v1493, %v1490
        %v1496 = vmul.f32 %v1493, %v1491
        %v1497 = vmul.f32 %v1493, %v1492
        %v1498 = vadd.f32 %v1484, %v1494
        %v1499 = vadd.f32 %v1485, %v1495
        %v1500 = vadd.f32 %v1486, %v1496
        %v1501 = vadd.f32 %v1487, %v1497
        %s1502 = sld [smem:[#allocation5 + $0x54]]
        %v1503 = vld [vmem:[%s517 + $0x5] sm:$0xff]
        %v1504 = vld [vmem:[%s517 + $0xd] sm:$0xff]
        %v1505 = vld [vmem:[%s517 + $0x1d] sm:$0xff]
        %v1506 = vld [vmem:[%s517 + $0x25] sm:$0xff]
        %v1507 = vstv %s1502
        %v1508 = vmul.f32 %v1507, %v1503
        %v1509 = vmul.f32 %v1507, %v1504
        %v1510 = vmul.f32 %v1507, %v1505
        %v1511 = vmul.f32 %v1507, %v1506
        %v1512 = vadd.f32 %v1498, %v1508
        %v1513 = vadd.f32 %v1499, %v1509
        %v1514 = vadd.f32 %v1500, %v1510
        %v1515 = vadd.f32 %v1501, %v1511
        %s1516 = sld [smem:[#allocation5 + $0x5b]]
        %v1517 = vld [vmem:[%s517 + $0x6] sm:$0xff]
        %v1518 = vld [vmem:[%s517 + $0xe] sm:$0xff]
        %v1519 = vld [vmem:[%s517 + $0x1e] sm:$0xff]
        %v1520 = vld [vmem:[%s517 + $0x26] sm:$0xff]
        %v1521 = vstv %s1516
        %v1522 = vmul.f32 %v1521, %v1517
        %v1523 = vmul.f32 %v1521, %v1518
        %v1524 = vmul.f32 %v1521, %v1519
        %v1525 = vmul.f32 %v1521, %v1520
        %v1526 = vadd.f32 %v1512, %v1522
        %v1527 = vadd.f32 %v1513, %v1523
        %v1528 = vadd.f32 %v1514, %v1524
        %v1529 = vadd.f32 %v1515, %v1525
        %s1530 = sld [smem:[#allocation5 + $0x32]]
        %v1531 = vld [vmem:[%s554] sm:$0xff]
        %v1532 = vld [vmem:[%s554 + $0x8] sm:$0xff]
        %v1533 = vld [vmem:[%s554 + $0x18] sm:$0xff]
        %v1534 = vld [vmem:[%s554 + $0x20] sm:$0xff]
        %v1535 = vstv %s1530
        %v1536 = vmul.f32 %v1535, %v1531
        %v1537 = vmul.f32 %v1535, %v1532
        %v1538 = vmul.f32 %v1535, %v1533
        %v1539 = vmul.f32 %v1535, %v1534
        %v1540 = vadd.f32 %v1526, %v1536
        %v1541 = vadd.f32 %v1527, %v1537
        %v1542 = vadd.f32 %v1528, %v1538
        %v1543 = vadd.f32 %v1529, %v1539
        %s1544 = sld [smem:[#allocation5 + $0x39]]
        %v1545 = vld [vmem:[%s554 + $0x1] sm:$0xff]
        %v1546 = vld [vmem:[%s554 + $0x9] sm:$0xff]
        %v1547 = vld [vmem:[%s554 + $0x19] sm:$0xff]
        %v1548 = vld [vmem:[%s554 + $0x21] sm:$0xff]
        %v1549 = vstv %s1544
        %v1550 = vmul.f32 %v1549, %v1545
        %v1551 = vmul.f32 %v1549, %v1546
        %v1552 = vmul.f32 %v1549, %v1547
        %v1553 = vmul.f32 %v1549, %v1548
        %v1554 = vadd.f32 %v1540, %v1550
        %v1555 = vadd.f32 %v1541, %v1551
        %v1556 = vadd.f32 %v1542, %v1552
        %v1557 = vadd.f32 %v1543, %v1553
        %s1558 = sld [smem:[#allocation5 + $0x40]]
        %v1559 = vld [vmem:[%s554 + $0x2] sm:$0xff]
        %v1560 = vld [vmem:[%s554 + $0xa] sm:$0xff]
        %v1561 = vld [vmem:[%s554 + $0x1a] sm:$0xff]
        %v1562 = vld [vmem:[%s554 + $0x22] sm:$0xff]
        %v1563 = vstv %s1558
        %v1564 = vmul.f32 %v1563, %v1559
        %v1565 = vmul.f32 %v1563, %v1560
        %v1566 = vmul.f32 %v1563, %v1561
        %v1567 = vmul.f32 %v1563, %v1562
        %v1568 = vadd.f32 %v1554, %v1564
        %v1569 = vadd.f32 %v1555, %v1565
        %v1570 = vadd.f32 %v1556, %v1566
        %v1571 = vadd.f32 %v1557, %v1567
        %s1572 = sld [smem:[#allocation5 + $0x47]]
        %v1573 = vld [vmem:[%s554 + $0x3] sm:$0xff]
        %v1574 = vld [vmem:[%s554 + $0xb] sm:$0xff]
        %v1575 = vld [vmem:[%s554 + $0x1b] sm:$0xff]
        %v1576 = vld [vmem:[%s554 + $0x23] sm:$0xff]
        %v1577 = vstv %s1572
        %v1578 = vmul.f32 %v1577, %v1573
        %v1579 = vmul.f32 %v1577, %v1574
        %v1580 = vmul.f32 %v1577, %v1575
        %v1581 = vmul.f32 %v1577, %v1576
        %v1582 = vadd.f32 %v1568, %v1578
        %v1583 = vadd.f32 %v1569, %v1579
        %v1584 = vadd.f32 %v1570, %v1580
        %v1585 = vadd.f32 %v1571, %v1581
        %s1586 = sld [smem:[#allocation5 + $0x4e]]
        %v1587 = vld [vmem:[%s554 + $0x4] sm:$0xff]
        %v1588 = vld [vmem:[%s554 + $0xc] sm:$0xff]
        %v1589 = vld [vmem:[%s554 + $0x1c] sm:$0xff]
        %v1590 = vld [vmem:[%s554 + $0x24] sm:$0xff]
        %v1591 = vstv %s1586
        %v1592 = vmul.f32 %v1591, %v1587
        %v1593 = vmul.f32 %v1591, %v1588
        %v1594 = vmul.f32 %v1591, %v1589
        %v1595 = vmul.f32 %v1591, %v1590
        %v1596 = vadd.f32 %v1582, %v1592
        %v1597 = vadd.f32 %v1583, %v1593
        %v1598 = vadd.f32 %v1584, %v1594
        %v1599 = vadd.f32 %v1585, %v1595
        %s1600 = sld [smem:[#allocation5 + $0x55]]
        %v1601 = vld [vmem:[%s554 + $0x5] sm:$0xff]
        %v1602 = vld [vmem:[%s554 + $0xd] sm:$0xff]
        %v1603 = vld [vmem:[%s554 + $0x1d] sm:$0xff]
        %v1604 = vld [vmem:[%s554 + $0x25] sm:$0xff]
        %v1605 = vstv %s1600
        %v1606 = vmul.f32 %v1605, %v1601
        %v1607 = vmul.f32 %v1605, %v1602
        %v1608 = vmul.f32 %v1605, %v1603
        %v1609 = vmul.f32 %v1605, %v1604
        %v1610 = vadd.f32 %v1596, %v1606
        %v1611 = vadd.f32 %v1597, %v1607
        %v1612 = vadd.f32 %v1598, %v1608
        %v1613 = vadd.f32 %v1599, %v1609
        %s1614 = sld [smem:[#allocation5 + $0x5c]]
        %v1615 = vld [vmem:[%s554 + $0x6] sm:$0xff]
        %v1616 = vld [vmem:[%s554 + $0xe] sm:$0xff]
        %v1617 = vld [vmem:[%s554 + $0x1e] sm:$0xff]
        %v1618 = vld [vmem:[%s554 + $0x26] sm:$0xff]
        %v1619 = vstv %s1614
        %v1620 = vmul.f32 %v1619, %v1615
        %v1621 = vmul.f32 %v1619, %v1616
        %v1622 = vmul.f32 %v1619, %v1617
        %v1623 = vmul.f32 %v1619, %v1618
        %v1624 = vadd.f32 %v1610, %v1620
        %v1625 = vadd.f32 %v1611, %v1621
        %v1626 = vadd.f32 %v1612, %v1622
        %v1627 = vadd.f32 %v1613, %v1623
        %s1628 = sld [smem:[#allocation5 + $0x33]]
        %v1629 = vld [vmem:[%s591] sm:$0xff]
        %v1630 = vld [vmem:[%s591 + $0x8] sm:$0xff]
        %v1631 = vld [vmem:[%s591 + $0x18] sm:$0xff]
        %v1632 = vld [vmem:[%s591 + $0x20] sm:$0xff]
        %v1633 = vstv %s1628
        %v1634 = vmul.f32 %v1633, %v1629
        %v1635 = vmul.f32 %v1633, %v1630
        %v1636 = vmul.f32 %v1633, %v1631
        %v1637 = vmul.f32 %v1633, %v1632
        %v1638 = vadd.f32 %v1624, %v1634
        %v1639 = vadd.f32 %v1625, %v1635
        %v1640 = vadd.f32 %v1626, %v1636
        %v1641 = vadd.f32 %v1627, %v1637
        %s1642 = sld [smem:[#allocation5 + $0x3a]]
        %v1643 = vld [vmem:[%s591 + $0x1] sm:$0xff]
        %v1644 = vld [vmem:[%s591 + $0x9] sm:$0xff]
        %v1645 = vld [vmem:[%s591 + $0x19] sm:$0xff]
        %v1646 = vld [vmem:[%s591 + $0x21] sm:$0xff]
        %v1647 = vstv %s1642
        %v1648 = vmul.f32 %v1647, %v1643
        %v1649 = vmul.f32 %v1647, %v1644
        %v1650 = vmul.f32 %v1647, %v1645
        %v1651 = vmul.f32 %v1647, %v1646
        %v1652 = vadd.f32 %v1638, %v1648
        %v1653 = vadd.f32 %v1639, %v1649
        %v1654 = vadd.f32 %v1640, %v1650
        %v1655 = vadd.f32 %v1641, %v1651
        %s1656 = sld [smem:[#allocation5 + $0x41]]
        %v1657 = vld [vmem:[%s591 + $0x2] sm:$0xff]
        %v1658 = vld [vmem:[%s591 + $0xa] sm:$0xff]
        %v1659 = vld [vmem:[%s591 + $0x1a] sm:$0xff]
        %v1660 = vld [vmem:[%s591 + $0x22] sm:$0xff]
        %v1661 = vstv %s1656
        %v1662 = vmul.f32 %v1661, %v1657
        %v1663 = vmul.f32 %v1661, %v1658
        %v1664 = vmul.f32 %v1661, %v1659
        %v1665 = vmul.f32 %v1661, %v1660
        %v1666 = vadd.f32 %v1652, %v1662
        %v1667 = vadd.f32 %v1653, %v1663
        %v1668 = vadd.f32 %v1654, %v1664
        %v1669 = vadd.f32 %v1655, %v1665
        %s1670 = sld [smem:[#allocation5 + $0x48]]
        %v1671 = vld [vmem:[%s591 + $0x3] sm:$0xff]
        %v1672 = vld [vmem:[%s591 + $0xb] sm:$0xff]
        %v1673 = vld [vmem:[%s591 + $0x1b] sm:$0xff]
        %v1674 = vld [vmem:[%s591 + $0x23] sm:$0xff]
        %v1675 = vstv %s1670
        %v1676 = vmul.f32 %v1675, %v1671
        %v1677 = vmul.f32 %v1675, %v1672
        %v1678 = vmul.f32 %v1675, %v1673
        %v1679 = vmul.f32 %v1675, %v1674
        %v1680 = vadd.f32 %v1666, %v1676
        %v1681 = vadd.f32 %v1667, %v1677
        %v1682 = vadd.f32 %v1668, %v1678
        %v1683 = vadd.f32 %v1669, %v1679
        %s1684 = sld [smem:[#allocation5 + $0x4f]]
        %v1685 = vld [vmem:[%s591 + $0x4] sm:$0xff]
        %v1686 = vld [vmem:[%s591 + $0xc] sm:$0xff]
        %v1687 = vld [vmem:[%s591 + $0x1c] sm:$0xff]
        %v1688 = vld [vmem:[%s591 + $0x24] sm:$0xff]
        %v1689 = vstv %s1684
        %v1690 = vmul.f32 %v1689, %v1685
        %v1691 = vmul.f32 %v1689, %v1686
        %v1692 = vmul.f32 %v1689, %v1687
        %v1693 = vmul.f32 %v1689, %v1688
        %v1694 = vadd.f32 %v1680, %v1690
        %v1695 = vadd.f32 %v1681, %v1691
        %v1696 = vadd.f32 %v1682, %v1692
        %v1697 = vadd.f32 %v1683, %v1693
        %s1698 = sld [smem:[#allocation5 + $0x56]]
        %v1699 = vld [vmem:[%s591 + $0x5] sm:$0xff]
        %v1700 = vld [vmem:[%s591 + $0xd] sm:$0xff]
        %v1701 = vld [vmem:[%s591 + $0x1d] sm:$0xff]
        %v1702 = vld [vmem:[%s591 + $0x25] sm:$0xff]
        %v1703 = vstv %s1698
        %v1704 = vmul.f32 %v1703, %v1699
        %v1705 = vmul.f32 %v1703, %v1700
        %v1706 = vmul.f32 %v1703, %v1701
        %v1707 = vmul.f32 %v1703, %v1702
        %v1708 = vadd.f32 %v1694, %v1704
        %v1709 = vadd.f32 %v1695, %v1705
        %v1710 = vadd.f32 %v1696, %v1706
        %v1711 = vadd.f32 %v1697, %v1707
        %s1712 = sld [smem:[#allocation5 + $0x5d]]
        %v1713 = vld [vmem:[%s591 + $0x6] sm:$0xff]
        %v1714 = vld [vmem:[%s591 + $0xe] sm:$0xff]
        %v1715 = vld [vmem:[%s591 + $0x1e] sm:$0xff]
        %v1716 = vld [vmem:[%s591 + $0x26] sm:$0xff]
        %v1717 = vstv %s1712
        %v1718 = vmul.f32 %v1717, %v1713
        %v1719 = vmul.f32 %v1717, %v1714
        %v1720 = vmul.f32 %v1717, %v1715
        %v1721 = vmul.f32 %v1717, %v1716
        %v1722 = vadd.f32 %v1708, %v1718
        %v1723 = vadd.f32 %v1709, %v1719
        %v1724 = vadd.f32 %v1710, %v1720
        %v1725 = vadd.f32 %v1711, %v1721
        %s1726 = sld [smem:[#allocation5 + $0x34]]
        %v1727 = vld [vmem:[%s628] sm:$0xff]
        %v1728 = vld [vmem:[%s628 + $0x8] sm:$0xff]
        %v1729 = vld [vmem:[%s628 + $0x18] sm:$0xff]
        %v1730 = vld [vmem:[%s628 + $0x20] sm:$0xff]
        %v1731 = vstv %s1726
        %v1732 = vmul.f32 %v1731, %v1727
        %v1733 = vmul.f32 %v1731, %v1728
        %v1734 = vmul.f32 %v1731, %v1729
        %v1735 = vmul.f32 %v1731, %v1730
        %v1736 = vadd.f32 %v1722, %v1732
        %v1737 = vadd.f32 %v1723, %v1733
        %v1738 = vadd.f32 %v1724, %v1734
        %v1739 = vadd.f32 %v1725, %v1735
        %s1740 = sld [smem:[#allocation5 + $0x3b]]
        %v1741 = vld [vmem:[%s628 + $0x1] sm:$0xff]
        %v1742 = vld [vmem:[%s628 + $0x9] sm:$0xff]
        %v1743 = vld [vmem:[%s628 + $0x19] sm:$0xff]
        %v1744 = vld [vmem:[%s628 + $0x21] sm:$0xff]
        %v1745 = vstv %s1740
        %v1746 = vmul.f32 %v1745, %v1741
        %v1747 = vmul.f32 %v1745, %v1742
        %v1748 = vmul.f32 %v1745, %v1743
        %v1749 = vmul.f32 %v1745, %v1744
        %v1750 = vadd.f32 %v1736, %v1746
        %v1751 = vadd.f32 %v1737, %v1747
        %v1752 = vadd.f32 %v1738, %v1748
        %v1753 = vadd.f32 %v1739, %v1749
        %s1754 = sld [smem:[#allocation5 + $0x42]]
        %v1755 = vld [vmem:[%s628 + $0x2] sm:$0xff]
        %v1756 = vld [vmem:[%s628 + $0xa] sm:$0xff]
        %v1757 = vld [vmem:[%s628 + $0x1a] sm:$0xff]
        %v1758 = vld [vmem:[%s628 + $0x22] sm:$0xff]
        %v1759 = vstv %s1754
        %v1760 = vmul.f32 %v1759, %v1755
        %v1761 = vmul.f32 %v1759, %v1756
        %v1762 = vmul.f32 %v1759, %v1757
        %v1763 = vmul.f32 %v1759, %v1758
        %v1764 = vadd.f32 %v1750, %v1760
        %v1765 = vadd.f32 %v1751, %v1761
        %v1766 = vadd.f32 %v1752, %v1762
        %v1767 = vadd.f32 %v1753, %v1763
        %s1768 = sld [smem:[#allocation5 + $0x49]]
        %v1769 = vld [vmem:[%s628 + $0x3] sm:$0xff]
        %v1770 = vld [vmem:[%s628 + $0xb] sm:$0xff]
        %v1771 = vld [vmem:[%s628 + $0x1b] sm:$0xff]
        %v1772 = vld [vmem:[%s628 + $0x23] sm:$0xff]
        %v1773 = vstv %s1768
        %v1774 = vmul.f32 %v1773, %v1769
        %v1775 = vmul.f32 %v1773, %v1770
        %v1776 = vmul.f32 %v1773, %v1771
        %v1777 = vmul.f32 %v1773, %v1772
        %v1778 = vadd.f32 %v1764, %v1774
        %v1779 = vadd.f32 %v1765, %v1775
        %v1780 = vadd.f32 %v1766, %v1776
        %v1781 = vadd.f32 %v1767, %v1777
        %s1782 = sld [smem:[#allocation5 + $0x50]]
        %v1783 = vld [vmem:[%s628 + $0x4] sm:$0xff]
        %v1784 = vld [vmem:[%s628 + $0xc] sm:$0xff]
        %v1785 = vld [vmem:[%s628 + $0x1c] sm:$0xff]
        %v1786 = vld [vmem:[%s628 + $0x24] sm:$0xff]
        %v1787 = vstv %s1782
        %v1788 = vmul.f32 %v1787, %v1783
        %v1789 = vmul.f32 %v1787, %v1784
        %v1790 = vmul.f32 %v1787, %v1785
        %v1791 = vmul.f32 %v1787, %v1786
        %v1792 = vadd.f32 %v1778, %v1788
        %v1793 = vadd.f32 %v1779, %v1789
        %v1794 = vadd.f32 %v1780, %v1790
        %v1795 = vadd.f32 %v1781, %v1791
        %s1796 = sld [smem:[#allocation5 + $0x57]]
        %v1797 = vld [vmem:[%s628 + $0x5] sm:$0xff]
        %v1798 = vld [vmem:[%s628 + $0xd] sm:$0xff]
        %v1799 = vld [vmem:[%s628 + $0x1d] sm:$0xff]
        %v1800 = vld [vmem:[%s628 + $0x25] sm:$0xff]
        %v1801 = vstv %s1796
        %v1802 = vmul.f32 %v1801, %v1797
        %v1803 = vmul.f32 %v1801, %v1798
        %v1804 = vmul.f32 %v1801, %v1799
        %v1805 = vmul.f32 %v1801, %v1800
        %v1806 = vadd.f32 %v1792, %v1802
        %v1807 = vadd.f32 %v1793, %v1803
        %v1808 = vadd.f32 %v1794, %v1804
        %v1809 = vadd.f32 %v1795, %v1805
        %s1810 = sld [smem:[#allocation5 + $0x5e]]
        %v1811 = vld [vmem:[%s628 + $0x6] sm:$0xff]
        %v1812 = vld [vmem:[%s628 + $0xe] sm:$0xff]
        %v1813 = vld [vmem:[%s628 + $0x1e] sm:$0xff]
        %v1814 = vld [vmem:[%s628 + $0x26] sm:$0xff]
        %v1815 = vstv %s1810
        %v1816 = vmul.f32 %v1815, %v1811
        %v1817 = vmul.f32 %v1815, %v1812
        %v1818 = vmul.f32 %v1815, %v1813
        %v1819 = vmul.f32 %v1815, %v1814
        %v1820 = vadd.f32 %v1806, %v1816
        %v1821 = vadd.f32 %v1807, %v1817
        %v1822 = vadd.f32 %v1808, %v1818
        %v1823 = vadd.f32 %v1809, %v1819
        %s1824 = sld [smem:[#allocation5 + $0x35]]
        %v1825 = vld [vmem:[%s665] sm:$0xff]
        %v1826 = vld [vmem:[%s665 + $0x8] sm:$0xff]
        %v1827 = vld [vmem:[%s665 + $0x18] sm:$0xff]
        %v1828 = vld [vmem:[%s665 + $0x20] sm:$0xff]
        %v1829 = vstv %s1824
        %v1830 = vmul.f32 %v1829, %v1825
        %v1831 = vmul.f32 %v1829, %v1826
        %v1832 = vmul.f32 %v1829, %v1827
        %v1833 = vmul.f32 %v1829, %v1828
        %v1834 = vadd.f32 %v1820, %v1830
        %v1835 = vadd.f32 %v1821, %v1831
        %v1836 = vadd.f32 %v1822, %v1832
        %v1837 = vadd.f32 %v1823, %v1833
        %s1838 = sld [smem:[#allocation5 + $0x3c]]
        %v1839 = vld [vmem:[%s665 + $0x1] sm:$0xff]
        %v1840 = vld [vmem:[%s665 + $0x9] sm:$0xff]
        %v1841 = vld [vmem:[%s665 + $0x19] sm:$0xff]
        %v1842 = vld [vmem:[%s665 + $0x21] sm:$0xff]
        %v1843 = vstv %s1838
        %v1844 = vmul.f32 %v1843, %v1839
        %v1845 = vmul.f32 %v1843, %v1840
        %v1846 = vmul.f32 %v1843, %v1841
        %v1847 = vmul.f32 %v1843, %v1842
        %v1848 = vadd.f32 %v1834, %v1844
        %v1849 = vadd.f32 %v1835, %v1845
        %v1850 = vadd.f32 %v1836, %v1846
        %v1851 = vadd.f32 %v1837, %v1847
        %s1852 = sld [smem:[#allocation5 + $0x43]]
        %v1853 = vld [vmem:[%s665 + $0x2] sm:$0xff]
        %v1854 = vld [vmem:[%s665 + $0xa] sm:$0xff]
        %v1855 = vld [vmem:[%s665 + $0x1a] sm:$0xff]
        %v1856 = vld [vmem:[%s665 + $0x22] sm:$0xff]
        %v1857 = vstv %s1852
        %v1858 = vmul.f32 %v1857, %v1853
        %v1859 = vmul.f32 %v1857, %v1854
        %v1860 = vmul.f32 %v1857, %v1855
        %v1861 = vmul.f32 %v1857, %v1856
        %v1862 = vadd.f32 %v1848, %v1858
        %v1863 = vadd.f32 %v1849, %v1859
        %v1864 = vadd.f32 %v1850, %v1860
        %v1865 = vadd.f32 %v1851, %v1861
        %s1866 = sld [smem:[#allocation5 + $0x4a]]
        %v1867 = vld [vmem:[%s665 + $0x3] sm:$0xff]
        %v1868 = vld [vmem:[%s665 + $0xb] sm:$0xff]
        %v1869 = vld [vmem:[%s665 + $0x1b] sm:$0xff]
        %v1870 = vld [vmem:[%s665 + $0x23] sm:$0xff]
        %v1871 = vstv %s1866
        %v1872 = vmul.f32 %v1871, %v1867
        %v1873 = vmul.f32 %v1871, %v1868
        %v1874 = vmul.f32 %v1871, %v1869
        %v1875 = vmul.f32 %v1871, %v1870
        %v1876 = vadd.f32 %v1862, %v1872
        %v1877 = vadd.f32 %v1863, %v1873
        %v1878 = vadd.f32 %v1864, %v1874
        %v1879 = vadd.f32 %v1865, %v1875
        %s1880 = sld [smem:[#allocation5 + $0x51]]
        %v1881 = vld [vmem:[%s665 + $0x4] sm:$0xff]
        %v1882 = vld [vmem:[%s665 + $0xc] sm:$0xff]
        %v1883 = vld [vmem:[%s665 + $0x1c] sm:$0xff]
        %v1884 = vld [vmem:[%s665 + $0x24] sm:$0xff]
        %v1885 = vstv %s1880
        %v1886 = vmul.f32 %v1885, %v1881
        %v1887 = vmul.f32 %v1885, %v1882
        %v1888 = vmul.f32 %v1885, %v1883
        %v1889 = vmul.f32 %v1885, %v1884
        %v1890 = vadd.f32 %v1876, %v1886
        %v1891 = vadd.f32 %v1877, %v1887
        %v1892 = vadd.f32 %v1878, %v1888
        %v1893 = vadd.f32 %v1879, %v1889
        %s1894 = sld [smem:[#allocation5 + $0x58]]
        %v1895 = vld [vmem:[%s665 + $0x5] sm:$0xff]
        %v1896 = vld [vmem:[%s665 + $0xd] sm:$0xff]
        %v1897 = vld [vmem:[%s665 + $0x1d] sm:$0xff]
        %v1898 = vld [vmem:[%s665 + $0x25] sm:$0xff]
        %v1899 = vstv %s1894
        %v1900 = vmul.f32 %v1899, %v1895
        %v1901 = vmul.f32 %v1899, %v1896
        %v1902 = vmul.f32 %v1899, %v1897
        %v1903 = vmul.f32 %v1899, %v1898
        %v1904 = vadd.f32 %v1890, %v1900
        %v1905 = vadd.f32 %v1891, %v1901
        %v1906 = vadd.f32 %v1892, %v1902
        %v1907 = vadd.f32 %v1893, %v1903
        %s1908 = sld [smem:[#allocation5 + $0x5f]]
        %v1909 = vld [vmem:[%s665 + $0x6] sm:$0xff]
        %v1910 = vld [vmem:[%s665 + $0xe] sm:$0xff]
        %v1911 = vld [vmem:[%s665 + $0x1e] sm:$0xff]
        %v1912 = vld [vmem:[%s665 + $0x26] sm:$0xff]
        %v1913 = vstv %s1908
        %v1914 = vmul.f32 %v1913, %v1909
        %v1915 = vmul.f32 %v1913, %v1910
        %v1916 = vmul.f32 %v1913, %v1911
        %v1917 = vmul.f32 %v1913, %v1912
        %v1918 = vadd.f32 %v1904, %v1914
        %v1919 = vadd.f32 %v1905, %v1915
        %v1920 = vadd.f32 %v1906, %v1916
        %v1921 = vadd.f32 %v1907, %v1917
        %s1922 = sld [smem:[#allocation5 + $0x36]]
        %v1923 = vld [vmem:[%s702] sm:$0xff]
        %v1924 = vld [vmem:[%s702 + $0x8] sm:$0xff]
        %v1925 = vld [vmem:[%s702 + $0x18] sm:$0xff]
        %v1926 = vld [vmem:[%s702 + $0x20] sm:$0xff]
        %v1927 = vstv %s1922
        %v1928 = vmul.f32 %v1927, %v1923
        %v1929 = vmul.f32 %v1927, %v1924
        %v1930 = vmul.f32 %v1927, %v1925
        %v1931 = vmul.f32 %v1927, %v1926
        %v1932 = vadd.f32 %v1918, %v1928
        %v1933 = vadd.f32 %v1919, %v1929
        %v1934 = vadd.f32 %v1920, %v1930
        %v1935 = vadd.f32 %v1921, %v1931
        %s1936 = sld [smem:[#allocation5 + $0x3d]]
        %v1937 = vld [vmem:[%s702 + $0x1] sm:$0xff]
        %v1938 = vld [vmem:[%s702 + $0x9] sm:$0xff]
        %v1939 = vld [vmem:[%s702 + $0x19] sm:$0xff]
        %v1940 = vld [vmem:[%s702 + $0x21] sm:$0xff]
        %v1941 = vstv %s1936
        %v1942 = vmul.f32 %v1941, %v1937
        %v1943 = vmul.f32 %v1941, %v1938
        %v1944 = vmul.f32 %v1941, %v1939
        %v1945 = vmul.f32 %v1941, %v1940
        %v1946 = vadd.f32 %v1932, %v1942
        %v1947 = vadd.f32 %v1933, %v1943
        %v1948 = vadd.f32 %v1934, %v1944
        %v1949 = vadd.f32 %v1935, %v1945
        %s1950 = sld [smem:[#allocation5 + $0x44]]
        %v1951 = vld [vmem:[%s702 + $0x2] sm:$0xff]
        %v1952 = vld [vmem:[%s702 + $0xa] sm:$0xff]
        %v1953 = vld [vmem:[%s702 + $0x1a] sm:$0xff]
        %v1954 = vld [vmem:[%s702 + $0x22] sm:$0xff]
        %v1955 = vstv %s1950
        %v1956 = vmul.f32 %v1955, %v1951
        %v1957 = vmul.f32 %v1955, %v1952
        %v1958 = vmul.f32 %v1955, %v1953
        %v1959 = vmul.f32 %v1955, %v1954
        %v1960 = vadd.f32 %v1946, %v1956
        %v1961 = vadd.f32 %v1947, %v1957
        %v1962 = vadd.f32 %v1948, %v1958
        %v1963 = vadd.f32 %v1949, %v1959
        %s1964 = sld [smem:[#allocation5 + $0x4b]]
        %v1965 = vld [vmem:[%s702 + $0x3] sm:$0xff]
        %v1966 = vld [vmem:[%s702 + $0xb] sm:$0xff]
        %v1967 = vld [vmem:[%s702 + $0x1b] sm:$0xff]
        %v1968 = vld [vmem:[%s702 + $0x23] sm:$0xff]
        %v1969 = vstv %s1964
        %v1970 = vmul.f32 %v1969, %v1965
        %v1971 = vmul.f32 %v1969, %v1966
        %v1972 = vmul.f32 %v1969, %v1967
        %v1973 = vmul.f32 %v1969, %v1968
        %v1974 = vadd.f32 %v1960, %v1970
        %v1975 = vadd.f32 %v1961, %v1971
        %v1976 = vadd.f32 %v1962, %v1972
        %v1977 = vadd.f32 %v1963, %v1973
        %s1978 = sld [smem:[#allocation5 + $0x52]]
        %v1979 = vld [vmem:[%s702 + $0x4] sm:$0xff]
        %v1980 = vld [vmem:[%s702 + $0xc] sm:$0xff]
        %v1981 = vld [vmem:[%s702 + $0x1c] sm:$0xff]
        %v1982 = vld [vmem:[%s702 + $0x24] sm:$0xff]
        %v1983 = vstv %s1978
        %v1984 = vmul.f32 %v1983, %v1979
        %v1985 = vmul.f32 %v1983, %v1980
        %v1986 = vmul.f32 %v1983, %v1981
        %v1987 = vmul.f32 %v1983, %v1982
        %v1988 = vadd.f32 %v1974, %v1984
        %v1989 = vadd.f32 %v1975, %v1985
        %v1990 = vadd.f32 %v1976, %v1986
        %v1991 = vadd.f32 %v1977, %v1987
        %s1992 = sld [smem:[#allocation5 + $0x59]]
        %v1993 = vld [vmem:[%s702 + $0x5] sm:$0xff]
        %v1994 = vld [vmem:[%s702 + $0xd] sm:$0xff]
        %v1995 = vld [vmem:[%s702 + $0x1d] sm:$0xff]
        %v1996 = vld [vmem:[%s702 + $0x25] sm:$0xff]
        %v1997 = vstv %s1992
        %v1998 = vmul.f32 %v1997, %v1993
        %v1999 = vmul.f32 %v1997, %v1994
        %v2000 = vmul.f32 %v1997, %v1995
        %v2001 = vmul.f32 %v1997, %v1996
        %v2002 = vadd.f32 %v1988, %v1998
        %v2003 = vadd.f32 %v1989, %v1999
        %v2004 = vadd.f32 %v1990, %v2000
        %v2005 = vadd.f32 %v1991, %v2001
        %s2006 = sld [smem:[#allocation5 + $0x60]]
        %v2007 = vld [vmem:[%s702 + $0x6] sm:$0xff]
        %v2008 = vld [vmem:[%s702 + $0xe] sm:$0xff]
        %v2009 = vld [vmem:[%s702 + $0x1e] sm:$0xff]
        %v2010 = vld [vmem:[%s702 + $0x26] sm:$0xff]
        %v2011 = vstv %s2006
        %v2012 = vmul.f32 %v2011, %v2007
        %v2013 = vmul.f32 %v2011, %v2008
        %v2014 = vmul.f32 %v2011, %v2009
        %v2015 = vmul.f32 %v2011, %v2010
        %v2016 = vadd.f32 %v2002, %v2012
        %v2017 = vadd.f32 %v2003, %v2013
        %v2018 = vadd.f32 %v2004, %v2014
        %v2019 = vadd.f32 %v2005, %v2015
        %s2020 = sld [smem:[#allocation5 + $0x37]]
        %v2021 = vld [vmem:[%s739] sm:$0xff]
        %v2022 = vld [vmem:[%s739 + $0x8] sm:$0xff]
        %v2023 = vld [vmem:[%s739 + $0x18] sm:$0xff]
        %v2024 = vld [vmem:[%s739 + $0x20] sm:$0xff]
        %v2025 = vstv %s2020
        %v2026 = vmul.f32 %v2025, %v2021
        %v2027 = vmul.f32 %v2025, %v2022
        %v2028 = vmul.f32 %v2025, %v2023
        %v2029 = vmul.f32 %v2025, %v2024
        %v2030 = vadd.f32 %v2016, %v2026
        %v2031 = vadd.f32 %v2017, %v2027
        %v2032 = vadd.f32 %v2018, %v2028
        %v2033 = vadd.f32 %v2019, %v2029
        %s2034 = sld [smem:[#allocation5 + $0x3e]]
        %v2035 = vld [vmem:[%s739 + $0x1] sm:$0xff]
        %v2036 = vld [vmem:[%s739 + $0x9] sm:$0xff]
        %v2037 = vld [vmem:[%s739 + $0x19] sm:$0xff]
        %v2038 = vld [vmem:[%s739 + $0x21] sm:$0xff]
        %v2039 = vstv %s2034
        %v2040 = vmul.f32 %v2039, %v2035
        %v2041 = vmul.f32 %v2039, %v2036
        %v2042 = vmul.f32 %v2039, %v2037
        %v2043 = vmul.f32 %v2039, %v2038
        %v2044 = vadd.f32 %v2030, %v2040
        %v2045 = vadd.f32 %v2031, %v2041
        %v2046 = vadd.f32 %v2032, %v2042
        %v2047 = vadd.f32 %v2033, %v2043
        %s2048 = sld [smem:[#allocation5 + $0x45]]
        %v2049 = vld [vmem:[%s739 + $0x2] sm:$0xff]
        %v2050 = vld [vmem:[%s739 + $0xa] sm:$0xff]
        %v2051 = vld [vmem:[%s739 + $0x1a] sm:$0xff]
        %v2052 = vld [vmem:[%s739 + $0x22] sm:$0xff]
        %v2053 = vstv %s2048
        %v2054 = vmul.f32 %v2053, %v2049
        %v2055 = vmul.f32 %v2053, %v2050
        %v2056 = vmul.f32 %v2053, %v2051
        %v2057 = vmul.f32 %v2053, %v2052
        %v2058 = vadd.f32 %v2044, %v2054
        %v2059 = vadd.f32 %v2045, %v2055
        %v2060 = vadd.f32 %v2046, %v2056
        %v2061 = vadd.f32 %v2047, %v2057
        %s2062 = sld [smem:[#allocation5 + $0x4c]]
        %v2063 = vld [vmem:[%s739 + $0x3] sm:$0xff]
        %v2064 = vld [vmem:[%s739 + $0xb] sm:$0xff]
        %v2065 = vld [vmem:[%s739 + $0x1b] sm:$0xff]
        %v2066 = vld [vmem:[%s739 + $0x23] sm:$0xff]
        %v2067 = vstv %s2062
        %v2068 = vmul.f32 %v2067, %v2063
        %v2069 = vmul.f32 %v2067, %v2064
        %v2070 = vmul.f32 %v2067, %v2065
        %v2071 = vmul.f32 %v2067, %v2066
        %v2072 = vadd.f32 %v2058, %v2068
        %v2073 = vadd.f32 %v2059, %v2069
        %v2074 = vadd.f32 %v2060, %v2070
        %v2075 = vadd.f32 %v2061, %v2071
        %s2076 = sld [smem:[#allocation5 + $0x53]]
        %v2077 = vld [vmem:[%s739 + $0x4] sm:$0xff]
        %v2078 = vld [vmem:[%s739 + $0xc] sm:$0xff]
        %v2079 = vld [vmem:[%s739 + $0x1c] sm:$0xff]
        %v2080 = vld [vmem:[%s739 + $0x24] sm:$0xff]
        %v2081 = vstv %s2076
        %v2082 = vmul.f32 %v2081, %v2077
        %v2083 = vmul.f32 %v2081, %v2078
        %v2084 = vmul.f32 %v2081, %v2079
        %v2085 = vmul.f32 %v2081, %v2080
        %v2086 = vadd.f32 %v2072, %v2082
        %v2087 = vadd.f32 %v2073, %v2083
        %v2088 = vadd.f32 %v2074, %v2084
        %v2089 = vadd.f32 %v2075, %v2085
        %s2090 = sld [smem:[#allocation5 + $0x5a]]
        %v2091 = vld [vmem:[%s739 + $0x5] sm:$0xff]
        %v2092 = vld [vmem:[%s739 + $0xd] sm:$0xff]
        %v2093 = vld [vmem:[%s739 + $0x1d] sm:$0xff]
        %v2094 = vld [vmem:[%s739 + $0x25] sm:$0xff]
        %v2095 = vstv %s2090
        %v2096 = vmul.f32 %v2095, %v2091
        %v2097 = vmul.f32 %v2095, %v2092
        %v2098 = vmul.f32 %v2095, %v2093
        %v2099 = vmul.f32 %v2095, %v2094
        %v2100 = vadd.f32 %v2086, %v2096
        %v2101 = vadd.f32 %v2087, %v2097
        %v2102 = vadd.f32 %v2088, %v2098
        %v2103 = vadd.f32 %v2089, %v2099
        %s2104 = sld [smem:[#allocation5 + $0x61]]
        %v2105 = vld [vmem:[%s739 + $0x6] sm:$0xff]
        %v2106 = vld [vmem:[%s739 + $0xe] sm:$0xff]
        %v2107 = vld [vmem:[%s739 + $0x1e] sm:$0xff]
        %v2108 = vld [vmem:[%s739 + $0x26] sm:$0xff]
        %v2109 = vstv %s2104
        %v2110 = vmul.f32 %v2109, %v2105
        %v2111 = vmul.f32 %v2109, %v2106
        %v2112 = vmul.f32 %v2109, %v2107
        %v2113 = vmul.f32 %v2109, %v2108
        %v2114 = vadd.f32 %v2100, %v2110
        %v2115 = vadd.f32 %v2101, %v2111
        %v2116 = vadd.f32 %v2102, %v2112
        %v2117 = vadd.f32 %v2103, %v2113
        %v2118 = vxor.u32 %v2114, 2147483648
        %v2119 = vxor.u32 %v2115, 2147483648
        %v2120 = vxor.u32 %v2116, 2147483648
        %v2121 = vxor.u32 %v2117, 2147483648
        %v2122 = vmul.f32 %v2118, 1.442695
        %v2123 = vpow.pop %v2122
        %v2124 = vmul.f32 %v2119, 1.442695
        %v2125 = vpow.pop %v2124
        %v2126 = vmul.f32 %v2120, 1.442695
        %v2127 = vpow.pop %v2126
        %v2128 = vmul.f32 %v2121, 1.442695
        %v2129 = vpow.pop %v2128
        %v2130 = vadd.f32 %v2123, 1.0
        %v2131 = vadd.f32 %v2125, 1.0
        %v2132 = vadd.f32 %v2127, 1.0
        %v2133 = vadd.f32 %v2129, 1.0
        %v2134 = vrcp.pop %v2130
        %v2135 = vmul.f32 %v2130, %v2134
        %v2136 = vsub.f32 1.0, %v2135
        %v2137 = vmul.f32 %v2134, %v2136
        %v2138 = vadd.f32 %v2134, %v2137
        %vm2139 = vweird.f32 %v2130
        %vm2140 = vweird.f32 %v2134
        %vm2141 = vmor %vm2139, %vm2140
        %v2142 = vsel %vm2141, %v2134, %v2138
        %v2143 = vand.u32 2147483647, %v2130
        %vm2144 = vcmp.eq.f32.partialorder %v2143, 8.507059e+37
        %v2145 = vand.u32 %v2130, 2147483648
        %v2146 = vor.u32 1.1754944e-38, %v2145
        %v2147 = vsel %vm2144, %v2146, %v2142
        %v2148 = vmul.f32 1.0, %v2147
        %v2149 = vrcp.pop %v2131
        %v2150 = vmul.f32 %v2131, %v2149
        %v2151 = vsub.f32 1.0, %v2150
        %v2152 = vmul.f32 %v2149, %v2151
        %v2153 = vadd.f32 %v2149, %v2152
        %vm2154 = vweird.f32 %v2131
        %vm2155 = vweird.f32 %v2149
        %vm2156 = vmor %vm2154, %vm2155
        %v2157 = vsel %vm2156, %v2149, %v2153
        %v2158 = vand.u32 2147483647, %v2131
        %vm2159 = vcmp.eq.f32.partialorder %v2158, 8.507059e+37
        %v2160 = vand.u32 %v2131, 2147483648
        %v2161 = vor.u32 1.1754944e-38, %v2160
        %v2162 = vsel %vm2159, %v2161, %v2157
        %v2163 = vmul.f32 1.0, %v2162
        %v2164 = vrcp.pop %v2132
        %v2165 = vmul.f32 %v2132, %v2164
        %v2166 = vsub.f32 1.0, %v2165
        %v2167 = vmul.f32 %v2164, %v2166
        %v2168 = vadd.f32 %v2164, %v2167
        %vm2169 = vweird.f32 %v2132
        %vm2170 = vweird.f32 %v2164
        %vm2171 = vmor %vm2169, %vm2170
        %v2172 = vsel %vm2171, %v2164, %v2168
        %v2173 = vand.u32 2147483647, %v2132
        %vm2174 = vcmp.eq.f32.partialorder %v2173, 8.507059e+37
        %v2175 = vand.u32 %v2132, 2147483648
        %v2176 = vor.u32 1.1754944e-38, %v2175
        %v2177 = vsel %vm2174, %v2176, %v2172
        %v2178 = vmul.f32 1.0, %v2177
        %v2179 = vrcp.pop %v2133
        %v2180 = vmul.f32 %v2133, %v2179
        %v2181 = vsub.f32 1.0, %v2180
        %v2182 = vmul.f32 %v2179, %v2181
        %v2183 = vadd.f32 %v2179, %v2182
        %vm2184 = vweird.f32 %v2133
        %vm2185 = vweird.f32 %v2179
        %vm2186 = vmor %vm2184, %vm2185
        %v2187 = vsel %vm2186, %v2179, %v2183
        %v2188 = vand.u32 2147483647, %v2133
        %vm2189 = vcmp.eq.f32.partialorder %v2188, 8.507059e+37
        %v2190 = vand.u32 %v2133, 2147483648
        %v2191 = vor.u32 1.1754944e-38, %v2190
        %v2192 = vsel %vm2189, %v2191, %v2187
        %v2193 = vmul.f32 1.0, %v2192
        %2194 = vst.msk [vmem:[%s146] sm:$0xff] %vm281, %v2148
        %2195 = vst.msk [vmem:[%s146 + $0x8] sm:$0xff] %vm281, %v2163
        %2196 = vst.msk [vmem:[%s146 + $0x10] sm:$0xff] %vm281, %v2178
        %2197 = vst.msk [vmem:[%s146 + $0x18] sm:$0xff] %vm281, %v2193
        %s2198 = sand.u32 %s61, 1
        %s2199 = scalar_lea.sflag [#allocation8], %s2198
        %s2200 = sand.u32 %s61, 1
        %s2201 = smul.addr %s2200, 32
        %s2202 = scalar_lea.vmem [#allocation9], %s2201
        // Predicated region
        $region29: #{tpu_custom_call.1} parent=23 // pred_check
          %p2203 = pneg %p71
        $region30: #{tpu_custom_call.1} parent=23 // pred_check_branch
          %2205 = sbr.rel (%p2203) target = $region32
        $region31: #{tpu_custom_call.1} parent=23 // pred_region
          %s2206 = smul.u32 2, %s27
          %2208 = vsyncadd %s2199, 0
          %s2209 = smul.addr %s2206, 2
          %s2210 = smul.addr %s2209, 8
          %s2211 = scalar_lea.hbm %s2, %s2210
          %s2212 = sshll.u32 %s2202, 4
          %s2213 = int_to_ptr.vmem [resolvable:$true] %s2212
          %s2214 = sshll.u32 %s2211, 4
          %s2215 = int_to_ptr.hbm [resolvable:$true] %s2214
          %2220 = dma.vmem_to_hbm [thread:$0]  %s2213, 512, %s2215, %s2199, 128, 128, 8
        $region32: #{tpu_custom_call.1} parent=23 // pred_fallthru
          _
      $region24: #{tpu_custom_call.1} parent=5 // pred_fallthru
        _
      %p2221 = scmp.le.s32.totalorder 2, %s22
      // Predicated region
      $region33: #{tpu_custom_call.1} parent=5 // pred_check
        %p2222 = pneg %p2221
      $region34: #{tpu_custom_call.1} parent=5 // pred_check_branch
        %2224 = sbr.rel (%p2222) target = $region36
      $region35: #{tpu_custom_call.1} parent=5 // pred_region
        %s2225 = ssub.s32 %s22, 2
        // Predicated region
        $region37: #{tpu_custom_call.1} parent=35 // pred_check
          %p2226 = pneg %p77
        $region38: #{tpu_custom_call.1} parent=35 // pred_check_branch
          %2228 = sbr.rel (%p2226) target = $region40
        $region39: #{tpu_custom_call.1} parent=35 // pred_region
          %s2229 = sand.u32 %s62, 1
          %s2230 = scalar_lea.sflag [#allocation8], %s2229
          %s2231 = sand.u32 %s62, 1
          %s2232 = smul.addr %s2231, 32
          %s2233 = scalar_lea.vmem [#allocation9], %s2232
          %2235 = dma.done %s2230, 512
        $region40: #{tpu_custom_call.1} parent=35 // pred_fallthru
          _
      $region36: #{tpu_custom_call.1} parent=5 // pred_fallthru
        _
    $region6: #{tpu_custom_call.1} parent=1 // loop_footer
      %s26 = sadd.s32 1, %s22
    $region7: #{tpu_custom_call.1} parent=1 // loop_footer_branch
      %21 = sbr.rel target = $region3
    $region8: #{tpu_custom_call.1} parent=1 // loop_exit
      _
    %2236 = vsyncpa [#allocation7], 1
    %s2237 = scalar_lea.sflag [#allocation7], 1
    %2238 = vsyncpa %s2237, 1
    %2239 = vsyncpa [#allocation8], 1
    %s2240 = scalar_lea.sflag [#allocation8], 1
    %2241 = vsyncpa %s2240, 1

</llo_original>
